<compile_context>
chip_gen: v7x
topology: tpu7x:2x2x1
jax: 0.10.0
libtpu: 0.0.40
codegen_flags: <defaults>
</compile_context>

<pallas_src>
import jax
import jax.numpy as jnp
from jax import lax
from jax.experimental import pallas as pl
from jax.experimental.pallas import tpu as pltpu


# --------------------- Fused kernel: zt -> GRU -> FC -> sigmoid --------------
def _tra_kernel(x_ref, wih_ref, whh_ref, bih_ref, bhn_ref,
                wfc_ref, bfc_ref, out_ref, h_hist):
    # x_ref  : (1, C, T, F)  one batch of the input
    # wih_ref: (C, 3H)       [W_ir | W_iz | W_in]  (pre-transposed, gate-fused)
    # whh_ref: (H, 3H)       [W_hr | W_hz | W_hn]
    # bih_ref: (1, 3H)       [b_r | b_z | b_in]    (input-side biases, folded)
    # bhn_ref: (1, H)        b_hn (kept separate: reset gate scales it)
    # wfc_ref: (H, C), bfc_ref: (1, C)
    # out_ref: (1, C, T)     sigmoid(fc(h_t)), already in output layout
    # h_hist : (T, H)        VMEM scratch, time-major hidden-state history
    C = x_ref.shape[1]
    T = x_ref.shape[2]
    H = whh_ref.shape[0]                          # hidden = 2*C

    # ---- zt = mean(x^2, -1) for this batch, emitted in GRU layout (T, C). ---
    # The tiny (C,T)->(T,C) transpose rides the otherwise-idle XLU; fusing it
    # here removes the HBM round trip for zt entirely.
    # (At production F, consider a (C*T,F)x(F,1) ones-matmul instead of the
    #  lane-axis reduce; negligible at F=16.)
    x = x_ref[0]                                  # (C, T, F)
    zt = jnp.mean(x * x, axis=-1).T               # (T, C)

    # ---- Input-side projections hoisted out of the recurrence: one MXU call
    #      with the input-side biases folded in.
    xp = (jnp.dot(zt, wih_ref[...], preferred_element_type=jnp.float32)
          + bih_ref[...])                         # (T, 3H)
    # Hoist the per-gate lane slices out of the serial loop (JAX does not CSE
    # these; inside the loop they would cost XLU rotates on the critical path).
    xp_r = xp[:, 0:H]                             # (T, H)
    xp_z = xp[:, H:2 * H]
    xp_n = xp[:, 2 * H:3 * H]

    # Hoisted weight / bias loads.
    whh = whh_ref[...]                            # (H, 3H)
    bhn = bhn_ref[...]                            # (1, H)

    # ---- Fully-unrolled serial recurrence: ONE fused hidden matmul per step.
    # (For production T >~ 32, switch to lax.fori_loop(..., unroll=k) over an
    #  xp scratch indexed with pl.ds to bound vreg live ranges.)
    h = jnp.zeros((1, H), jnp.float32)            # nn.GRU default h0 = 0
    for t in range(T):
        hp = jnp.dot(h, whh, preferred_element_type=jnp.float32)   # (1, 3H)
        r = jax.nn.sigmoid(xp_r[t:t + 1, :] + hp[:, 0:H])
        z = jax.nn.sigmoid(xp_z[t:t + 1, :] + hp[:, H:2 * H])
        n = jnp.tanh(xp_n[t:t + 1, :] + r * (hp[:, 2 * H:] + bhn))
        h = (1.0 - z) * n + z * h                 # PyTorch GRU update rule
        h_hist[pl.ds(t, 1), :] = h                # time-major row store

    # ---- FC + sigmoid: one batched matmul, then a single store in the final
    #      (C, T) output layout (kills the external transpose).
    at = jax.nn.sigmoid(
        jnp.dot(h_hist[...], wfc_ref[...], preferred_element_type=jnp.float32)
        + bfc_ref[...])                           # (T, C)
    out_ref[0] = at.T                             # (C, T)


# ----------------------------------- Wrapper ---------------------------------
def tra_forward(x, p):
    """x: (B, C, T, F) float32 -> At: (B, C, T, 1) float32."""
    B, C, T, F_ = x.shape
    H = 2 * C

    # Gate-fused GRU parameters, built once outside the kernel.
    wih = jnp.concatenate([p["wir"], p["wiz"], p["win"]], axis=1)   # (C, 3H)
    whh = jnp.concatenate([p["whr"], p["whz"], p["whn"]], axis=1)   # (H, 3H)
    bih = jnp.concatenate([p["br"], p["bz"], p["bin"]], axis=1)     # (1, 3H)

    # Single fused pallas_call, grid over B marked "parallel":
    #   * v7x: batches shard across the 2 TensorCores
    #   * all chips: x[b+1] is prefetched under batch b's recurrence
    # For production C/T/F, additionally tile T in the x BlockSpec (keep F
    # un-tiled so the mean stays intact) and budget double-buffered blocks
    # against v7x's 64 MiB VMEM.
    at_bct = pl.pallas_call(
        _tra_kernel,
        out_shape=jax.ShapeDtypeStruct((B, C, T), jnp.float32),
        grid=(B,),
        in_specs=[
            pl.BlockSpec((1, C, T, F_), lambda b: (b, 0, 0, 0)),
            pl.BlockSpec((C, 3 * H), lambda b: (0, 0)),
            pl.BlockSpec((H, 3 * H), lambda b: (0, 0)),
            pl.BlockSpec((1, 3 * H), lambda b: (0, 0)),
            pl.BlockSpec((1, H), lambda b: (0, 0)),
            pl.BlockSpec((H, C), lambda b: (0, 0)),
            pl.BlockSpec((1, C), lambda b: (0, 0)),
        ],
        out_specs=pl.BlockSpec((1, C, T), lambda b: (b, 0, 0)),
        scratch_shapes=[pltpu.VMEM((T, H), jnp.float32)],
        compiler_params=pltpu.CompilerParams(dimension_semantics=("parallel",)),
    )(x, wih, whh, bih, p["bhn"], p["wfc"], p["bfc"])

    # Only the unsqueeze remains in the wrapper (free metadata reshape).
    return at_bct[..., None]                      # (B, C, T, 1)


# ----------------------- Deterministic parameter init ------------------------
def init_params(key, C):
    # GRU(input=C, hidden=2C, layers=1): per-gate weights stored pre-transposed
    # for x @ W. Reset/update biases are single folded terms; b_in / b_hn kept
    # separate (reset gate multiplies only the hidden contribution + b_hn).
    H = 2 * C
    ks = jax.random.split(key, 12)
    bound = 1.0 / jnp.sqrt(H)

    def u(k, shape):
        return jax.random.uniform(k, shape, jnp.float32, -bound, bound)

    return dict(
        wir=u(ks[0], (C, H)), wiz=u(ks[1], (C, H)), win=u(ks[2], (C, H)),
        whr=u(ks[3], (H, H)), whz=u(ks[4], (H, H)), whn=u(ks[5], (H, H)),
        br=u(ks[6], (1, H)), bz=u(ks[7], (1, H)),
        bin=u(ks[8], (1, H)), bhn=u(ks[9], (1, H)),
        wfc=u(ks[10], (H, C)), bfc=u(ks[11], (1, C)),
    )


# ------------------------- Pure-JAX reference (check) ------------------------
def tra_reference(x, p):
    zt = jnp.mean(x ** 2, axis=-1)            # (B, C, T)
    seq = jnp.transpose(zt, (0, 2, 1))        # (B, T, C)
    B, T, C = seq.shape
    H = 2 * C

    def step(h, x_t):
        r = jax.nn.sigmoid(x_t @ p["wir"] + h @ p["whr"] + p["br"])
        z = jax.nn.sigmoid(x_t @ p["wiz"] + h @ p["whz"] + p["bz"])
        n = jnp.tanh(x_t @ p["win"] + p["bin"] + r * (h @ p["whn"] + p["bhn"]))
        h_new = (1.0 - z) * n + z * h
        at = jax.nn.sigmoid(h_new @ p["wfc"] + p["bfc"])
        return h_new, at

    h0 = jnp.zeros((B, H), jnp.float32)
    _, ats = lax.scan(step, h0, jnp.transpose(seq, (1, 0, 2)))  # (T, B, C)
    return jnp.transpose(ats, (1, 2, 0))[..., None]             # (B, C, T, 1)


if __name__ == "__main__":
    key = jax.random.PRNGKey(0)
    kx, kp = jax.random.split(key)

    B, C, T, F_ = 2, 4, 16, 16
    x = jax.random.normal(kx, (B, C, T, F_), jnp.float32)
    params = init_params(kp, C)

    out = tra_forward(x, params)
    out = jax.block_until_ready(out)

    assert out.shape == (B, C, T, 1), out.shape
    ref = tra_reference(x, params)
    assert jnp.allclose(out, ref, atol=1e-5, rtol=1e-4), \
        f"max abs err = {jnp.max(jnp.abs(out - ref))}"

    print("KERNEL_OK")
</pallas_src>

<mosaic_0001>
module attributes {stable_mosaic.version = 11 : i64} {
  func.func @_tra_kernel(%arg0: i32, %arg1: memref<1x4x16x16xf32, #tpu.memory_space<vmem>>, %arg2: memref<4x24xf32, #tpu.memory_space<vmem>>, %arg3: memref<8x24xf32, #tpu.memory_space<vmem>>, %arg4: memref<1x24xf32, #tpu.memory_space<vmem>>, %arg5: memref<1x8xf32, #tpu.memory_space<vmem>>, %arg6: memref<8x4xf32, #tpu.memory_space<vmem>>, %arg7: memref<1x4xf32, #tpu.memory_space<vmem>>, %arg8: memref<1x4x16xf32, #tpu.memory_space<vmem>>, %arg9: memref<16x8xf32, #tpu.memory_space<vmem>>) attributes {dimension_semantics = [#tpu.dimension_semantics<parallel>], iteration_bounds = array<i64: 2>, scalar_prefetch = 0 : i64, scratch_operands = 1 : i64, tpu.core_type = #tpu.core_type<tc>, window_params = [{transform_indices = @transform_0, window_bounds = array<i64: 1, 4, 16, 16>}, {pipeline_mode = #tpu.pipeline_mode<synchronous>, transform_indices = @transform_1, window_bounds = array<i64: 4, 24>}, {pipeline_mode = #tpu.pipeline_mode<synchronous>, transform_indices = @transform_2, window_bounds = array<i64: 8, 24>}, {pipeline_mode = #tpu.pipeline_mode<synchronous>, transform_indices = @transform_3, window_bounds = array<i64: 1, 24>}, {pipeline_mode = #tpu.pipeline_mode<synchronous>, transform_indices = @transform_4, window_bounds = array<i64: 1, 8>}, {pipeline_mode = #tpu.pipeline_mode<synchronous>, transform_indices = @transform_5, window_bounds = array<i64: 8, 4>}, {pipeline_mode = #tpu.pipeline_mode<synchronous>, transform_indices = @transform_6, window_bounds = array<i64: 1, 4>}, {transform_indices = @transform_7, window_bounds = array<i64: 1, 4, 16>}]} {
    %c0 = arith.constant 0 : index
    %c0_0 = arith.constant 0 : index
    %c0_1 = arith.constant 0 : index
    %c0_2 = arith.constant 0 : index
    %0 = vector.load %arg1[%c0, %c0_0, %c0_1, %c0_2] : memref<1x4x16x16xf32, #tpu.memory_space<vmem>>, vector<1x4x16x16xf32>
    %1 = vector.shape_cast %0 : vector<1x4x16x16xf32> to vector<4x16x16xf32>
    %2 = arith.mulf %1, %1 : vector<4x16x16xf32>
    %cst = arith.constant dense<0.000000e+00> : vector<4x16xf32>
    %3 = vector.multi_reduction <add>, %2, %cst [2] : vector<4x16x16xf32> to vector<4x16xf32>
    %cst_3 = arith.constant 1.600000e+01 : f32
    %4 = vector.broadcast %cst_3 : f32 to vector<4x16xf32>
    %5 = arith.divf %3, %4 : vector<4x16xf32>
    %6 = tpu.transpose %5, [1, 0] : vector<4x16xf32> -> vector<16x4xf32>
    %c0_4 = arith.constant 0 : index
    %c0_5 = arith.constant 0 : index
    %7 = vector.load %arg2[%c0_4, %c0_5] : memref<4x24xf32, #tpu.memory_space<vmem>>, vector<4x24xf32>
    %cst_6 = arith.constant dense<0.000000e+00> : vector<16x24xf32>
    %8 = tpu.matmul %6, %7, %cst_6 {dimension_numbers = #tpu.dot_dimension_numbers<[1], [0], [0], [1], [0, 0, 1, 1], [], []>} : vector<16x4xf32>, vector<4x24xf32>, vector<16x24xf32> -> vector<16x24xf32>
    %c0_7 = arith.constant 0 : index
    %c0_8 = arith.constant 0 : index
    %9 = vector.load %arg4[%c0_7, %c0_8] : memref<1x24xf32, #tpu.memory_space<vmem>>, vector<1x24xf32>
    %10 = vector.broadcast %9 : vector<1x24xf32> to vector<16x24xf32>
    %11 = arith.addf %8, %10 : vector<16x24xf32>
    %12 = vector.extract_strided_slice %11 {offsets = [0, 0], sizes = [16, 8], strides = [1, 1]} : vector<16x24xf32> to vector<16x8xf32>
    %13 = vector.extract_strided_slice %11 {offsets = [0, 8], sizes = [16, 8], strides = [1, 1]} : vector<16x24xf32> to vector<16x8xf32>
    %14 = vector.extract_strided_slice %11 {offsets = [0, 16], sizes = [16, 8], strides = [1, 1]} : vector<16x24xf32> to vector<16x8xf32>
    %c0_9 = arith.constant 0 : index
    %c0_10 = arith.constant 0 : index
    %15 = vector.load %arg3[%c0_9, %c0_10] : memref<8x24xf32, #tpu.memory_space<vmem>>, vector<8x24xf32>
    %c0_11 = arith.constant 0 : index
    %c0_12 = arith.constant 0 : index
    %16 = vector.load %arg5[%c0_11, %c0_12] : memref<1x8xf32, #tpu.memory_space<vmem>>, vector<1x8xf32>
    %cst_13 = arith.constant 0.000000e+00 : f32
    %17 = vector.broadcast %cst_13 : f32 to vector<1x8xf32>
    %cst_14 = arith.constant dense<0.000000e+00> : vector<1x24xf32>
    %18 = tpu.matmul %17, %15, %cst_14 {dimension_numbers = #tpu.dot_dimension_numbers<[1], [0], [0], [1], [0, 0, 1, 1], [], []>} : vector<1x8xf32>, vector<8x24xf32>, vector<1x24xf32> -> vector<1x24xf32>
    %19 = vector.extract_strided_slice %12 {offsets = [0, 0], sizes = [1, 8], strides = [1, 1]} : vector<16x8xf32> to vector<1x8xf32>
    %20 = vector.extract_strided_slice %18 {offsets = [0, 0], sizes = [1, 8], strides = [1, 1]} : vector<1x24xf32> to vector<1x8xf32>
    %21 = arith.addf %19, %20 : vector<1x8xf32>
    %22 = arith.negf %21 : vector<1x8xf32>
    %23 = math.exp %22 : vector<1x8xf32>
    %cst_15 = arith.constant 1.000000e+00 : f32
    %24 = vector.broadcast %cst_15 : f32 to vector<1x8xf32>
    %25 = arith.addf %24, %23 : vector<1x8xf32>
    %26 = arith.divf %24, %25 : vector<1x8xf32>
    %27 = vector.extract_strided_slice %13 {offsets = [0, 0], sizes = [1, 8], strides = [1, 1]} : vector<16x8xf32> to vector<1x8xf32>
    %28 = vector.extract_strided_slice %18 {offsets = [0, 8], sizes = [1, 8], strides = [1, 1]} : vector<1x24xf32> to vector<1x8xf32>
    %29 = arith.addf %27, %28 : vector<1x8xf32>
    %30 = arith.negf %29 : vector<1x8xf32>
    %31 = math.exp %30 : vector<1x8xf32>
    %cst_16 = arith.constant 1.000000e+00 : f32
    %32 = vector.broadcast %cst_16 : f32 to vector<1x8xf32>
    %33 = arith.addf %32, %31 : vector<1x8xf32>
    %34 = arith.divf %32, %33 : vector<1x8xf32>
    %35 = vector.extract_strided_slice %14 {offsets = [0, 0], sizes = [1, 8], strides = [1, 1]} : vector<16x8xf32> to vector<1x8xf32>
    %36 = vector.extract_strided_slice %18 {offsets = [0, 16], sizes = [1, 8], strides = [1, 1]} : vector<1x24xf32> to vector<1x8xf32>
    %37 = arith.addf %36, %16 : vector<1x8xf32>
    %38 = arith.mulf %26, %37 : vector<1x8xf32>
    %39 = arith.addf %35, %38 : vector<1x8xf32>
    %40 = math.tanh %39 : vector<1x8xf32>
    %cst_17 = arith.constant 1.000000e+00 : f32
    %41 = vector.broadcast %cst_17 : f32 to vector<1x8xf32>
    %42 = arith.subf %41, %34 : vector<1x8xf32>
    %43 = arith.mulf %42, %40 : vector<1x8xf32>
    %44 = arith.mulf %34, %17 : vector<1x8xf32>
    %45 = arith.addf %43, %44 : vector<1x8xf32>
    %c0_18 = arith.constant 0 : index
    %c0_19 = arith.constant 0 : index
    %46 = vector.load %arg9[%c0_18, %c0_19] : memref<16x8xf32, #tpu.memory_space<vmem>>, vector<1x8xf32>
    tpu.vector_store %arg9[%c0_18, %c0_19], %45 {strides = array<i32>} : memref<16x8xf32, #tpu.memory_space<vmem>>, vector<1x8xf32>,
    %cst_20 = arith.constant dense<0.000000e+00> : vector<1x24xf32>
    %47 = tpu.matmul %45, %15, %cst_20 {dimension_numbers = #tpu.dot_dimension_numbers<[1], [0], [0], [1], [0, 0, 1, 1], [], []>} : vector<1x8xf32>, vector<8x24xf32>, vector<1x24xf32> -> vector<1x24xf32>
    %48 = vector.extract_strided_slice %12 {offsets = [1, 0], sizes = [1, 8], strides = [1, 1]} : vector<16x8xf32> to vector<1x8xf32>
    %49 = vector.extract_strided_slice %47 {offsets = [0, 0], sizes = [1, 8], strides = [1, 1]} : vector<1x24xf32> to vector<1x8xf32>
    %50 = arith.addf %48, %49 : vector<1x8xf32>
    %51 = arith.negf %50 : vector<1x8xf32>
    %52 = math.exp %51 : vector<1x8xf32>
    %cst_21 = arith.constant 1.000000e+00 : f32
    %53 = vector.broadcast %cst_21 : f32 to vector<1x8xf32>
    %54 = arith.addf %53, %52 : vector<1x8xf32>
    %55 = arith.divf %53, %54 : vector<1x8xf32>
    %56 = vector.extract_strided_slice %13 {offsets = [1, 0], sizes = [1, 8], strides = [1, 1]} : vector<16x8xf32> to vector<1x8xf32>
    %57 = vector.extract_strided_slice %47 {offsets = [0, 8], sizes = [1, 8], strides = [1, 1]} : vector<1x24xf32> to vector<1x8xf32>
    %58 = arith.addf %56, %57 : vector<1x8xf32>
    %59 = arith.negf %58 : vector<1x8xf32>
    %60 = math.exp %59 : vector<1x8xf32>
    %cst_22 = arith.constant 1.000000e+00 : f32
    %61 = vector.broadcast %cst_22 : f32 to vector<1x8xf32>
    %62 = arith.addf %61, %60 : vector<1x8xf32>
    %63 = arith.divf %61, %62 : vector<1x8xf32>
    %64 = vector.extract_strided_slice %14 {offsets = [1, 0], sizes = [1, 8], strides = [1, 1]} : vector<16x8xf32> to vector<1x8xf32>
    %65 = vector.extract_strided_slice %47 {offsets = [0, 16], sizes = [1, 8], strides = [1, 1]} : vector<1x24xf32> to vector<1x8xf32>
    %66 = arith.addf %65, %16 : vector<1x8xf32>
    %67 = arith.mulf %55, %66 : vector<1x8xf32>
    %68 = arith.addf %64, %67 : vector<1x8xf32>
    %69 = math.tanh %68 : vector<1x8xf32>
    %cst_23 = arith.constant 1.000000e+00 : f32
    %70 = vector.broadcast %cst_23 : f32 to vector<1x8xf32>
    %71 = arith.subf %70, %63 : vector<1x8xf32>
    %72 = arith.mulf %71, %69 : vector<1x8xf32>
    %73 = arith.mulf %63, %45 : vector<1x8xf32>
    %74 = arith.addf %72, %73 : vector<1x8xf32>
    %c1 = arith.constant 1 : index
    %c0_24 = arith.constant 0 : index
    %75 = vector.load %arg9[%c1, %c0_24] : memref<16x8xf32, #tpu.memory_space<vmem>>, vector<1x8xf32>
    tpu.vector_store %arg9[%c1, %c0_24], %74 {strides = array<i32>} : memref<16x8xf32, #tpu.memory_space<vmem>>, vector<1x8xf32>,
    %cst_25 = arith.constant dense<0.000000e+00> : vector<1x24xf32>
    %76 = tpu.matmul %74, %15, %cst_25 {dimension_numbers = #tpu.dot_dimension_numbers<[1], [0], [0], [1], [0, 0, 1, 1], [], []>} : vector<1x8xf32>, vector<8x24xf32>, vector<1x24xf32> -> vector<1x24xf32>
    %77 = vector.extract_strided_slice %12 {offsets = [2, 0], sizes = [1, 8], strides = [1, 1]} : vector<16x8xf32> to vector<1x8xf32>
    %78 = vector.extract_strided_slice %76 {offsets = [0, 0], sizes = [1, 8], strides = [1, 1]} : vector<1x24xf32> to vector<1x8xf32>
    %79 = arith.addf %77, %78 : vector<1x8xf32>
    %80 = arith.negf %79 : vector<1x8xf32>
    %81 = math.exp %80 : vector<1x8xf32>
    %cst_26 = arith.constant 1.000000e+00 : f32
    %82 = vector.broadcast %cst_26 : f32 to vector<1x8xf32>
    %83 = arith.addf %82, %81 : vector<1x8xf32>
    %84 = arith.divf %82, %83 : vector<1x8xf32>
    %85 = vector.extract_strided_slice %13 {offsets = [2, 0], sizes = [1, 8], strides = [1, 1]} : vector<16x8xf32> to vector<1x8xf32>
    %86 = vector.extract_strided_slice %76 {offsets = [0, 8], sizes = [1, 8], strides = [1, 1]} : vector<1x24xf32> to vector<1x8xf32>
    %87 = arith.addf %85, %86 : vector<1x8xf32>
    %88 = arith.negf %87 : vector<1x8xf32>
    %89 = math.exp %88 : vector<1x8xf32>
    %cst_27 = arith.constant 1.000000e+00 : f32
    %90 = vector.broadcast %cst_27 : f32 to vector<1x8xf32>
    %91 = arith.addf %90, %89 : vector<1x8xf32>
    %92 = arith.divf %90, %91 : vector<1x8xf32>
    %93 = vector.extract_strided_slice %14 {offsets = [2, 0], sizes = [1, 8], strides = [1, 1]} : vector<16x8xf32> to vector<1x8xf32>
    %94 = vector.extract_strided_slice %76 {offsets = [0, 16], sizes = [1, 8], strides = [1, 1]} : vector<1x24xf32> to vector<1x8xf32>
    %95 = arith.addf %94, %16 : vector<1x8xf32>
    %96 = arith.mulf %84, %95 : vector<1x8xf32>
    %97 = arith.addf %93, %96 : vector<1x8xf32>
    %98 = math.tanh %97 : vector<1x8xf32>
    %cst_28 = arith.constant 1.000000e+00 : f32
    %99 = vector.broadcast %cst_28 : f32 to vector<1x8xf32>
    %100 = arith.subf %99, %92 : vector<1x8xf32>
    %101 = arith.mulf %100, %98 : vector<1x8xf32>
    %102 = arith.mulf %92, %74 : vector<1x8xf32>
    %103 = arith.addf %101, %102 : vector<1x8xf32>
    %c2 = arith.constant 2 : index
    %c0_29 = arith.constant 0 : index
    %104 = vector.load %arg9[%c2, %c0_29] : memref<16x8xf32, #tpu.memory_space<vmem>>, vector<1x8xf32>
    tpu.vector_store %arg9[%c2, %c0_29], %103 {strides = array<i32>} : memref<16x8xf32, #tpu.memory_space<vmem>>, vector<1x8xf32>,
    %cst_30 = arith.constant dense<0.000000e+00> : vector<1x24xf32>
    %105 = tpu.matmul %103, %15, %cst_30 {dimension_numbers = #tpu.dot_dimension_numbers<[1], [0], [0], [1], [0, 0, 1, 1], [], []>} : vector<1x8xf32>, vector<8x24xf32>, vector<1x24xf32> -> vector<1x24xf32>
    %106 = vector.extract_strided_slice %12 {offsets = [3, 0], sizes = [1, 8], strides = [1, 1]} : vector<16x8xf32> to vector<1x8xf32>
    %107 = vector.extract_strided_slice %105 {offsets = [0, 0], sizes = [1, 8], strides = [1, 1]} : vector<1x24xf32> to vector<1x8xf32>
    %108 = arith.addf %106, %107 : vector<1x8xf32>
    %109 = arith.negf %108 : vector<1x8xf32>
    %110 = math.exp %109 : vector<1x8xf32>
    %cst_31 = arith.constant 1.000000e+00 : f32
    %111 = vector.broadcast %cst_31 : f32 to vector<1x8xf32>
    %112 = arith.addf %111, %110 : vector<1x8xf32>
    %113 = arith.divf %111, %112 : vector<1x8xf32>
    %114 = vector.extract_strided_slice %13 {offsets = [3, 0], sizes = [1, 8], strides = [1, 1]} : vector<16x8xf32> to vector<1x8xf32>
    %115 = vector.extract_strided_slice %105 {offsets = [0, 8], sizes = [1, 8], strides = [1, 1]} : vector<1x24xf32> to vector<1x8xf32>
    %116 = arith.addf %114, %115 : vector<1x8xf32>
    %117 = arith.negf %116 : vector<1x8xf32>
    %118 = math.exp %117 : vector<1x8xf32>
    %cst_32 = arith.constant 1.000000e+00 : f32
    %119 = vector.broadcast %cst_32 : f32 to vector<1x8xf32>
    %120 = arith.addf %119, %118 : vector<1x8xf32>
    %121 = arith.divf %119, %120 : vector<1x8xf32>
    %122 = vector.extract_strided_slice %14 {offsets = [3, 0], sizes = [1, 8], strides = [1, 1]} : vector<16x8xf32> to vector<1x8xf32>
    %123 = vector.extract_strided_slice %105 {offsets = [0, 16], sizes = [1, 8], strides = [1, 1]} : vector<1x24xf32> to vector<1x8xf32>
    %124 = arith.addf %123, %16 : vector<1x8xf32>
    %125 = arith.mulf %113, %124 : vector<1x8xf32>
    %126 = arith.addf %122, %125 : vector<1x8xf32>
    %127 = math.tanh %126 : vector<1x8xf32>
    %cst_33 = arith.constant 1.000000e+00 : f32
    %128 = vector.broadcast %cst_33 : f32 to vector<1x8xf32>
    %129 = arith.subf %128, %121 : vector<1x8xf32>
    %130 = arith.mulf %129, %127 : vector<1x8xf32>
    %131 = arith.mulf %121, %103 : vector<1x8xf32>
    %132 = arith.addf %130, %131 : vector<1x8xf32>
    %c3 = arith.constant 3 : index
    %c0_34 = arith.constant 0 : index
    %133 = vector.load %arg9[%c3, %c0_34] : memref<16x8xf32, #tpu.memory_space<vmem>>, vector<1x8xf32>
    tpu.vector_store %arg9[%c3, %c0_34], %132 {strides = array<i32>} : memref<16x8xf32, #tpu.memory_space<vmem>>, vector<1x8xf32>,
    %cst_35 = arith.constant dense<0.000000e+00> : vector<1x24xf32>
    %134 = tpu.matmul %132, %15, %cst_35 {dimension_numbers = #tpu.dot_dimension_numbers<[1], [0], [0], [1], [0, 0, 1, 1], [], []>} : vector<1x8xf32>, vector<8x24xf32>, vector<1x24xf32> -> vector<1x24xf32>
    %135 = vector.extract_strided_slice %12 {offsets = [4, 0], sizes = [1, 8], strides = [1, 1]} : vector<16x8xf32> to vector<1x8xf32>
    %136 = vector.extract_strided_slice %134 {offsets = [0, 0], sizes = [1, 8], strides = [1, 1]} : vector<1x24xf32> to vector<1x8xf32>
    %137 = arith.addf %135, %136 : vector<1x8xf32>
    %138 = arith.negf %137 : vector<1x8xf32>
    %139 = math.exp %138 : vector<1x8xf32>
    %cst_36 = arith.constant 1.000000e+00 : f32
    %140 = vector.broadcast %cst_36 : f32 to vector<1x8xf32>
    %141 = arith.addf %140, %139 : vector<1x8xf32>
    %142 = arith.divf %140, %141 : vector<1x8xf32>
    %143 = vector.extract_strided_slice %13 {offsets = [4, 0], sizes = [1, 8], strides = [1, 1]} : vector<16x8xf32> to vector<1x8xf32>
    %144 = vector.extract_strided_slice %134 {offsets = [0, 8], sizes = [1, 8], strides = [1, 1]} : vector<1x24xf32> to vector<1x8xf32>
    %145 = arith.addf %143, %144 : vector<1x8xf32>
    %146 = arith.negf %145 : vector<1x8xf32>
    %147 = math.exp %146 : vector<1x8xf32>
    %cst_37 = arith.constant 1.000000e+00 : f32
    %148 = vector.broadcast %cst_37 : f32 to vector<1x8xf32>
    %149 = arith.addf %148, %147 : vector<1x8xf32>
    %150 = arith.divf %148, %149 : vector<1x8xf32>
    %151 = vector.extract_strided_slice %14 {offsets = [4, 0], sizes = [1, 8], strides = [1, 1]} : vector<16x8xf32> to vector<1x8xf32>
    %152 = vector.extract_strided_slice %134 {offsets = [0, 16], sizes = [1, 8], strides = [1, 1]} : vector<1x24xf32> to vector<1x8xf32>
    %153 = arith.addf %152, %16 : vector<1x8xf32>
    %154 = arith.mulf %142, %153 : vector<1x8xf32>
    %155 = arith.addf %151, %154 : vector<1x8xf32>
    %156 = math.tanh %155 : vector<1x8xf32>
    %cst_38 = arith.constant 1.000000e+00 : f32
    %157 = vector.broadcast %cst_38 : f32 to vector<1x8xf32>
    %158 = arith.subf %157, %150 : vector<1x8xf32>
    %159 = arith.mulf %158, %156 : vector<1x8xf32>
    %160 = arith.mulf %150, %132 : vector<1x8xf32>
    %161 = arith.addf %159, %160 : vector<1x8xf32>
    %c4 = arith.constant 4 : index
    %c0_39 = arith.constant 0 : index
    %162 = vector.load %arg9[%c4, %c0_39] : memref<16x8xf32, #tpu.memory_space<vmem>>, vector<1x8xf32>
    tpu.vector_store %arg9[%c4, %c0_39], %161 {strides = array<i32>} : memref<16x8xf32, #tpu.memory_space<vmem>>, vector<1x8xf32>,
    %cst_40 = arith.constant dense<0.000000e+00> : vector<1x24xf32>
    %163 = tpu.matmul %161, %15, %cst_40 {dimension_numbers = #tpu.dot_dimension_numbers<[1], [0], [0], [1], [0, 0, 1, 1], [], []>} : vector<1x8xf32>, vector<8x24xf32>, vector<1x24xf32> -> vector<1x24xf32>
    %164 = vector.extract_strided_slice %12 {offsets = [5, 0], sizes = [1, 8], strides = [1, 1]} : vector<16x8xf32> to vector<1x8xf32>
    %165 = vector.extract_strided_slice %163 {offsets = [0, 0], sizes = [1, 8], strides = [1, 1]} : vector<1x24xf32> to vector<1x8xf32>
    %166 = arith.addf %164, %165 : vector<1x8xf32>
    %167 = arith.negf %166 : vector<1x8xf32>
    %168 = math.exp %167 : vector<1x8xf32>
    %cst_41 = arith.constant 1.000000e+00 : f32
    %169 = vector.broadcast %cst_41 : f32 to vector<1x8xf32>
    %170 = arith.addf %169, %168 : vector<1x8xf32>
    %171 = arith.divf %169, %170 : vector<1x8xf32>
    %172 = vector.extract_strided_slice %13 {offsets = [5, 0], sizes = [1, 8], strides = [1, 1]} : vector<16x8xf32> to vector<1x8xf32>
    %173 = vector.extract_strided_slice %163 {offsets = [0, 8], sizes = [1, 8], strides = [1, 1]} : vector<1x24xf32> to vector<1x8xf32>
    %174 = arith.addf %172, %173 : vector<1x8xf32>
    %175 = arith.negf %174 : vector<1x8xf32>
    %176 = math.exp %175 : vector<1x8xf32>
    %cst_42 = arith.constant 1.000000e+00 : f32
    %177 = vector.broadcast %cst_42 : f32 to vector<1x8xf32>
    %178 = arith.addf %177, %176 : vector<1x8xf32>
    %179 = arith.divf %177, %178 : vector<1x8xf32>
    %180 = vector.extract_strided_slice %14 {offsets = [5, 0], sizes = [1, 8], strides = [1, 1]} : vector<16x8xf32> to vector<1x8xf32>
    %181 = vector.extract_strided_slice %163 {offsets = [0, 16], sizes = [1, 8], strides = [1, 1]} : vector<1x24xf32> to vector<1x8xf32>
    %182 = arith.addf %181, %16 : vector<1x8xf32>
    %183 = arith.mulf %171, %182 : vector<1x8xf32>
    %184 = arith.addf %180, %183 : vector<1x8xf32>
    %185 = math.tanh %184 : vector<1x8xf32>
    %cst_43 = arith.constant 1.000000e+00 : f32
    %186 = vector.broadcast %cst_43 : f32 to vector<1x8xf32>
    %187 = arith.subf %186, %179 : vector<1x8xf32>
    %188 = arith.mulf %187, %185 : vector<1x8xf32>
    %189 = arith.mulf %179, %161 : vector<1x8xf32>
    %190 = arith.addf %188, %189 : vector<1x8xf32>
    %c5 = arith.constant 5 : index
    %c0_44 = arith.constant 0 : index
    %191 = vector.load %arg9[%c5, %c0_44] : memref<16x8xf32, #tpu.memory_space<vmem>>, vector<1x8xf32>
    tpu.vector_store %arg9[%c5, %c0_44], %190 {strides = array<i32>} : memref<16x8xf32, #tpu.memory_space<vmem>>, vector<1x8xf32>,
    %cst_45 = arith.constant dense<0.000000e+00> : vector<1x24xf32>
    %192 = tpu.matmul %190, %15, %cst_45 {dimension_numbers = #tpu.dot_dimension_numbers<[1], [0], [0], [1], [0, 0, 1, 1], [], []>} : vector<1x8xf32>, vector<8x24xf32>, vector<1x24xf32> -> vector<1x24xf32>
    %193 = vector.extract_strided_slice %12 {offsets = [6, 0], sizes = [1, 8], strides = [1, 1]} : vector<16x8xf32> to vector<1x8xf32>
    %194 = vector.extract_strided_slice %192 {offsets = [0, 0], sizes = [1, 8], strides = [1, 1]} : vector<1x24xf32> to vector<1x8xf32>
    %195 = arith.addf %193, %194 : vector<1x8xf32>
    %196 = arith.negf %195 : vector<1x8xf32>
    %197 = math.exp %196 : vector<1x8xf32>
    %cst_46 = arith.constant 1.000000e+00 : f32
    %198 = vector.broadcast %cst_46 : f32 to vector<1x8xf32>
    %199 = arith.addf %198, %197 : vector<1x8xf32>
    %200 = arith.divf %198, %199 : vector<1x8xf32>
    %201 = vector.extract_strided_slice %13 {offsets = [6, 0], sizes = [1, 8], strides = [1, 1]} : vector<16x8xf32> to vector<1x8xf32>
    %202 = vector.extract_strided_slice %192 {offsets = [0, 8], sizes = [1, 8], strides = [1, 1]} : vector<1x24xf32> to vector<1x8xf32>
    %203 = arith.addf %201, %202 : vector<1x8xf32>
    %204 = arith.negf %203 : vector<1x8xf32>
    %205 = math.exp %204 : vector<1x8xf32>
    %cst_47 = arith.constant 1.000000e+00 : f32
    %206 = vector.broadcast %cst_47 : f32 to vector<1x8xf32>
    %207 = arith.addf %206, %205 : vector<1x8xf32>
    %208 = arith.divf %206, %207 : vector<1x8xf32>
    %209 = vector.extract_strided_slice %14 {offsets = [6, 0], sizes = [1, 8], strides = [1, 1]} : vector<16x8xf32> to vector<1x8xf32>
    %210 = vector.extract_strided_slice %192 {offsets = [0, 16], sizes = [1, 8], strides = [1, 1]} : vector<1x24xf32> to vector<1x8xf32>
    %211 = arith.addf %210, %16 : vector<1x8xf32>
    %212 = arith.mulf %200, %211 : vector<1x8xf32>
    %213 = arith.addf %209, %212 : vector<1x8xf32>
    %214 = math.tanh %213 : vector<1x8xf32>
    %cst_48 = arith.constant 1.000000e+00 : f32
    %215 = vector.broadcast %cst_48 : f32 to vector<1x8xf32>
    %216 = arith.subf %215, %208 : vector<1x8xf32>
    %217 = arith.mulf %216, %214 : vector<1x8xf32>
    %218 = arith.mulf %208, %190 : vector<1x8xf32>
    %219 = arith.addf %217, %218 : vector<1x8xf32>
    %c6 = arith.constant 6 : index
    %c0_49 = arith.constant 0 : index
    %220 = vector.load %arg9[%c6, %c0_49] : memref<16x8xf32, #tpu.memory_space<vmem>>, vector<1x8xf32>
    tpu.vector_store %arg9[%c6, %c0_49], %219 {strides = array<i32>} : memref<16x8xf32, #tpu.memory_space<vmem>>, vector<1x8xf32>,
    %cst_50 = arith.constant dense<0.000000e+00> : vector<1x24xf32>
    %221 = tpu.matmul %219, %15, %cst_50 {dimension_numbers = #tpu.dot_dimension_numbers<[1], [0], [0], [1], [0, 0, 1, 1], [], []>} : vector<1x8xf32>, vector<8x24xf32>, vector<1x24xf32> -> vector<1x24xf32>
    %222 = vector.extract_strided_slice %12 {offsets = [7, 0], sizes = [1, 8], strides = [1, 1]} : vector<16x8xf32> to vector<1x8xf32>
    %223 = vector.extract_strided_slice %221 {offsets = [0, 0], sizes = [1, 8], strides = [1, 1]} : vector<1x24xf32> to vector<1x8xf32>
    %224 = arith.addf %222, %223 : vector<1x8xf32>
    %225 = arith.negf %224 : vector<1x8xf32>
    %226 = math.exp %225 : vector<1x8xf32>
    %cst_51 = arith.constant 1.000000e+00 : f32
    %227 = vector.broadcast %cst_51 : f32 to vector<1x8xf32>
    %228 = arith.addf %227, %226 : vector<1x8xf32>
    %229 = arith.divf %227, %228 : vector<1x8xf32>
    %230 = vector.extract_strided_slice %13 {offsets = [7, 0], sizes = [1, 8], strides = [1, 1]} : vector<16x8xf32> to vector<1x8xf32>
    %231 = vector.extract_strided_slice %221 {offsets = [0, 8], sizes = [1, 8], strides = [1, 1]} : vector<1x24xf32> to vector<1x8xf32>
    %232 = arith.addf %230, %231 : vector<1x8xf32>
    %233 = arith.negf %232 : vector<1x8xf32>
    %234 = math.exp %233 : vector<1x8xf32>
    %cst_52 = arith.constant 1.000000e+00 : f32
    %235 = vector.broadcast %cst_52 : f32 to vector<1x8xf32>
    %236 = arith.addf %235, %234 : vector<1x8xf32>
    %237 = arith.divf %235, %236 : vector<1x8xf32>
    %238 = vector.extract_strided_slice %14 {offsets = [7, 0], sizes = [1, 8], strides = [1, 1]} : vector<16x8xf32> to vector<1x8xf32>
    %239 = vector.extract_strided_slice %221 {offsets = [0, 16], sizes = [1, 8], strides = [1, 1]} : vector<1x24xf32> to vector<1x8xf32>
    %240 = arith.addf %239, %16 : vector<1x8xf32>
    %241 = arith.mulf %229, %240 : vector<1x8xf32>
    %242 = arith.addf %238, %241 : vector<1x8xf32>
    %243 = math.tanh %242 : vector<1x8xf32>
    %cst_53 = arith.constant 1.000000e+00 : f32
    %244 = vector.broadcast %cst_53 : f32 to vector<1x8xf32>
    %245 = arith.subf %244, %237 : vector<1x8xf32>
    %246 = arith.mulf %245, %243 : vector<1x8xf32>
    %247 = arith.mulf %237, %219 : vector<1x8xf32>
    %248 = arith.addf %246, %247 : vector<1x8xf32>
    %c7 = arith.constant 7 : index
    %c0_54 = arith.constant 0 : index
    %249 = vector.load %arg9[%c7, %c0_54] : memref<16x8xf32, #tpu.memory_space<vmem>>, vector<1x8xf32>
    tpu.vector_store %arg9[%c7, %c0_54], %248 {strides = array<i32>} : memref<16x8xf32, #tpu.memory_space<vmem>>, vector<1x8xf32>,
    %cst_55 = arith.constant dense<0.000000e+00> : vector<1x24xf32>
    %250 = tpu.matmul %248, %15, %cst_55 {dimension_numbers = #tpu.dot_dimension_numbers<[1], [0], [0], [1], [0, 0, 1, 1], [], []>} : vector<1x8xf32>, vector<8x24xf32>, vector<1x24xf32> -> vector<1x24xf32>
    %251 = vector.extract_strided_slice %12 {offsets = [8, 0], sizes = [1, 8], strides = [1, 1]} : vector<16x8xf32> to vector<1x8xf32>
    %252 = vector.extract_strided_slice %250 {offsets = [0, 0], sizes = [1, 8], strides = [1, 1]} : vector<1x24xf32> to vector<1x8xf32>
    %253 = arith.addf %251, %252 : vector<1x8xf32>
    %254 = arith.negf %253 : vector<1x8xf32>
    %255 = math.exp %254 : vector<1x8xf32>
    %cst_56 = arith.constant 1.000000e+00 : f32
    %256 = vector.broadcast %cst_56 : f32 to vector<1x8xf32>
    %257 = arith.addf %256, %255 : vector<1x8xf32>
    %258 = arith.divf %256, %257 : vector<1x8xf32>
    %259 = vector.extract_strided_slice %13 {offsets = [8, 0], sizes = [1, 8], strides = [1, 1]} : vector<16x8xf32> to vector<1x8xf32>
    %260 = vector.extract_strided_slice %250 {offsets = [0, 8], sizes = [1, 8], strides = [1, 1]} : vector<1x24xf32> to vector<1x8xf32>
    %261 = arith.addf %259, %260 : vector<1x8xf32>
    %262 = arith.negf %261 : vector<1x8xf32>
    %263 = math.exp %262 : vector<1x8xf32>
    %cst_57 = arith.constant 1.000000e+00 : f32
    %264 = vector.broadcast %cst_57 : f32 to vector<1x8xf32>
    %265 = arith.addf %264, %263 : vector<1x8xf32>
    %266 = arith.divf %264, %265 : vector<1x8xf32>
    %267 = vector.extract_strided_slice %14 {offsets = [8, 0], sizes = [1, 8], strides = [1, 1]} : vector<16x8xf32> to vector<1x8xf32>
    %268 = vector.extract_strided_slice %250 {offsets = [0, 16], sizes = [1, 8], strides = [1, 1]} : vector<1x24xf32> to vector<1x8xf32>
    %269 = arith.addf %268, %16 : vector<1x8xf32>
    %270 = arith.mulf %258, %269 : vector<1x8xf32>
    %271 = arith.addf %267, %270 : vector<1x8xf32>
    %272 = math.tanh %271 : vector<1x8xf32>
    %cst_58 = arith.constant 1.000000e+00 : f32
    %273 = vector.broadcast %cst_58 : f32 to vector<1x8xf32>
    %274 = arith.subf %273, %266 : vector<1x8xf32>
    %275 = arith.mulf %274, %272 : vector<1x8xf32>
    %276 = arith.mulf %266, %248 : vector<1x8xf32>
    %277 = arith.addf %275, %276 : vector<1x8xf32>
    %c8 = arith.constant 8 : index
    %c0_59 = arith.constant 0 : index
    %278 = vector.load %arg9[%c8, %c0_59] : memref<16x8xf32, #tpu.memory_space<vmem>>, vector<1x8xf32>
    tpu.vector_store %arg9[%c8, %c0_59], %277 {strides = array<i32>} : memref<16x8xf32, #tpu.memory_space<vmem>>, vector<1x8xf32>,
    %cst_60 = arith.constant dense<0.000000e+00> : vector<1x24xf32>
    %279 = tpu.matmul %277, %15, %cst_60 {dimension_numbers = #tpu.dot_dimension_numbers<[1], [0], [0], [1], [0, 0, 1, 1], [], []>} : vector<1x8xf32>, vector<8x24xf32>, vector<1x24xf32> -> vector<1x24xf32>
    %280 = vector.extract_strided_slice %12 {offsets = [9, 0], sizes = [1, 8], strides = [1, 1]} : vector<16x8xf32> to vector<1x8xf32>
    %281 = vector.extract_strided_slice %279 {offsets = [0, 0], sizes = [1, 8], strides = [1, 1]} : vector<1x24xf32> to vector<1x8xf32>
    %282 = arith.addf %280, %281 : vector<1x8xf32>
    %283 = arith.negf %282 : vector<1x8xf32>
    %284 = math.exp %283 : vector<1x8xf32>
    %cst_61 = arith.constant 1.000000e+00 : f32
    %285 = vector.broadcast %cst_61 : f32 to vector<1x8xf32>
    %286 = arith.addf %285, %284 : vector<1x8xf32>
    %287 = arith.divf %285, %286 : vector<1x8xf32>
    %288 = vector.extract_strided_slice %13 {offsets = [9, 0], sizes = [1, 8], strides = [1, 1]} : vector<16x8xf32> to vector<1x8xf32>
    %289 = vector.extract_strided_slice %279 {offsets = [0, 8], sizes = [1, 8], strides = [1, 1]} : vector<1x24xf32> to vector<1x8xf32>
    %290 = arith.addf %288, %289 : vector<1x8xf32>
    %291 = arith.negf %290 : vector<1x8xf32>
    %292 = math.exp %291 : vector<1x8xf32>
    %cst_62 = arith.constant 1.000000e+00 : f32
    %293 = vector.broadcast %cst_62 : f32 to vector<1x8xf32>
    %294 = arith.addf %293, %292 : vector<1x8xf32>
    %295 = arith.divf %293, %294 : vector<1x8xf32>
    %296 = vector.extract_strided_slice %14 {offsets = [9, 0], sizes = [1, 8], strides = [1, 1]} : vector<16x8xf32> to vector<1x8xf32>
    %297 = vector.extract_strided_slice %279 {offsets = [0, 16], sizes = [1, 8], strides = [1, 1]} : vector<1x24xf32> to vector<1x8xf32>
    %298 = arith.addf %297, %16 : vector<1x8xf32>
    %299 = arith.mulf %287, %298 : vector<1x8xf32>
    %300 = arith.addf %296, %299 : vector<1x8xf32>
    %301 = math.tanh %300 : vector<1x8xf32>
    %cst_63 = arith.constant 1.000000e+00 : f32
    %302 = vector.broadcast %cst_63 : f32 to vector<1x8xf32>
    %303 = arith.subf %302, %295 : vector<1x8xf32>
    %304 = arith.mulf %303, %301 : vector<1x8xf32>
    %305 = arith.mulf %295, %277 : vector<1x8xf32>
    %306 = arith.addf %304, %305 : vector<1x8xf32>
    %c9 = arith.constant 9 : index
    %c0_64 = arith.constant 0 : index
    %307 = vector.load %arg9[%c9, %c0_64] : memref<16x8xf32, #tpu.memory_space<vmem>>, vector<1x8xf32>
    tpu.vector_store %arg9[%c9, %c0_64], %306 {strides = array<i32>} : memref<16x8xf32, #tpu.memory_space<vmem>>, vector<1x8xf32>,
    %cst_65 = arith.constant dense<0.000000e+00> : vector<1x24xf32>
    %308 = tpu.matmul %306, %15, %cst_65 {dimension_numbers = #tpu.dot_dimension_numbers<[1], [0], [0], [1], [0, 0, 1, 1], [], []>} : vector<1x8xf32>, vector<8x24xf32>, vector<1x24xf32> -> vector<1x24xf32>
    %309 = vector.extract_strided_slice %12 {offsets = [10, 0], sizes = [1, 8], strides = [1, 1]} : vector<16x8xf32> to vector<1x8xf32>
    %310 = vector.extract_strided_slice %308 {offsets = [0, 0], sizes = [1, 8], strides = [1, 1]} : vector<1x24xf32> to vector<1x8xf32>
    %311 = arith.addf %309, %310 : vector<1x8xf32>
    %312 = arith.negf %311 : vector<1x8xf32>
    %313 = math.exp %312 : vector<1x8xf32>
    %cst_66 = arith.constant 1.000000e+00 : f32
    %314 = vector.broadcast %cst_66 : f32 to vector<1x8xf32>
    %315 = arith.addf %314, %313 : vector<1x8xf32>
    %316 = arith.divf %314, %315 : vector<1x8xf32>
    %317 = vector.extract_strided_slice %13 {offsets = [10, 0], sizes = [1, 8], strides = [1, 1]} : vector<16x8xf32> to vector<1x8xf32>
    %318 = vector.extract_strided_slice %308 {offsets = [0, 8], sizes = [1, 8], strides = [1, 1]} : vector<1x24xf32> to vector<1x8xf32>
    %319 = arith.addf %317, %318 : vector<1x8xf32>
    %320 = arith.negf %319 : vector<1x8xf32>
    %321 = math.exp %320 : vector<1x8xf32>
    %cst_67 = arith.constant 1.000000e+00 : f32
    %322 = vector.broadcast %cst_67 : f32 to vector<1x8xf32>
    %323 = arith.addf %322, %321 : vector<1x8xf32>
    %324 = arith.divf %322, %323 : vector<1x8xf32>
    %325 = vector.extract_strided_slice %14 {offsets = [10, 0], sizes = [1, 8], strides = [1, 1]} : vector<16x8xf32> to vector<1x8xf32>
    %326 = vector.extract_strided_slice %308 {offsets = [0, 16], sizes = [1, 8], strides = [1, 1]} : vector<1x24xf32> to vector<1x8xf32>
    %327 = arith.addf %326, %16 : vector<1x8xf32>
    %328 = arith.mulf %316, %327 : vector<1x8xf32>
    %329 = arith.addf %325, %328 : vector<1x8xf32>
    %330 = math.tanh %329 : vector<1x8xf32>
    %cst_68 = arith.constant 1.000000e+00 : f32
    %331 = vector.broadcast %cst_68 : f32 to vector<1x8xf32>
    %332 = arith.subf %331, %324 : vector<1x8xf32>
    %333 = arith.mulf %332, %330 : vector<1x8xf32>
    %334 = arith.mulf %324, %306 : vector<1x8xf32>
    %335 = arith.addf %333, %334 : vector<1x8xf32>
    %c10 = arith.constant 10 : index
    %c0_69 = arith.constant 0 : index
    %336 = vector.load %arg9[%c10, %c0_69] : memref<16x8xf32, #tpu.memory_space<vmem>>, vector<1x8xf32>
    tpu.vector_store %arg9[%c10, %c0_69], %335 {strides = array<i32>} : memref<16x8xf32, #tpu.memory_space<vmem>>, vector<1x8xf32>,
    %cst_70 = arith.constant dense<0.000000e+00> : vector<1x24xf32>
    %337 = tpu.matmul %335, %15, %cst_70 {dimension_numbers = #tpu.dot_dimension_numbers<[1], [0], [0], [1], [0, 0, 1, 1], [], []>} : vector<1x8xf32>, vector<8x24xf32>, vector<1x24xf32> -> vector<1x24xf32>
    %338 = vector.extract_strided_slice %12 {offsets = [11, 0], sizes = [1, 8], strides = [1, 1]} : vector<16x8xf32> to vector<1x8xf32>
    %339 = vector.extract_strided_slice %337 {offsets = [0, 0], sizes = [1, 8], strides = [1, 1]} : vector<1x24xf32> to vector<1x8xf32>
    %340 = arith.addf %338, %339 : vector<1x8xf32>
    %341 = arith.negf %340 : vector<1x8xf32>
    %342 = math.exp %341 : vector<1x8xf32>
    %cst_71 = arith.constant 1.000000e+00 : f32
    %343 = vector.broadcast %cst_71 : f32 to vector<1x8xf32>
    %344 = arith.addf %343, %342 : vector<1x8xf32>
    %345 = arith.divf %343, %344 : vector<1x8xf32>
    %346 = vector.extract_strided_slice %13 {offsets = [11, 0], sizes = [1, 8], strides = [1, 1]} : vector<16x8xf32> to vector<1x8xf32>
    %347 = vector.extract_strided_slice %337 {offsets = [0, 8], sizes = [1, 8], strides = [1, 1]} : vector<1x24xf32> to vector<1x8xf32>
    %348 = arith.addf %346, %347 : vector<1x8xf32>
    %349 = arith.negf %348 : vector<1x8xf32>
    %350 = math.exp %349 : vector<1x8xf32>
    %cst_72 = arith.constant 1.000000e+00 : f32
    %351 = vector.broadcast %cst_72 : f32 to vector<1x8xf32>
    %352 = arith.addf %351, %350 : vector<1x8xf32>
    %353 = arith.divf %351, %352 : vector<1x8xf32>
    %354 = vector.extract_strided_slice %14 {offsets = [11, 0], sizes = [1, 8], strides = [1, 1]} : vector<16x8xf32> to vector<1x8xf32>
    %355 = vector.extract_strided_slice %337 {offsets = [0, 16], sizes = [1, 8], strides = [1, 1]} : vector<1x24xf32> to vector<1x8xf32>
    %356 = arith.addf %355, %16 : vector<1x8xf32>
    %357 = arith.mulf %345, %356 : vector<1x8xf32>
    %358 = arith.addf %354, %357 : vector<1x8xf32>
    %359 = math.tanh %358 : vector<1x8xf32>
    %cst_73 = arith.constant 1.000000e+00 : f32
    %360 = vector.broadcast %cst_73 : f32 to vector<1x8xf32>
    %361 = arith.subf %360, %353 : vector<1x8xf32>
    %362 = arith.mulf %361, %359 : vector<1x8xf32>
    %363 = arith.mulf %353, %335 : vector<1x8xf32>
    %364 = arith.addf %362, %363 : vector<1x8xf32>
    %c11 = arith.constant 11 : index
    %c0_74 = arith.constant 0 : index
    %365 = vector.load %arg9[%c11, %c0_74] : memref<16x8xf32, #tpu.memory_space<vmem>>, vector<1x8xf32>
    tpu.vector_store %arg9[%c11, %c0_74], %364 {strides = array<i32>} : memref<16x8xf32, #tpu.memory_space<vmem>>, vector<1x8xf32>,
    %cst_75 = arith.constant dense<0.000000e+00> : vector<1x24xf32>
    %366 = tpu.matmul %364, %15, %cst_75 {dimension_numbers = #tpu.dot_dimension_numbers<[1], [0], [0], [1], [0, 0, 1, 1], [], []>} : vector<1x8xf32>, vector<8x24xf32>, vector<1x24xf32> -> vector<1x24xf32>
    %367 = vector.extract_strided_slice %12 {offsets = [12, 0], sizes = [1, 8], strides = [1, 1]} : vector<16x8xf32> to vector<1x8xf32>
    %368 = vector.extract_strided_slice %366 {offsets = [0, 0], sizes = [1, 8], strides = [1, 1]} : vector<1x24xf32> to vector<1x8xf32>
    %369 = arith.addf %367, %368 : vector<1x8xf32>
    %370 = arith.negf %369 : vector<1x8xf32>
    %371 = math.exp %370 : vector<1x8xf32>
    %cst_76 = arith.constant 1.000000e+00 : f32
    %372 = vector.broadcast %cst_76 : f32 to vector<1x8xf32>
    %373 = arith.addf %372, %371 : vector<1x8xf32>
    %374 = arith.divf %372, %373 : vector<1x8xf32>
    %375 = vector.extract_strided_slice %13 {offsets = [12, 0], sizes = [1, 8], strides = [1, 1]} : vector<16x8xf32> to vector<1x8xf32>
    %376 = vector.extract_strided_slice %366 {offsets = [0, 8], sizes = [1, 8], strides = [1, 1]} : vector<1x24xf32> to vector<1x8xf32>
    %377 = arith.addf %375, %376 : vector<1x8xf32>
    %378 = arith.negf %377 : vector<1x8xf32>
    %379 = math.exp %378 : vector<1x8xf32>
    %cst_77 = arith.constant 1.000000e+00 : f32
    %380 = vector.broadcast %cst_77 : f32 to vector<1x8xf32>
    %381 = arith.addf %380, %379 : vector<1x8xf32>
    %382 = arith.divf %380, %381 : vector<1x8xf32>
    %383 = vector.extract_strided_slice %14 {offsets = [12, 0], sizes = [1, 8], strides = [1, 1]} : vector<16x8xf32> to vector<1x8xf32>
    %384 = vector.extract_strided_slice %366 {offsets = [0, 16], sizes = [1, 8], strides = [1, 1]} : vector<1x24xf32> to vector<1x8xf32>
    %385 = arith.addf %384, %16 : vector<1x8xf32>
    %386 = arith.mulf %374, %385 : vector<1x8xf32>
    %387 = arith.addf %383, %386 : vector<1x8xf32>
    %388 = math.tanh %387 : vector<1x8xf32>
    %cst_78 = arith.constant 1.000000e+00 : f32
    %389 = vector.broadcast %cst_78 : f32 to vector<1x8xf32>
    %390 = arith.subf %389, %382 : vector<1x8xf32>
    %391 = arith.mulf %390, %388 : vector<1x8xf32>
    %392 = arith.mulf %382, %364 : vector<1x8xf32>
    %393 = arith.addf %391, %392 : vector<1x8xf32>
    %c12 = arith.constant 12 : index
    %c0_79 = arith.constant 0 : index
    %394 = vector.load %arg9[%c12, %c0_79] : memref<16x8xf32, #tpu.memory_space<vmem>>, vector<1x8xf32>
    tpu.vector_store %arg9[%c12, %c0_79], %393 {strides = array<i32>} : memref<16x8xf32, #tpu.memory_space<vmem>>, vector<1x8xf32>,
    %cst_80 = arith.constant dense<0.000000e+00> : vector<1x24xf32>
    %395 = tpu.matmul %393, %15, %cst_80 {dimension_numbers = #tpu.dot_dimension_numbers<[1], [0], [0], [1], [0, 0, 1, 1], [], []>} : vector<1x8xf32>, vector<8x24xf32>, vector<1x24xf32> -> vector<1x24xf32>
    %396 = vector.extract_strided_slice %12 {offsets = [13, 0], sizes = [1, 8], strides = [1, 1]} : vector<16x8xf32> to vector<1x8xf32>
    %397 = vector.extract_strided_slice %395 {offsets = [0, 0], sizes = [1, 8], strides = [1, 1]} : vector<1x24xf32> to vector<1x8xf32>
    %398 = arith.addf %396, %397 : vector<1x8xf32>
    %399 = arith.negf %398 : vector<1x8xf32>
    %400 = math.exp %399 : vector<1x8xf32>
    %cst_81 = arith.constant 1.000000e+00 : f32
    %401 = vector.broadcast %cst_81 : f32 to vector<1x8xf32>
    %402 = arith.addf %401, %400 : vector<1x8xf32>
    %403 = arith.divf %401, %402 : vector<1x8xf32>
    %404 = vector.extract_strided_slice %13 {offsets = [13, 0], sizes = [1, 8], strides = [1, 1]} : vector<16x8xf32> to vector<1x8xf32>
    %405 = vector.extract_strided_slice %395 {offsets = [0, 8], sizes = [1, 8], strides = [1, 1]} : vector<1x24xf32> to vector<1x8xf32>
    %406 = arith.addf %404, %405 : vector<1x8xf32>
    %407 = arith.negf %406 : vector<1x8xf32>
    %408 = math.exp %407 : vector<1x8xf32>
    %cst_82 = arith.constant 1.000000e+00 : f32
    %409 = vector.broadcast %cst_82 : f32 to vector<1x8xf32>
    %410 = arith.addf %409, %408 : vector<1x8xf32>
    %411 = arith.divf %409, %410 : vector<1x8xf32>
    %412 = vector.extract_strided_slice %14 {offsets = [13, 0], sizes = [1, 8], strides = [1, 1]} : vector<16x8xf32> to vector<1x8xf32>
    %413 = vector.extract_strided_slice %395 {offsets = [0, 16], sizes = [1, 8], strides = [1, 1]} : vector<1x24xf32> to vector<1x8xf32>
    %414 = arith.addf %413, %16 : vector<1x8xf32>
    %415 = arith.mulf %403, %414 : vector<1x8xf32>
    %416 = arith.addf %412, %415 : vector<1x8xf32>
    %417 = math.tanh %416 : vector<1x8xf32>
    %cst_83 = arith.constant 1.000000e+00 : f32
    %418 = vector.broadcast %cst_83 : f32 to vector<1x8xf32>
    %419 = arith.subf %418, %411 : vector<1x8xf32>
    %420 = arith.mulf %419, %417 : vector<1x8xf32>
    %421 = arith.mulf %411, %393 : vector<1x8xf32>
    %422 = arith.addf %420, %421 : vector<1x8xf32>
    %c13 = arith.constant 13 : index
    %c0_84 = arith.constant 0 : index
    %423 = vector.load %arg9[%c13, %c0_84] : memref<16x8xf32, #tpu.memory_space<vmem>>, vector<1x8xf32>
    tpu.vector_store %arg9[%c13, %c0_84], %422 {strides = array<i32>} : memref<16x8xf32, #tpu.memory_space<vmem>>, vector<1x8xf32>,
    %cst_85 = arith.constant dense<0.000000e+00> : vector<1x24xf32>
    %424 = tpu.matmul %422, %15, %cst_85 {dimension_numbers = #tpu.dot_dimension_numbers<[1], [0], [0], [1], [0, 0, 1, 1], [], []>} : vector<1x8xf32>, vector<8x24xf32>, vector<1x24xf32> -> vector<1x24xf32>
    %425 = vector.extract_strided_slice %12 {offsets = [14, 0], sizes = [1, 8], strides = [1, 1]} : vector<16x8xf32> to vector<1x8xf32>
    %426 = vector.extract_strided_slice %424 {offsets = [0, 0], sizes = [1, 8], strides = [1, 1]} : vector<1x24xf32> to vector<1x8xf32>
    %427 = arith.addf %425, %426 : vector<1x8xf32>
    %428 = arith.negf %427 : vector<1x8xf32>
    %429 = math.exp %428 : vector<1x8xf32>
    %cst_86 = arith.constant 1.000000e+00 : f32
    %430 = vector.broadcast %cst_86 : f32 to vector<1x8xf32>
    %431 = arith.addf %430, %429 : vector<1x8xf32>
    %432 = arith.divf %430, %431 : vector<1x8xf32>
    %433 = vector.extract_strided_slice %13 {offsets = [14, 0], sizes = [1, 8], strides = [1, 1]} : vector<16x8xf32> to vector<1x8xf32>
    %434 = vector.extract_strided_slice %424 {offsets = [0, 8], sizes = [1, 8], strides = [1, 1]} : vector<1x24xf32> to vector<1x8xf32>
    %435 = arith.addf %433, %434 : vector<1x8xf32>
    %436 = arith.negf %435 : vector<1x8xf32>
    %437 = math.exp %436 : vector<1x8xf32>
    %cst_87 = arith.constant 1.000000e+00 : f32
    %438 = vector.broadcast %cst_87 : f32 to vector<1x8xf32>
    %439 = arith.addf %438, %437 : vector<1x8xf32>
    %440 = arith.divf %438, %439 : vector<1x8xf32>
    %441 = vector.extract_strided_slice %14 {offsets = [14, 0], sizes = [1, 8], strides = [1, 1]} : vector<16x8xf32> to vector<1x8xf32>
    %442 = vector.extract_strided_slice %424 {offsets = [0, 16], sizes = [1, 8], strides = [1, 1]} : vector<1x24xf32> to vector<1x8xf32>
    %443 = arith.addf %442, %16 : vector<1x8xf32>
    %444 = arith.mulf %432, %443 : vector<1x8xf32>
    %445 = arith.addf %441, %444 : vector<1x8xf32>
    %446 = math.tanh %445 : vector<1x8xf32>
    %cst_88 = arith.constant 1.000000e+00 : f32
    %447 = vector.broadcast %cst_88 : f32 to vector<1x8xf32>
    %448 = arith.subf %447, %440 : vector<1x8xf32>
    %449 = arith.mulf %448, %446 : vector<1x8xf32>
    %450 = arith.mulf %440, %422 : vector<1x8xf32>
    %451 = arith.addf %449, %450 : vector<1x8xf32>
    %c14 = arith.constant 14 : index
    %c0_89 = arith.constant 0 : index
    %452 = vector.load %arg9[%c14, %c0_89] : memref<16x8xf32, #tpu.memory_space<vmem>>, vector<1x8xf32>
    tpu.vector_store %arg9[%c14, %c0_89], %451 {strides = array<i32>} : memref<16x8xf32, #tpu.memory_space<vmem>>, vector<1x8xf32>,
    %cst_90 = arith.constant dense<0.000000e+00> : vector<1x24xf32>
    %453 = tpu.matmul %451, %15, %cst_90 {dimension_numbers = #tpu.dot_dimension_numbers<[1], [0], [0], [1], [0, 0, 1, 1], [], []>} : vector<1x8xf32>, vector<8x24xf32>, vector<1x24xf32> -> vector<1x24xf32>
    %454 = vector.extract_strided_slice %12 {offsets = [15, 0], sizes = [1, 8], strides = [1, 1]} : vector<16x8xf32> to vector<1x8xf32>
    %455 = vector.extract_strided_slice %453 {offsets = [0, 0], sizes = [1, 8], strides = [1, 1]} : vector<1x24xf32> to vector<1x8xf32>
    %456 = arith.addf %454, %455 : vector<1x8xf32>
    %457 = arith.negf %456 : vector<1x8xf32>
    %458 = math.exp %457 : vector<1x8xf32>
    %cst_91 = arith.constant 1.000000e+00 : f32
    %459 = vector.broadcast %cst_91 : f32 to vector<1x8xf32>
    %460 = arith.addf %459, %458 : vector<1x8xf32>
    %461 = arith.divf %459, %460 : vector<1x8xf32>
    %462 = vector.extract_strided_slice %13 {offsets = [15, 0], sizes = [1, 8], strides = [1, 1]} : vector<16x8xf32> to vector<1x8xf32>
    %463 = vector.extract_strided_slice %453 {offsets = [0, 8], sizes = [1, 8], strides = [1, 1]} : vector<1x24xf32> to vector<1x8xf32>
    %464 = arith.addf %462, %463 : vector<1x8xf32>
    %465 = arith.negf %464 : vector<1x8xf32>
    %466 = math.exp %465 : vector<1x8xf32>
    %cst_92 = arith.constant 1.000000e+00 : f32
    %467 = vector.broadcast %cst_92 : f32 to vector<1x8xf32>
    %468 = arith.addf %467, %466 : vector<1x8xf32>
    %469 = arith.divf %467, %468 : vector<1x8xf32>
    %470 = vector.extract_strided_slice %14 {offsets = [15, 0], sizes = [1, 8], strides = [1, 1]} : vector<16x8xf32> to vector<1x8xf32>
    %471 = vector.extract_strided_slice %453 {offsets = [0, 16], sizes = [1, 8], strides = [1, 1]} : vector<1x24xf32> to vector<1x8xf32>
    %472 = arith.addf %471, %16 : vector<1x8xf32>
    %473 = arith.mulf %461, %472 : vector<1x8xf32>
    %474 = arith.addf %470, %473 : vector<1x8xf32>
    %475 = math.tanh %474 : vector<1x8xf32>
    %cst_93 = arith.constant 1.000000e+00 : f32
    %476 = vector.broadcast %cst_93 : f32 to vector<1x8xf32>
    %477 = arith.subf %476, %469 : vector<1x8xf32>
    %478 = arith.mulf %477, %475 : vector<1x8xf32>
    %479 = arith.mulf %469, %451 : vector<1x8xf32>
    %480 = arith.addf %478, %479 : vector<1x8xf32>
    %c15 = arith.constant 15 : index
    %c0_94 = arith.constant 0 : index
    %481 = vector.load %arg9[%c15, %c0_94] : memref<16x8xf32, #tpu.memory_space<vmem>>, vector<1x8xf32>
    tpu.vector_store %arg9[%c15, %c0_94], %480 {strides = array<i32>} : memref<16x8xf32, #tpu.memory_space<vmem>>, vector<1x8xf32>,
    %c0_95 = arith.constant 0 : index
    %c0_96 = arith.constant 0 : index
    %482 = vector.load %arg9[%c0_95, %c0_96] : memref<16x8xf32, #tpu.memory_space<vmem>>, vector<16x8xf32>
    %c0_97 = arith.constant 0 : index
    %c0_98 = arith.constant 0 : index
    %483 = vector.load %arg6[%c0_97, %c0_98] : memref<8x4xf32, #tpu.memory_space<vmem>>, vector<8x4xf32>
    %cst_99 = arith.constant dense<0.000000e+00> : vector<16x4xf32>
    %484 = tpu.matmul %482, %483, %cst_99 {dimension_numbers = #tpu.dot_dimension_numbers<[1], [0], [0], [1], [0, 0, 1, 1], [], []>} : vector<16x8xf32>, vector<8x4xf32>, vector<16x4xf32> -> vector<16x4xf32>
    %c0_100 = arith.constant 0 : index
    %c0_101 = arith.constant 0 : index
    %485 = vector.load %arg7[%c0_100, %c0_101] : memref<1x4xf32, #tpu.memory_space<vmem>>, vector<1x4xf32>
    %486 = vector.broadcast %485 : vector<1x4xf32> to vector<16x4xf32>
    %487 = arith.addf %484, %486 : vector<16x4xf32>
    %488 = arith.negf %487 : vector<16x4xf32>
    %489 = math.exp %488 : vector<16x4xf32>
    %cst_102 = arith.constant 1.000000e+00 : f32
    %490 = vector.broadcast %cst_102 : f32 to vector<16x4xf32>
    %491 = arith.addf %490, %489 : vector<16x4xf32>
    %492 = arith.divf %490, %491 : vector<16x4xf32>
    %493 = tpu.transpose %492, [1, 0] : vector<16x4xf32> -> vector<4x16xf32>
    %c0_103 = arith.constant 0 : index
    %c0_104 = arith.constant 0 : index
    %c0_105 = arith.constant 0 : index
    %494 = vector.load %arg8[%c0_103, %c0_104, %c0_105] : memref<1x4x16xf32, #tpu.memory_space<vmem>>, vector<1x4x16xf32>
    %495 = vector.shape_cast %494 : vector<1x4x16xf32> to vector<4x16xf32>
    %496 = vector.shape_cast %493 : vector<4x16xf32> to vector<1x4x16xf32>
    tpu.vector_store %arg8[%c0_103, %c0_104, %c0_105], %496 {strides = array<i32>} : memref<1x4x16xf32, #tpu.memory_space<vmem>>, vector<1x4x16xf32>,
    return
  }
  func.func @transform_0(%arg0: i32) -> (i32, i32, i32, i32) {
    %c0_i32 = arith.constant 0 : i32
    %c0_i32_0 = arith.constant 0 : i32
    %c0_i32_1 = arith.constant 0 : i32
    %c0_i32_2 = arith.constant 0 : i32
    return %arg0, %c0_i32, %c0_i32_0, %c0_i32_1 : i32, i32, i32, i32
  }
  func.func @transform_1(%arg0: i32) -> (i32, i32) {
    %c0_i32 = arith.constant 0 : i32
    %c0_i32_0 = arith.constant 0 : i32
    %c0_i32_1 = arith.constant 0 : i32
    return %c0_i32, %c0_i32_0 : i32, i32
  }
  func.func @transform_2(%arg0: i32) -> (i32, i32) {
    %c0_i32 = arith.constant 0 : i32
    %c0_i32_0 = arith.constant 0 : i32
    %c0_i32_1 = arith.constant 0 : i32
    return %c0_i32, %c0_i32_0 : i32, i32
  }
  func.func @transform_3(%arg0: i32) -> (i32, i32) {
    %c0_i32 = arith.constant 0 : i32
    %c0_i32_0 = arith.constant 0 : i32
    %c0_i32_1 = arith.constant 0 : i32
    return %c0_i32, %c0_i32_0 : i32, i32
  }
  func.func @transform_4(%arg0: i32) -> (i32, i32) {
    %c0_i32 = arith.constant 0 : i32
    %c0_i32_0 = arith.constant 0 : i32
    %c0_i32_1 = arith.constant 0 : i32
    return %c0_i32, %c0_i32_0 : i32, i32
  }
  func.func @transform_5(%arg0: i32) -> (i32, i32) {
    %c0_i32 = arith.constant 0 : i32
    %c0_i32_0 = arith.constant 0 : i32
    %c0_i32_1 = arith.constant 0 : i32
    return %c0_i32, %c0_i32_0 : i32, i32
  }
  func.func @transform_6(%arg0: i32) -> (i32, i32) {
    %c0_i32 = arith.constant 0 : i32
    %c0_i32_0 = arith.constant 0 : i32
    %c0_i32_1 = arith.constant 0 : i32
    return %c0_i32, %c0_i32_0 : i32, i32
  }
  func.func @transform_7(%arg0: i32) -> (i32, i32, i32) {
    %c0_i32 = arith.constant 0 : i32
    %c0_i32_0 = arith.constant 0 : i32
    %c0_i32_1 = arith.constant 0 : i32
    return %arg0, %c0_i32, %c0_i32_0 : i32, i32, i32
  }
}

</mosaic_0001>

<llo_original>
// kernel: tpu_custom_call.1
$region0: #{tpu_custom_call.1}
  #allocation0 [shape = 'u32[]', space=smem, size = 0x4, offset = 0x4, fixed_abs, tag = 'smem constant byte address 0x4 - core index']
  #allocation1 [shape = 'u32[144,128]{1,0:T(1,128)}', space=vmem, size = 0x12000, scoped, tag = 'internal scratch']
  #allocation2 [shape = 'f32[16,8]{1,0:T(8,128)}', space=vmem, size = 0x2000, scoped, tag = 'scratch operand']
  %s0 = inlined_call_operand.hbm [shape: f32[2,4,16,16], index: 0, kind: input, shape index: {}]
  %s1 = inlined_call_operand.vmem [shape: f32[4,24], index: 1, kind: input, shape index: {}]
  %s2 = inlined_call_operand.vmem [shape: f32[8,24], index: 2, kind: input, shape index: {}]
  %s3 = inlined_call_operand.vmem [shape: f32[1,24], index: 3, kind: input, shape index: {}]
  %s4 = inlined_call_operand.vmem [shape: f32[1,8], index: 4, kind: input, shape index: {}]
  %s5 = inlined_call_operand.vmem [shape: f32[8,4], index: 5, kind: input, shape index: {}]
  %s6 = inlined_call_operand.vmem [shape: f32[1,4], index: 6, kind: input, shape index: {}]
  %s7 = inlined_call_operand.hbm [shape: f32[2,4,16], index: 7, kind: output, shape index: {}]
  %s8 = sld [smem:[#allocation0]]
  $region65: #{tpu_custom_call.1} parent=0
    _
  %s10 = ssub.s32 1, %s8
  %s11 = scalar_select 0, %s10, %s8
  $region1: #{tpu_custom_call.1} parent=0
    #allocation3 [shape = 'u8[65536]{0}', space=vmem, size = 0x10000, scoped, tag = 'input window, operand 0']
    #allocation4 [shape = 's32[2]{0}', space=sflag, size = 0x8, scoped, tag = 'scoped memory for tpu_custom_call.1']
    #allocation5 [shape = 's32[2]{0}', space=sflag, size = 0x8, scoped, tag = 'scoped memory for tpu_custom_call.1']
    #allocation6 [shape = 'u8[4096]{0}', space=vmem, size = 0x1000, scoped, tag = 'output window, operand 0']
    %12 = vsyncpa [#allocation4], 0
    %s13 = scalar_lea.sflag [#allocation4], 1
    %14 = vsyncpa %s13, 0
    %15 = vsyncpa [#allocation5], 0
    %s16 = scalar_lea.sflag [#allocation5], 1
    %17 = vsyncpa %s16, 0
    loop: start=0, step=1, limit=4
    $region2: #{tpu_custom_call.1} parent=1 // loop_pre_header
      _
    $region3: #{tpu_custom_call.1} parent=1 // loop_header
      %s19 = sphi 0, %s23
      %p20 = scmp.ge.s32.totalorder %s19, 4
      %s29 = sphi 0, %s31
      %s32 = sphi 0, %s29
      %s33 = sphi 0, %s32
      %s49 = sphi 0, %s33
      %s53 = sphi 0, %s53
      %s55 = sphi 0, %s53
      %s56 = sphi 0, %s55
      %s70 = sphi 0, %s56
      %s74 = sphi 0, %s74
      %s76 = sphi 0, %s74
      %s77 = sphi 0, %s76
      %s91 = sphi 0, %s77
      %s95 = sphi 0, %s95
      %s97 = sphi 0, %s95
      %s98 = sphi 0, %s97
      %s112 = sphi 0, %s98
      %s116 = sphi 0, %s116
      %s118 = sphi 0, %s116
      %s119 = sphi 0, %s118
      %s133 = sphi 0, %s119
      %s137 = sphi 0, %s137
      %s139 = sphi 0, %s137
      %s140 = sphi 0, %s139
      %s154 = sphi 0, %s140
      %s158 = sphi 0, %s158
      %s160 = sphi 0, %s158
      %s161 = sphi 0, %s160
      %s175 = sphi 0, %s161
      %s181 = sphi 0, %s183
      %s184 = sphi 0, %s181
      %s185 = sphi 0, %s184
      %s201 = sphi 0, %s185
    $region4: #{tpu_custom_call.1} parent=1 // loop_header_branch
      %22 = sbr.rel (%p20) target = $region8
    $region5: #{tpu_custom_call.1} parent=1 // loop_body
      %s24 = ssub.s32 %s19, 1
      %s25 = ssub.s32 %s19, 2
      %s26 = sadd.s32 %s19, 1
      %s27 = ssub.s32 %s19, %s26
      %p28 = scmp.eq.s32.totalorder %s27, 0
      %s30 = sadd.s32 %s29, 1
      %s31 = scalar_select %p28, %s29, %s30
      %p34 = pneg %p28
      %p35 = scmp.eq.s32.totalorder %s19, 1
      %p36 = por %p34, %p35
      %p37 = scmp.ne.s32.totalorder %s29, %s32
      %p38 = scmp.eq.s32.totalorder %s19, 0
      %p39 = por %p37, %p38
      %p40 = scmp.ne.s32.totalorder %s29, %s32
      %p41 = scmp.eq.s32.totalorder %s24, 1
      %p42 = por %p40, %p41
      %p43 = scmp.ne.s32.totalorder %s32, %s33
      %p44 = scmp.eq.s32.totalorder %s24, 0
      %p45 = por %p43, %p44
      %p46 = scmp.ne.s32.totalorder %s32, %s33
      %p47 = scmp.eq.s32.totalorder %s25, 1
      %p48 = por %p46, %p47
      %p50 = scmp.ne.s32.totalorder %s33, %s49
      %p51 = scmp.eq.s32.totalorder %s25, 0
      %p52 = por %p50, %p51
      %s54 = sadd.s32 %s53, 1
      %p57 = scmp.eq.s32.totalorder %s19, 1
      %p58 = scmp.ne.s32.totalorder %s53, %s55
      %p59 = scmp.eq.s32.totalorder %s19, 0
      %p60 = por %p58, %p59
      %p61 = scmp.ne.s32.totalorder %s53, %s55
      %p62 = scmp.eq.s32.totalorder %s24, 1
      %p63 = por %p61, %p62
      %p64 = scmp.ne.s32.totalorder %s55, %s56
      %p65 = scmp.eq.s32.totalorder %s24, 0
      %p66 = por %p64, %p65
      %p67 = scmp.ne.s32.totalorder %s55, %s56
      %p68 = scmp.eq.s32.totalorder %s25, 1
      %p69 = por %p67, %p68
      %p71 = scmp.ne.s32.totalorder %s56, %s70
      %p72 = scmp.eq.s32.totalorder %s25, 0
      %p73 = por %p71, %p72
      %s75 = sadd.s32 %s74, 1
      %p78 = scmp.eq.s32.totalorder %s19, 1
      %p79 = scmp.ne.s32.totalorder %s74, %s76
      %p80 = scmp.eq.s32.totalorder %s19, 0
      %p81 = por %p79, %p80
      %p82 = scmp.ne.s32.totalorder %s74, %s76
      %p83 = scmp.eq.s32.totalorder %s24, 1
      %p84 = por %p82, %p83
      %p85 = scmp.ne.s32.totalorder %s76, %s77
      %p86 = scmp.eq.s32.totalorder %s24, 0
      %p87 = por %p85, %p86
      %p88 = scmp.ne.s32.totalorder %s76, %s77
      %p89 = scmp.eq.s32.totalorder %s25, 1
      %p90 = por %p88, %p89
      %p92 = scmp.ne.s32.totalorder %s77, %s91
      %p93 = scmp.eq.s32.totalorder %s25, 0
      %p94 = por %p92, %p93
      %s96 = sadd.s32 %s95, 1
      %p99 = scmp.eq.s32.totalorder %s19, 1
      %p100 = scmp.ne.s32.totalorder %s95, %s97
      %p101 = scmp.eq.s32.totalorder %s19, 0
      %p102 = por %p100, %p101
      %p103 = scmp.ne.s32.totalorder %s95, %s97
      %p104 = scmp.eq.s32.totalorder %s24, 1
      %p105 = por %p103, %p104
      %p106 = scmp.ne.s32.totalorder %s97, %s98
      %p107 = scmp.eq.s32.totalorder %s24, 0
      %p108 = por %p106, %p107
      %p109 = scmp.ne.s32.totalorder %s97, %s98
      %p110 = scmp.eq.s32.totalorder %s25, 1
      %p111 = por %p109, %p110
      %p113 = scmp.ne.s32.totalorder %s98, %s112
      %p114 = scmp.eq.s32.totalorder %s25, 0
      %p115 = por %p113, %p114
      %s117 = sadd.s32 %s116, 1
      %p120 = scmp.eq.s32.totalorder %s19, 1
      %p121 = scmp.ne.s32.totalorder %s116, %s118
      %p122 = scmp.eq.s32.totalorder %s19, 0
      %p123 = por %p121, %p122
      %p124 = scmp.ne.s32.totalorder %s116, %s118
      %p125 = scmp.eq.s32.totalorder %s24, 1
      %p126 = por %p124, %p125
      %p127 = scmp.ne.s32.totalorder %s118, %s119
      %p128 = scmp.eq.s32.totalorder %s24, 0
      %p129 = por %p127, %p128
      %p130 = scmp.ne.s32.totalorder %s118, %s119
      %p131 = scmp.eq.s32.totalorder %s25, 1
      %p132 = por %p130, %p131
      %p134 = scmp.ne.s32.totalorder %s119, %s133
      %p135 = scmp.eq.s32.totalorder %s25, 0
      %p136 = por %p134, %p135
      %s138 = sadd.s32 %s137, 1
      %p141 = scmp.eq.s32.totalorder %s19, 1
      %p142 = scmp.ne.s32.totalorder %s137, %s139
      %p143 = scmp.eq.s32.totalorder %s19, 0
      %p144 = por %p142, %p143
      %p145 = scmp.ne.s32.totalorder %s137, %s139
      %p146 = scmp.eq.s32.totalorder %s24, 1
      %p147 = por %p145, %p146
      %p148 = scmp.ne.s32.totalorder %s139, %s140
      %p149 = scmp.eq.s32.totalorder %s24, 0
      %p150 = por %p148, %p149
      %p151 = scmp.ne.s32.totalorder %s139, %s140
      %p152 = scmp.eq.s32.totalorder %s25, 1
      %p153 = por %p151, %p152
      %p155 = scmp.ne.s32.totalorder %s140, %s154
      %p156 = scmp.eq.s32.totalorder %s25, 0
      %p157 = por %p155, %p156
      %s159 = sadd.s32 %s158, 1
      %p162 = scmp.eq.s32.totalorder %s19, 1
      %p163 = scmp.ne.s32.totalorder %s158, %s160
      %p164 = scmp.eq.s32.totalorder %s19, 0
      %p165 = por %p163, %p164
      %p166 = scmp.ne.s32.totalorder %s158, %s160
      %p167 = scmp.eq.s32.totalorder %s24, 1
      %p168 = por %p166, %p167
      %p169 = scmp.ne.s32.totalorder %s160, %s161
      %p170 = scmp.eq.s32.totalorder %s24, 0
      %p171 = por %p169, %p170
      %p172 = scmp.ne.s32.totalorder %s160, %s161
      %p173 = scmp.eq.s32.totalorder %s25, 1
      %p174 = por %p172, %p173
      %p176 = scmp.ne.s32.totalorder %s161, %s175
      %p177 = scmp.eq.s32.totalorder %s25, 0
      %p178 = por %p176, %p177
      %s179 = ssub.s32 %s19, %s26
      %p180 = scmp.eq.s32.totalorder %s179, 0
      %s182 = sadd.s32 %s181, 1
      %s183 = scalar_select %p180, %s181, %s182
      %p186 = pneg %p180
      %p187 = scmp.eq.s32.totalorder %s19, 1
      %p188 = por %p186, %p187
      %p189 = scmp.ne.s32.totalorder %s181, %s184
      %p190 = scmp.eq.s32.totalorder %s19, 0
      %p191 = por %p189, %p190
      %p192 = scmp.ne.s32.totalorder %s181, %s184
      %p193 = scmp.eq.s32.totalorder %s24, 1
      %p194 = por %p192, %p193
      %p195 = scmp.ne.s32.totalorder %s184, %s185
      %p196 = scmp.eq.s32.totalorder %s24, 0
      %p197 = por %p195, %p196
      %p198 = scmp.ne.s32.totalorder %s184, %s185
      %p199 = scmp.eq.s32.totalorder %s25, 1
      %p200 = por %p198, %p199
      %p202 = scmp.ne.s32.totalorder %s185, %s201
      %p203 = scmp.eq.s32.totalorder %s25, 0
      %p204 = por %p202, %p203
      %p205 = scmp.le.s32.totalorder 1, %s19
      %p206 = scmp.lt.s32.totalorder %s19, 3
      %p207 = pnand %p205, %p206
      %p208 = pneg %p207
      // Predicated region
      $region9: #{tpu_custom_call.1} parent=5 // pred_check
        _
      $region10: #{tpu_custom_call.1} parent=5 // pred_check_branch
        %210 = sbr.rel (%p207) target = $region12
      $region11: #{tpu_custom_call.1} parent=5 // pred_region
        %s211 = ssub.s32 %s19, 1
        // Predicated region
        $region13: #{tpu_custom_call.1} parent=11 // pred_check
          %p212 = pneg %p66
        $region14: #{tpu_custom_call.1} parent=11 // pred_check_branch
          %214 = sbr.rel (%p212) target = $region16
        $region15: #{tpu_custom_call.1} parent=11 // pred_region
          _
        $region16: #{tpu_custom_call.1} parent=11 // pred_fallthru
          _
        // Predicated region
        $region17: #{tpu_custom_call.1} parent=11 // pred_check
          %p215 = pneg %p87
        $region18: #{tpu_custom_call.1} parent=11 // pred_check_branch
          %217 = sbr.rel (%p215) target = $region20
        $region19: #{tpu_custom_call.1} parent=11 // pred_region
          _
        $region20: #{tpu_custom_call.1} parent=11 // pred_fallthru
          _
        // Predicated region
        $region21: #{tpu_custom_call.1} parent=11 // pred_check
          %p218 = pneg %p108
        $region22: #{tpu_custom_call.1} parent=11 // pred_check_branch
          %220 = sbr.rel (%p218) target = $region24
        $region23: #{tpu_custom_call.1} parent=11 // pred_region
          _
        $region24: #{tpu_custom_call.1} parent=11 // pred_fallthru
          _
        // Predicated region
        $region25: #{tpu_custom_call.1} parent=11 // pred_check
          %p221 = pneg %p129
        $region26: #{tpu_custom_call.1} parent=11 // pred_check_branch
          %223 = sbr.rel (%p221) target = $region28
        $region27: #{tpu_custom_call.1} parent=11 // pred_region
          _
        $region28: #{tpu_custom_call.1} parent=11 // pred_fallthru
          _
        // Predicated region
        $region29: #{tpu_custom_call.1} parent=11 // pred_check
          %p224 = pneg %p150
        $region30: #{tpu_custom_call.1} parent=11 // pred_check_branch
          %226 = sbr.rel (%p224) target = $region32
        $region31: #{tpu_custom_call.1} parent=11 // pred_region
          _
        $region32: #{tpu_custom_call.1} parent=11 // pred_fallthru
          _
        // Predicated region
        $region33: #{tpu_custom_call.1} parent=11 // pred_check
          %p227 = pneg %p171
        $region34: #{tpu_custom_call.1} parent=11 // pred_check_branch
          %229 = sbr.rel (%p227) target = $region36
        $region35: #{tpu_custom_call.1} parent=11 // pred_region
          _
        $region36: #{tpu_custom_call.1} parent=11 // pred_fallthru
          _
      $region12: #{tpu_custom_call.1} parent=5 // pred_fallthru
        _
      %p230 = scmp.lt.s32.totalorder %s19, 2
      // Predicated region
      $region37: #{tpu_custom_call.1} parent=5 // pred_check
        %p231 = pneg %p230
      $region38: #{tpu_custom_call.1} parent=5 // pred_check_branch
        %233 = sbr.rel (%p231) target = $region40
      $region39: #{tpu_custom_call.1} parent=5 // pred_region
        // Predicated region
        $region41: #{tpu_custom_call.1} parent=39 // pred_check
          %p234 = pneg %p39
        $region42: #{tpu_custom_call.1} parent=39 // pred_check_branch
          %236 = sbr.rel (%p234) target = $region44
        $region43: #{tpu_custom_call.1} parent=39 // pred_region
          %s237 = sand.u32 %s29, 1
          %s238 = scalar_lea.sflag [#allocation4], %s237
          %s239 = sand.u32 %s29, 1
          %s240 = smul.addr %s239, 64
          %s241 = scalar_lea.vmem [#allocation3], %s240
          %s243 = ssub.s32 1024, 1024
          %244 = vsyncadd %s238, %s243
          %s245 = smul.addr %s19, 8
          %s246 = smul.addr %s245, 128
          %s247 = scalar_lea.hbm %s0, %s246
          %s248 = sshll.u32 %s241, 4
          %s249 = int_to_ptr.vmem [resolvable:$true] %s248
          %254 = dma.hbm_to_vmem [thread:$0]  %s247, 1024, %s249, %s238, 128, 128, 8
        $region44: #{tpu_custom_call.1} parent=39 // pred_fallthru
          _
      $region40: #{tpu_custom_call.1} parent=5 // pred_fallthru
        _
      %p255 = scmp.le.s32.totalorder 1, %s19
      %p256 = scmp.lt.s32.totalorder %s19, 3
      %p257 = pnand %p255, %p256
      %p258 = pneg %p257
      // Predicated region
      $region45: #{tpu_custom_call.1} parent=5 // pred_check
        _
      $region46: #{tpu_custom_call.1} parent=5 // pred_check_branch
        %260 = sbr.rel (%p257) target = $region48
      $region47: #{tpu_custom_call.1} parent=5 // pred_region
        %s261 = ssub.s32 %s19, 1
        %s262 = sand.u32 %s32, 1
        %s263 = scalar_lea.sflag [#allocation4], %s262
        %s264 = sand.u32 %s32, 1
        %s265 = smul.addr %s264, 64
        %s266 = scalar_lea.vmem [#allocation3], %s265
        // Predicated region
        $region49: #{tpu_custom_call.1} parent=47 // pred_check
          %p267 = pneg %p45
        $region50: #{tpu_custom_call.1} parent=47 // pred_check_branch
          %269 = sbr.rel (%p267) target = $region52
        $region51: #{tpu_custom_call.1} parent=47 // pred_region
          %270 = dma.done %s263, 1024
        $region52: #{tpu_custom_call.1} parent=47 // pred_fallthru
          _
        %s271 = sand.u32 %s32, 1
        %s272 = scalar_lea.sflag [#allocation4], %s271
        %s273 = sand.u32 %s32, 1
        %s274 = smul.addr %s273, 64
        %s275 = scalar_lea.vmem [#allocation3], %s274
        %p276 = pneg %p45
        %p277 = pneg %p42
        %p278 = pneg %p66
        %p279 = pneg %p63
        %p280 = pneg %p87
        %p281 = pneg %p84
        %p282 = pneg %p108
        %p283 = pneg %p105
        %p284 = pneg %p129
        %p285 = pneg %p126
        %p286 = pneg %p150
        %p287 = pneg %p147
        %p288 = pneg %p171
        %p289 = pneg %p168
        %p290 = pneg %p197
        %p291 = pneg %p194
        %s292 = sand.u32 %s184, 1
        %s293 = scalar_lea.sflag [#allocation5], %s292
        %s294 = sand.u32 %s184, 1
        %s295 = smul.addr %s294, 4
        %s296 = scalar_lea.vmem [#allocation6], %s295
        %v297 = vld [vmem:[%s266] sm:$0xff]
        %v298 = vld [vmem:[%s266 + $0x8] sm:$0xff]
        %v299 = vld [vmem:[%s266 + $0x10] sm:$0xff]
        %v300 = vld [vmem:[%s266 + $0x18] sm:$0xff]
        %v301 = vld [vmem:[%s266 + $0x20] sm:$0xff]
        %v302 = vld [vmem:[%s266 + $0x28] sm:$0xff]
        %v303 = vld [vmem:[%s266 + $0x30] sm:$0xff]
        %v304 = vld [vmem:[%s266 + $0x38] sm:$0xff]
        %v305 = vmul.f32 %v297, %v297
        %v306 = vmul.f32 %v298, %v298
        %v307 = vmul.f32 %v299, %v299
        %v308 = vmul.f32 %v300, %v300
        %v309 = vmul.f32 %v301, %v301
        %v310 = vmul.f32 %v302, %v302
        %v311 = vmul.f32 %v303, %v303
        %v312 = vmul.f32 %v304, %v304
        %vm313 = vcmask 130048
        %v314 = vsel %vm313, %v305, 0.0
        %315 = vadd.xlane.f32.xlu0 %v314
        %v316 = vpop.xlane.xlu0 %315
        %v317 = vsel %vm313, %v306, 0.0
        %318 = vadd.xlane.f32.xlu0 %v317
        %v319 = vpop.xlane.xlu0 %318
        %v320 = vsel %vm313, %v307, 0.0
        %321 = vadd.xlane.f32.xlu0 %v320
        %v322 = vpop.xlane.xlu0 %321
        %v323 = vsel %vm313, %v308, 0.0
        %324 = vadd.xlane.f32.xlu0 %v323
        %v325 = vpop.xlane.xlu0 %324
        %v326 = vsel %vm313, %v309, 0.0
        %327 = vadd.xlane.f32.xlu0 %v326
        %v328 = vpop.xlane.xlu0 %327
        %v329 = vsel %vm313, %v310, 0.0
        %330 = vadd.xlane.f32.xlu0 %v329
        %v331 = vpop.xlane.xlu0 %330
        %v332 = vsel %vm313, %v311, 0.0
        %333 = vadd.xlane.f32.xlu0 %v332
        %v334 = vpop.xlane.xlu0 %333
        %v335 = vsel %vm313, %v312, 0.0
        %336 = vadd.xlane.f32.xlu0 %v335
        %v337 = vpop.xlane.xlu0 %336
        %v338 = vrcp.pop 16.0
        %v339 = vmul.f32 %v316, %v338
        %v340 = vmul.f32 %v319, %v338
        %v341 = vmul.f32 %v322, %v338
        %v342 = vmul.f32 %v325, %v338
        %v343 = vmul.f32 %v328, %v338
        %v344 = vmul.f32 %v331, %v338
        %v345 = vmul.f32 %v334, %v338
        %v346 = vmul.f32 %v337, %v338
        %v355 = vlaneseq
        %v356 = vand.u32 %v355, 127
        %v357 = vlaneseq
        %v358 = vshrl.u32 %v357, 7
        %v359 = vsub.s32 %v356, %v358
        %v360 = vrot.slane %v339, %v359
        %v361 = vadd.s32 %v356, 4294967288
        %v362 = vlaneseq
        %v363 = vshrl.u32 %v362, 7
        %v364 = vsub.s32 %v361, %v363
        %v365 = vrot.slane %v340, %v364
        %vm366 = vcmask 130112
        %v367 = vsel %vm366, %v365, %v360
        %v368 = vlaneseq
        %v369 = vshrl.u32 %v368, 7
        %v370 = vsub.s32 %v356, %v369
        %v371 = vrot.slane %v341, %v370
        %v372 = vlaneseq
        %v373 = vshrl.u32 %v372, 7
        %v374 = vsub.s32 %v361, %v373
        %v375 = vrot.slane %v342, %v374
        %v376 = vsel %vm366, %v375, %v371
        %v377 = vlaneseq
        %v378 = vshrl.u32 %v377, 7
        %v379 = vsub.s32 %v356, %v378
        %v380 = vrot.slane %v343, %v379
        %v381 = vlaneseq
        %v382 = vshrl.u32 %v381, 7
        %v383 = vsub.s32 %v361, %v382
        %v384 = vrot.slane %v344, %v383
        %v385 = vsel %vm366, %v384, %v380
        %v386 = vlaneseq
        %v387 = vshrl.u32 %v386, 7
        %v388 = vsub.s32 %v356, %v387
        %v389 = vrot.slane %v345, %v388
        %v390 = vlaneseq
        %v391 = vshrl.u32 %v390, 7
        %v392 = vsub.s32 %v361, %v391
        %v393 = vrot.slane %v346, %v392
        %v394 = vsel %vm366, %v393, %v389
        %vm395 = vcmask 1041409
        %v396 = vsel %vm395, %v376, %v367
        %vm397 = vcmask 1042434
        %v398 = vsel %vm397, %v385, %v396
        %vm399 = vcmask 1043459
        %v400 = vsel %vm399, %v394, %v398
        %402 = vxpose.xlu0.b32.start [1/16] %v400, 128
        %403 = vxpose.xlu0.b32.cont [2/16] 0.0, 128
        %404 = vxpose.xlu0.b32.cont [3/16] 0.0, 128
        %405 = vxpose.xlu0.b32.cont [4/16] 0.0, 128
        %406 = vxpose.xlu0.b32.cont [5/16] 0.0, 128
        %407 = vxpose.xlu0.b32.cont [6/16] 0.0, 128
        %408 = vxpose.xlu0.b32.cont [7/16] 0.0, 128
        %409 = vxpose.xlu0.b32.cont [8/16] 0.0, 128
        %410 = vxpose.xlu0.b32.cont [9/16] 0.0, 128
        %411 = vxpose.xlu0.b32.cont [10/16] 0.0, 128
        %412 = vxpose.xlu0.b32.cont [11/16] 0.0, 128
        %413 = vxpose.xlu0.b32.cont [12/16] 0.0, 128
        %414 = vxpose.xlu0.b32.cont [13/16] 0.0, 128
        %415 = vxpose.xlu0.b32.cont [14/16] 0.0, 128
        %416 = vxpose.xlu0.b32.cont [15/16] 0.0, 128
        %417 = vxpose.xlu0.b32.end [16/16] 0.0, 128
        %v418 = vpop.trf.xlu0
        %v419 = vpop.trf.xlu0
        %v420 = vpop.trf.xlu0
        %v421 = vpop.trf.xlu0
        %v422 = vpop.trf.xlu0
        %v423 = vpop.trf.xlu0
        %v424 = vpop.trf.xlu0
        %v425 = vpop.trf.xlu0
        %v426 = vpop.trf.xlu0
        %v427 = vpop.trf.xlu0
        %v428 = vpop.trf.xlu0
        %v429 = vpop.trf.xlu0
        %v430 = vpop.trf.xlu0
        %v431 = vpop.trf.xlu0
        %v432 = vpop.trf.xlu0
        %v433 = vpop.trf.xlu0
        %v434 = vld [vmem:[%s1] sm:$0xf]
        %v435 = vld [vmem:[%s3] sm:$0x1]
        %v437 = vlaneseq
        %v438 = vshrl.u32 %v437, 7
        %v439 = vsub.s32 0, %v438
        %v440 = vrot.slane %v435, %v439
        %vm442 = vcmask 31744
        %v444 = vsel %vm442, %v418, 0
        %v447 = vsel %vm442, %v419, 0
        %vm449 = vcmask 1043456
        %v451 = vsel %vm449, %v434, 0
        %453 = vmatprep.subr.mxu0 0.0
        %454 = vmatpush1.msra.mxu0 %v451
        %455 = vmatprep.subr.mxu0 0.0
        %456 = vmatpush1.msra.mxu0 0.0
        %457 = vmatprep.subr.mxu0 0.0
        %458 = vmatpush1.msra.mxu0 0.0
        %459 = vmatprep.subr.mxu0 0.0
        %460 = vmatpush1.msra.mxu0 0.0
        %461 = vmatprep.subr.mxu0 0.0
        %462 = vmatpush1.msra.mxu0 0.0
        %463 = vmatprep.subr.mxu0 0.0
        %464 = vmatpush1.msra.mxu0 0.0
        %465 = vmatprep.subr.mxu0 0.0
        %466 = vmatpush1.msra.mxu0 0.0
        %467 = vmatprep.subr.mxu0 0.0
        %468 = vmatpush1.msra.mxu0 0.0
        %469 = vmatprep.subr.mxu0 0.0
        %470 = vmatpush1.msra.mxu0 0.0
        %471 = vmatprep.subr.mxu0 0.0
        %472 = vmatpush1.msra.mxu0 0.0
        %473 = vmatprep.subr.mxu0 0.0
        %474 = vmatpush1.msra.mxu0 0.0
        %475 = vmatprep.subr.mxu0 0.0
        %476 = vmatpush1.msra.mxu0 0.0
        %477 = vmatprep.subr.mxu0 0.0
        %478 = vmatpush1.msra.mxu0 0.0
        %479 = vmatprep.subr.mxu0 0.0
        %480 = vmatpush1.msra.mxu0 0.0
        %481 = vmatprep.subr.mxu0 0.0
        %482 = vmatpush1.msra.mxu0 0.0
        %483 = vmatprep.subr.mxu0 0.0
        %484 = vmatpush1.msra.mxu0 0.0
        %485 = vmatprep.subr.mxu0 0.0
        %486 = vmatpush1.msra.mxu0 0.0
        %487 = vmatprep.subr.mxu0 0.0
        %488 = vmatpush1.msra.mxu0 0.0
        %489 = vmatprep.subr.mxu0 0.0
        %490 = vmatpush1.msra.mxu0 0.0
        %491 = vmatprep.subr.mxu0 0.0
        %492 = vmatpush1.msra.mxu0 0.0
        %493 = vmatprep.subr.mxu0 0.0
        %494 = vmatpush1.msra.mxu0 0.0
        %495 = vmatprep.subr.mxu0 0.0
        %496 = vmatpush1.msra.mxu0 0.0
        %497 = vmatprep.subr.mxu0 0.0
        %498 = vmatpush1.msra.mxu0 0.0
        %499 = vmatprep.subr.mxu0 0.0
        %500 = vmatpush1.msra.mxu0 0.0
        %501 = vmatprep.subr.mxu0 0.0
        %502 = vmatpush1.msra.mxu0 0.0
        %503 = vmatprep.subr.mxu0 0.0
        %504 = vmatpush1.msra.mxu0 0.0
        %505 = vmatprep.subr.mxu0 0.0
        %506 = vmatpush1.msra.mxu0 0.0
        %507 = vmatprep.subr.mxu0 0.0
        %508 = vmatpush1.msra.mxu0 0.0
        %509 = vmatprep.subr.mxu0 0.0
        %510 = vmatpush1.msra.mxu0 0.0
        %511 = vmatprep.subr.mxu0 0.0
        %512 = vmatpush1.msra.mxu0 0.0
        %513 = vmatprep.subr.mxu0 0.0
        %514 = vmatpush1.msra.mxu0 0.0
        %515 = vmatprep.subr.mxu0 0.0
        %516 = vmatpush1.msra.mxu0 0.0
        %517 = vmatprep.mubr.f32.mxu0 0.0
        %518 = vmatmul.mubr.f32.gmra.mrb[0].mxu0 %v444
        %v519 = vpop.f32.mrb[0].mxu0
        %v520 = vadd.f32 %v440, %v519
        %v521 = vpop.f32.mrb[0].mxu0
        %522 = vmatprep.mubr.f32.mxu0 0.0
        %523 = vmatmul.mubr.f32.gmra.mrb[0].mxu0 %v447
        %v524 = vpop.f32.mrb[0].mxu0
        %v525 = vadd.f32 %v440, %v524
        %v526 = vpop.f32.mrb[0].mxu0
        %527 = vdwg.mxu0
        %v528 = vld [vmem:[%s2] sm:$0xff]
        %v529 = vld [vmem:[%s4] sm:$0x1]
        %vm530 = vcmask 64512
        %v532 = vsel %vm530, 0.0, 0
        %534 = vmatprep.subr.mxu0 0.0
        %535 = vmatpush1.msra.mxu0 %v528
        %536 = vmatprep.subr.mxu0 0.0
        %537 = vmatpush1.msra.mxu0 0.0
        %538 = vmatprep.subr.mxu0 0.0
        %539 = vmatpush1.msra.mxu0 0.0
        %540 = vmatprep.subr.mxu0 0.0
        %541 = vmatpush1.msra.mxu0 0.0
        %542 = vmatprep.subr.mxu0 0.0
        %543 = vmatpush1.msra.mxu0 0.0
        %544 = vmatprep.subr.mxu0 0.0
        %545 = vmatpush1.msra.mxu0 0.0
        %546 = vmatprep.subr.mxu0 0.0
        %547 = vmatpush1.msra.mxu0 0.0
        %548 = vmatprep.subr.mxu0 0.0
        %549 = vmatpush1.msra.mxu0 0.0
        %550 = vmatprep.subr.mxu0 0.0
        %551 = vmatpush1.msra.mxu0 0.0
        %552 = vmatprep.subr.mxu0 0.0
        %553 = vmatpush1.msra.mxu0 0.0
        %554 = vmatprep.subr.mxu0 0.0
        %555 = vmatpush1.msra.mxu0 0.0
        %556 = vmatprep.subr.mxu0 0.0
        %557 = vmatpush1.msra.mxu0 0.0
        %558 = vmatprep.subr.mxu0 0.0
        %559 = vmatpush1.msra.mxu0 0.0
        %560 = vmatprep.subr.mxu0 0.0
        %561 = vmatpush1.msra.mxu0 0.0
        %562 = vmatprep.subr.mxu0 0.0
        %563 = vmatpush1.msra.mxu0 0.0
        %564 = vmatprep.subr.mxu0 0.0
        %565 = vmatpush1.msra.mxu0 0.0
        %566 = vmatprep.subr.mxu0 0.0
        %567 = vmatpush1.msra.mxu0 0.0
        %568 = vmatprep.subr.mxu0 0.0
        %569 = vmatpush1.msra.mxu0 0.0
        %570 = vmatprep.subr.mxu0 0.0
        %571 = vmatpush1.msra.mxu0 0.0
        %572 = vmatprep.subr.mxu0 0.0
        %573 = vmatpush1.msra.mxu0 0.0
        %574 = vmatprep.subr.mxu0 0.0
        %575 = vmatpush1.msra.mxu0 0.0
        %576 = vmatprep.subr.mxu0 0.0
        %577 = vmatpush1.msra.mxu0 0.0
        %578 = vmatprep.subr.mxu0 0.0
        %579 = vmatpush1.msra.mxu0 0.0
        %580 = vmatprep.subr.mxu0 0.0
        %581 = vmatpush1.msra.mxu0 0.0
        %582 = vmatprep.subr.mxu0 0.0
        %583 = vmatpush1.msra.mxu0 0.0
        %584 = vmatprep.subr.mxu0 0.0
        %585 = vmatpush1.msra.mxu0 0.0
        %586 = vmatprep.subr.mxu0 0.0
        %587 = vmatpush1.msra.mxu0 0.0
        %588 = vmatprep.subr.mxu0 0.0
        %589 = vmatpush1.msra.mxu0 0.0
        %590 = vmatprep.subr.mxu0 0.0
        %591 = vmatpush1.msra.mxu0 0.0
        %592 = vmatprep.subr.mxu0 0.0
        %593 = vmatpush1.msra.mxu0 0.0
        %594 = vmatprep.subr.mxu0 0.0
        %595 = vmatpush1.msra.mxu0 0.0
        %596 = vmatprep.subr.mxu0 0.0
        %597 = vmatpush1.msra.mxu0 0.0
        %598 = vmatprep.mubr.f32.mxu0 0.0
        %599 = vmatmul.mubr.f32.gmra.mrb[0].mxu0 %v532
        %v600 = vpop.f32.mrb[0].mxu0
        %v601 = vadd.f32 0.0, %v600
        %v602 = vpop.f32.mrb[0].mxu0
        %603 = vdwg.mxu0
        %v604 = vadd.f32 %v520, %v601
        %v605 = vxor.u32 %v604, 2147483648
        %v606 = vmul.f32 %v605, 1.442695
        %v607 = vpow.pop %v606
        %v608 = vadd.f32 %v607, 1.0
        %v609 = vrcp.pop %v608
        %v610 = vmul.f32 1.0, %v609
        %v612 = vlaneseq
        %v613 = vshrl.u32 %v612, 7
        %v614 = vsub.s32 0, %v613
        %v615 = vrot.slane %v529, %v614
        %616 = vrot.lane.b32.xlu0 %v615, 16
        %v617 = vpop.permute.xlu0 %616
        %v619 = vadd.f32 %v601, %v617
        %621 = vrot.lane.b32.xlu0 %v619, 112
        %v622 = vpop.permute.xlu0 %621
        %v624 = vmul.f32 %v610, %v622
        %626 = vrot.lane.b32.xlu0 %v624, 16
        %v627 = vpop.permute.xlu0 %626
        %v629 = vadd.f32 %v520, %v627
        %v630 = vtanh.pop %v629
        %v631 = vsub.f32 1.0, %v610
        %633 = vrot.lane.b32.xlu0 %v630, 120
        %v634 = vpop.permute.xlu0 %633
        %v636 = vmul.f32 %v631, %v634
        %v637 = vmul.f32 %v610, 0.0
        %v638 = vadd.f32 %v636, %v637
        %640 = vrot.lane.b32.xlu0 %v638, 120
        %v641 = vpop.permute.xlu0 %640
        %vm643 = vcmask 57344
        %644 = vst.msk [vmem:[#allocation2] sm:$0x1] %vm643, %v641
        %v645 = vsel %vm530, %v641, 0
        %647 = vmatprep.subr.mxu0 0.0
        %648 = vmatpush1.msra.mxu0 %v528
        %649 = vmatprep.subr.mxu0 0.0
        %650 = vmatpush1.msra.mxu0 0.0
        %651 = vmatprep.subr.mxu0 0.0
        %652 = vmatpush1.msra.mxu0 0.0
        %653 = vmatprep.subr.mxu0 0.0
        %654 = vmatpush1.msra.mxu0 0.0
        %655 = vmatprep.subr.mxu0 0.0
        %656 = vmatpush1.msra.mxu0 0.0
        %657 = vmatprep.subr.mxu0 0.0
        %658 = vmatpush1.msra.mxu0 0.0
        %659 = vmatprep.subr.mxu0 0.0
        %660 = vmatpush1.msra.mxu0 0.0
        %661 = vmatprep.subr.mxu0 0.0
        %662 = vmatpush1.msra.mxu0 0.0
        %663 = vmatprep.subr.mxu0 0.0
        %664 = vmatpush1.msra.mxu0 0.0
        %665 = vmatprep.subr.mxu0 0.0
        %666 = vmatpush1.msra.mxu0 0.0
        %667 = vmatprep.subr.mxu0 0.0
        %668 = vmatpush1.msra.mxu0 0.0
        %669 = vmatprep.subr.mxu0 0.0
        %670 = vmatpush1.msra.mxu0 0.0
        %671 = vmatprep.subr.mxu0 0.0
        %672 = vmatpush1.msra.mxu0 0.0
        %673 = vmatprep.subr.mxu0 0.0
        %674 = vmatpush1.msra.mxu0 0.0
        %675 = vmatprep.subr.mxu0 0.0
        %676 = vmatpush1.msra.mxu0 0.0
        %677 = vmatprep.subr.mxu0 0.0
        %678 = vmatpush1.msra.mxu0 0.0
        %679 = vmatprep.subr.mxu0 0.0
        %680 = vmatpush1.msra.mxu0 0.0
        %681 = vmatprep.subr.mxu0 0.0
        %682 = vmatpush1.msra.mxu0 0.0
        %683 = vmatprep.subr.mxu0 0.0
        %684 = vmatpush1.msra.mxu0 0.0
        %685 = vmatprep.subr.mxu0 0.0
        %686 = vmatpush1.msra.mxu0 0.0
        %687 = vmatprep.subr.mxu0 0.0
        %688 = vmatpush1.msra.mxu0 0.0
        %689 = vmatprep.subr.mxu0 0.0
        %690 = vmatpush1.msra.mxu0 0.0
        %691 = vmatprep.subr.mxu0 0.0
        %692 = vmatpush1.msra.mxu0 0.0
        %693 = vmatprep.subr.mxu0 0.0
        %694 = vmatpush1.msra.mxu0 0.0
        %695 = vmatprep.subr.mxu0 0.0
        %696 = vmatpush1.msra.mxu0 0.0
        %697 = vmatprep.subr.mxu0 0.0
        %698 = vmatpush1.msra.mxu0 0.0
        %699 = vmatprep.subr.mxu0 0.0
        %700 = vmatpush1.msra.mxu0 0.0
        %701 = vmatprep.subr.mxu0 0.0
        %702 = vmatpush1.msra.mxu0 0.0
        %703 = vmatprep.subr.mxu0 0.0
        %704 = vmatpush1.msra.mxu0 0.0
        %705 = vmatprep.subr.mxu0 0.0
        %706 = vmatpush1.msra.mxu0 0.0
        %707 = vmatprep.subr.mxu0 0.0
        %708 = vmatpush1.msra.mxu0 0.0
        %709 = vmatprep.subr.mxu0 0.0
        %710 = vmatpush1.msra.mxu0 0.0
        %711 = vmatprep.mubr.f32.mxu0 0.0
        %712 = vmatmul.mubr.f32.gmra.mrb[0].mxu0 %v645
        %v713 = vpop.f32.mrb[0].mxu0
        %v714 = vadd.f32 0.0, %v713
        %v715 = vpop.f32.mrb[0].mxu0
        %716 = vdwg.mxu0
        %v718 = vrot.slane %v714, 7
        %v720 = vadd.f32 %v520, %v718
        %v721 = vxor.u32 %v720, 2147483648
        %v722 = vmul.f32 %v721, 1.442695
        %v723 = vpow.pop %v722
        %v724 = vadd.f32 %v723, 1.0
        %v725 = vrcp.pop %v724
        %v726 = vmul.f32 1.0, %v725
        %v727 = vadd.f32 %v714, %v617
        %v729 = vrot.slane %v727, 7
        %730 = vrot.lane.b32.xlu0 %v729, 112
        %v731 = vpop.permute.xlu0 %730
        %v733 = vmul.f32 %v726, %v731
        %735 = vrot.lane.b32.xlu0 %v733, 16
        %v736 = vpop.permute.xlu0 %735
        %v738 = vadd.f32 %v520, %v736
        %v739 = vtanh.pop %v738
        %v740 = vsub.f32 1.0, %v726
        %742 = vrot.lane.b32.xlu0 %v739, 120
        %v743 = vpop.permute.xlu0 %742
        %v745 = vmul.f32 %v740, %v743
        %v746 = vrot.slane %v638, 7
        %v748 = vmul.f32 %v726, %v746
        %v749 = vadd.f32 %v745, %v748
        %751 = vrot.lane.b32.xlu0 %v749, 120
        %v752 = vpop.permute.xlu0 %751
        %vm754 = vcmask 58369
        %755 = vst.msk [vmem:[#allocation2] sm:$0x2] %vm754, %v752
        %v756 = vrot.slane %v749, 1
        %757 = vrot.lane.b32.xlu0 %v756, 120
        %v758 = vpop.permute.xlu0 %757
        %v759 = vsel %vm530, %v758, 0
        %761 = vmatprep.subr.mxu0 0.0
        %762 = vmatpush1.msra.mxu0 %v528
        %763 = vmatprep.subr.mxu0 0.0
        %764 = vmatpush1.msra.mxu0 0.0
        %765 = vmatprep.subr.mxu0 0.0
        %766 = vmatpush1.msra.mxu0 0.0
        %767 = vmatprep.subr.mxu0 0.0
        %768 = vmatpush1.msra.mxu0 0.0
        %769 = vmatprep.subr.mxu0 0.0
        %770 = vmatpush1.msra.mxu0 0.0
        %771 = vmatprep.subr.mxu0 0.0
        %772 = vmatpush1.msra.mxu0 0.0
        %773 = vmatprep.subr.mxu0 0.0
        %774 = vmatpush1.msra.mxu0 0.0
        %775 = vmatprep.subr.mxu0 0.0
        %776 = vmatpush1.msra.mxu0 0.0
        %777 = vmatprep.subr.mxu0 0.0
        %778 = vmatpush1.msra.mxu0 0.0
        %779 = vmatprep.subr.mxu0 0.0
        %780 = vmatpush1.msra.mxu0 0.0
        %781 = vmatprep.subr.mxu0 0.0
        %782 = vmatpush1.msra.mxu0 0.0
        %783 = vmatprep.subr.mxu0 0.0
        %784 = vmatpush1.msra.mxu0 0.0
        %785 = vmatprep.subr.mxu0 0.0
        %786 = vmatpush1.msra.mxu0 0.0
        %787 = vmatprep.subr.mxu0 0.0
        %788 = vmatpush1.msra.mxu0 0.0
        %789 = vmatprep.subr.mxu0 0.0
        %790 = vmatpush1.msra.mxu0 0.0
        %791 = vmatprep.subr.mxu0 0.0
        %792 = vmatpush1.msra.mxu0 0.0
        %793 = vmatprep.subr.mxu0 0.0
        %794 = vmatpush1.msra.mxu0 0.0
        %795 = vmatprep.subr.mxu0 0.0
        %796 = vmatpush1.msra.mxu0 0.0
        %797 = vmatprep.subr.mxu0 0.0
        %798 = vmatpush1.msra.mxu0 0.0
        %799 = vmatprep.subr.mxu0 0.0
        %800 = vmatpush1.msra.mxu0 0.0
        %801 = vmatprep.subr.mxu0 0.0
        %802 = vmatpush1.msra.mxu0 0.0
        %803 = vmatprep.subr.mxu0 0.0
        %804 = vmatpush1.msra.mxu0 0.0
        %805 = vmatprep.subr.mxu0 0.0
        %806 = vmatpush1.msra.mxu0 0.0
        %807 = vmatprep.subr.mxu0 0.0
        %808 = vmatpush1.msra.mxu0 0.0
        %809 = vmatprep.subr.mxu0 0.0
        %810 = vmatpush1.msra.mxu0 0.0
        %811 = vmatprep.subr.mxu0 0.0
        %812 = vmatpush1.msra.mxu0 0.0
        %813 = vmatprep.subr.mxu0 0.0
        %814 = vmatpush1.msra.mxu0 0.0
        %815 = vmatprep.subr.mxu0 0.0
        %816 = vmatpush1.msra.mxu0 0.0
        %817 = vmatprep.subr.mxu0 0.0
        %818 = vmatpush1.msra.mxu0 0.0
        %819 = vmatprep.subr.mxu0 0.0
        %820 = vmatpush1.msra.mxu0 0.0
        %821 = vmatprep.subr.mxu0 0.0
        %822 = vmatpush1.msra.mxu0 0.0
        %823 = vmatprep.subr.mxu0 0.0
        %824 = vmatpush1.msra.mxu0 0.0
        %825 = vmatprep.mubr.f32.mxu0 0.0
        %826 = vmatmul.mubr.f32.gmra.mrb[0].mxu0 %v759
        %v827 = vpop.f32.mrb[0].mxu0
        %v828 = vadd.f32 0.0, %v827
        %v829 = vpop.f32.mrb[0].mxu0
        %830 = vdwg.mxu0
        %v832 = vrot.slane %v828, 6
        %v834 = vadd.f32 %v520, %v832
        %v835 = vxor.u32 %v834, 2147483648
        %v836 = vmul.f32 %v835, 1.442695
        %v837 = vpow.pop %v836
        %v838 = vadd.f32 %v837, 1.0
        %v839 = vrcp.pop %v838
        %v840 = vmul.f32 1.0, %v839
        %v841 = vadd.f32 %v828, %v617
        %v843 = vrot.slane %v841, 6
        %844 = vrot.lane.b32.xlu0 %v843, 112
        %v845 = vpop.permute.xlu0 %844
        %v847 = vmul.f32 %v840, %v845
        %849 = vrot.lane.b32.xlu0 %v847, 16
        %v850 = vpop.permute.xlu0 %849
        %v852 = vadd.f32 %v520, %v850
        %v853 = vtanh.pop %v852
        %v854 = vsub.f32 1.0, %v840
        %856 = vrot.lane.b32.xlu0 %v853, 120
        %v857 = vpop.permute.xlu0 %856
        %v859 = vmul.f32 %v854, %v857
        %v860 = vrot.slane %v749, 7
        %v862 = vmul.f32 %v840, %v860
        %v863 = vadd.f32 %v859, %v862
        %865 = vrot.lane.b32.xlu0 %v863, 120
        %v866 = vpop.permute.xlu0 %865
        %vm868 = vcmask 59394
        %869 = vst.msk [vmem:[#allocation2] sm:$0x4] %vm868, %v866
        %v870 = vrot.slane %v863, 2
        %871 = vrot.lane.b32.xlu0 %v870, 120
        %v872 = vpop.permute.xlu0 %871
        %v873 = vsel %vm530, %v872, 0
        %875 = vmatprep.subr.mxu0 0.0
        %876 = vmatpush1.msra.mxu0 %v528
        %877 = vmatprep.subr.mxu0 0.0
        %878 = vmatpush1.msra.mxu0 0.0
        %879 = vmatprep.subr.mxu0 0.0
        %880 = vmatpush1.msra.mxu0 0.0
        %881 = vmatprep.subr.mxu0 0.0
        %882 = vmatpush1.msra.mxu0 0.0
        %883 = vmatprep.subr.mxu0 0.0
        %884 = vmatpush1.msra.mxu0 0.0
        %885 = vmatprep.subr.mxu0 0.0
        %886 = vmatpush1.msra.mxu0 0.0
        %887 = vmatprep.subr.mxu0 0.0
        %888 = vmatpush1.msra.mxu0 0.0
        %889 = vmatprep.subr.mxu0 0.0
        %890 = vmatpush1.msra.mxu0 0.0
        %891 = vmatprep.subr.mxu0 0.0
        %892 = vmatpush1.msra.mxu0 0.0
        %893 = vmatprep.subr.mxu0 0.0
        %894 = vmatpush1.msra.mxu0 0.0
        %895 = vmatprep.subr.mxu0 0.0
        %896 = vmatpush1.msra.mxu0 0.0
        %897 = vmatprep.subr.mxu0 0.0
        %898 = vmatpush1.msra.mxu0 0.0
        %899 = vmatprep.subr.mxu0 0.0
        %900 = vmatpush1.msra.mxu0 0.0
        %901 = vmatprep.subr.mxu0 0.0
        %902 = vmatpush1.msra.mxu0 0.0
        %903 = vmatprep.subr.mxu0 0.0
        %904 = vmatpush1.msra.mxu0 0.0
        %905 = vmatprep.subr.mxu0 0.0
        %906 = vmatpush1.msra.mxu0 0.0
        %907 = vmatprep.subr.mxu0 0.0
        %908 = vmatpush1.msra.mxu0 0.0
        %909 = vmatprep.subr.mxu0 0.0
        %910 = vmatpush1.msra.mxu0 0.0
        %911 = vmatprep.subr.mxu0 0.0
        %912 = vmatpush1.msra.mxu0 0.0
        %913 = vmatprep.subr.mxu0 0.0
        %914 = vmatpush1.msra.mxu0 0.0
        %915 = vmatprep.subr.mxu0 0.0
        %916 = vmatpush1.msra.mxu0 0.0
        %917 = vmatprep.subr.mxu0 0.0
        %918 = vmatpush1.msra.mxu0 0.0
        %919 = vmatprep.subr.mxu0 0.0
        %920 = vmatpush1.msra.mxu0 0.0
        %921 = vmatprep.subr.mxu0 0.0
        %922 = vmatpush1.msra.mxu0 0.0
        %923 = vmatprep.subr.mxu0 0.0
        %924 = vmatpush1.msra.mxu0 0.0
        %925 = vmatprep.subr.mxu0 0.0
        %926 = vmatpush1.msra.mxu0 0.0
        %927 = vmatprep.subr.mxu0 0.0
        %928 = vmatpush1.msra.mxu0 0.0
        %929 = vmatprep.subr.mxu0 0.0
        %930 = vmatpush1.msra.mxu0 0.0
        %931 = vmatprep.subr.mxu0 0.0
        %932 = vmatpush1.msra.mxu0 0.0
        %933 = vmatprep.subr.mxu0 0.0
        %934 = vmatpush1.msra.mxu0 0.0
        %935 = vmatprep.subr.mxu0 0.0
        %936 = vmatpush1.msra.mxu0 0.0
        %937 = vmatprep.subr.mxu0 0.0
        %938 = vmatpush1.msra.mxu0 0.0
        %939 = vmatprep.mubr.f32.mxu0 0.0
        %940 = vmatmul.mubr.f32.gmra.mrb[0].mxu0 %v873
        %v941 = vpop.f32.mrb[0].mxu0
        %v942 = vadd.f32 0.0, %v941
        %v943 = vpop.f32.mrb[0].mxu0
        %944 = vdwg.mxu0
        %v946 = vrot.slane %v942, 5
        %v948 = vadd.f32 %v520, %v946
        %v949 = vxor.u32 %v948, 2147483648
        %v950 = vmul.f32 %v949, 1.442695
        %v951 = vpow.pop %v950
        %v952 = vadd.f32 %v951, 1.0
        %v953 = vrcp.pop %v952
        %v954 = vmul.f32 1.0, %v953
        %v955 = vadd.f32 %v942, %v617
        %v957 = vrot.slane %v955, 5
        %958 = vrot.lane.b32.xlu0 %v957, 112
        %v959 = vpop.permute.xlu0 %958
        %v961 = vmul.f32 %v954, %v959
        %963 = vrot.lane.b32.xlu0 %v961, 16
        %v964 = vpop.permute.xlu0 %963
        %v966 = vadd.f32 %v520, %v964
        %v967 = vtanh.pop %v966
        %v968 = vsub.f32 1.0, %v954
        %970 = vrot.lane.b32.xlu0 %v967, 120
        %v971 = vpop.permute.xlu0 %970
        %v973 = vmul.f32 %v968, %v971
        %v974 = vrot.slane %v863, 7
        %v976 = vmul.f32 %v954, %v974
        %v977 = vadd.f32 %v973, %v976
        %979 = vrot.lane.b32.xlu0 %v977, 120
        %v980 = vpop.permute.xlu0 %979
        %vm982 = vcmask 60419
        %983 = vst.msk [vmem:[#allocation2] sm:$0x8] %vm982, %v980
        %v984 = vrot.slane %v977, 3
        %985 = vrot.lane.b32.xlu0 %v984, 120
        %v986 = vpop.permute.xlu0 %985
        %v987 = vsel %vm530, %v986, 0
        %989 = vmatprep.subr.mxu0 0.0
        %990 = vmatpush1.msra.mxu0 %v528
        %991 = vmatprep.subr.mxu0 0.0
        %992 = vmatpush1.msra.mxu0 0.0
        %993 = vmatprep.subr.mxu0 0.0
        %994 = vmatpush1.msra.mxu0 0.0
        %995 = vmatprep.subr.mxu0 0.0
        %996 = vmatpush1.msra.mxu0 0.0
        %997 = vmatprep.subr.mxu0 0.0
        %998 = vmatpush1.msra.mxu0 0.0
        %999 = vmatprep.subr.mxu0 0.0
        %1000 = vmatpush1.msra.mxu0 0.0
        %1001 = vmatprep.subr.mxu0 0.0
        %1002 = vmatpush1.msra.mxu0 0.0
        %1003 = vmatprep.subr.mxu0 0.0
        %1004 = vmatpush1.msra.mxu0 0.0
        %1005 = vmatprep.subr.mxu0 0.0
        %1006 = vmatpush1.msra.mxu0 0.0
        %1007 = vmatprep.subr.mxu0 0.0
        %1008 = vmatpush1.msra.mxu0 0.0
        %1009 = vmatprep.subr.mxu0 0.0
        %1010 = vmatpush1.msra.mxu0 0.0
        %1011 = vmatprep.subr.mxu0 0.0
        %1012 = vmatpush1.msra.mxu0 0.0
        %1013 = vmatprep.subr.mxu0 0.0
        %1014 = vmatpush1.msra.mxu0 0.0
        %1015 = vmatprep.subr.mxu0 0.0
        %1016 = vmatpush1.msra.mxu0 0.0
        %1017 = vmatprep.subr.mxu0 0.0
        %1018 = vmatpush1.msra.mxu0 0.0
        %1019 = vmatprep.subr.mxu0 0.0
        %1020 = vmatpush1.msra.mxu0 0.0
        %1021 = vmatprep.subr.mxu0 0.0
        %1022 = vmatpush1.msra.mxu0 0.0
        %1023 = vmatprep.subr.mxu0 0.0
        %1024 = vmatpush1.msra.mxu0 0.0
        %1025 = vmatprep.subr.mxu0 0.0
        %1026 = vmatpush1.msra.mxu0 0.0
        %1027 = vmatprep.subr.mxu0 0.0
        %1028 = vmatpush1.msra.mxu0 0.0
        %1029 = vmatprep.subr.mxu0 0.0
        %1030 = vmatpush1.msra.mxu0 0.0
        %1031 = vmatprep.subr.mxu0 0.0
        %1032 = vmatpush1.msra.mxu0 0.0
        %1033 = vmatprep.subr.mxu0 0.0
        %1034 = vmatpush1.msra.mxu0 0.0
        %1035 = vmatprep.subr.mxu0 0.0
        %1036 = vmatpush1.msra.mxu0 0.0
        %1037 = vmatprep.subr.mxu0 0.0
        %1038 = vmatpush1.msra.mxu0 0.0
        %1039 = vmatprep.subr.mxu0 0.0
        %1040 = vmatpush1.msra.mxu0 0.0
        %1041 = vmatprep.subr.mxu0 0.0
        %1042 = vmatpush1.msra.mxu0 0.0
        %1043 = vmatprep.subr.mxu0 0.0
        %1044 = vmatpush1.msra.mxu0 0.0
        %1045 = vmatprep.subr.mxu0 0.0
        %1046 = vmatpush1.msra.mxu0 0.0
        %1047 = vmatprep.subr.mxu0 0.0
        %1048 = vmatpush1.msra.mxu0 0.0
        %1049 = vmatprep.subr.mxu0 0.0
        %1050 = vmatpush1.msra.mxu0 0.0
        %1051 = vmatprep.subr.mxu0 0.0
        %1052 = vmatpush1.msra.mxu0 0.0
        %1053 = vmatprep.mubr.f32.mxu0 0.0
        %1054 = vmatmul.mubr.f32.gmra.mrb[0].mxu0 %v987
        %v1055 = vpop.f32.mrb[0].mxu0
        %v1056 = vadd.f32 0.0, %v1055
        %v1057 = vpop.f32.mrb[0].mxu0
        %1058 = vdwg.mxu0
        %v1060 = vrot.slane %v1056, 4
        %v1062 = vadd.f32 %v520, %v1060
        %v1063 = vxor.u32 %v1062, 2147483648
        %v1064 = vmul.f32 %v1063, 1.442695
        %v1065 = vpow.pop %v1064
        %v1066 = vadd.f32 %v1065, 1.0
        %v1067 = vrcp.pop %v1066
        %v1068 = vmul.f32 1.0, %v1067
        %v1069 = vadd.f32 %v1056, %v617
        %v1071 = vrot.slane %v1069, 4
        %1072 = vrot.lane.b32.xlu0 %v1071, 112
        %v1073 = vpop.permute.xlu0 %1072
        %v1075 = vmul.f32 %v1068, %v1073
        %1077 = vrot.lane.b32.xlu0 %v1075, 16
        %v1078 = vpop.permute.xlu0 %1077
        %v1080 = vadd.f32 %v520, %v1078
        %v1081 = vtanh.pop %v1080
        %v1082 = vsub.f32 1.0, %v1068
        %1084 = vrot.lane.b32.xlu0 %v1081, 120
        %v1085 = vpop.permute.xlu0 %1084
        %v1087 = vmul.f32 %v1082, %v1085
        %v1088 = vrot.slane %v977, 7
        %v1090 = vmul.f32 %v1068, %v1088
        %v1091 = vadd.f32 %v1087, %v1090
        %1093 = vrot.lane.b32.xlu0 %v1091, 120
        %v1094 = vpop.permute.xlu0 %1093
        %vm1096 = vcmask 61444
        %1097 = vst.msk [vmem:[#allocation2] sm:$0x10] %vm1096, %v1094
        %v1098 = vrot.slane %v1091, 4
        %1099 = vrot.lane.b32.xlu0 %v1098, 120
        %v1100 = vpop.permute.xlu0 %1099
        %v1101 = vsel %vm530, %v1100, 0
        %1103 = vmatprep.subr.mxu0 0.0
        %1104 = vmatpush1.msra.mxu0 %v528
        %1105 = vmatprep.subr.mxu0 0.0
        %1106 = vmatpush1.msra.mxu0 0.0
        %1107 = vmatprep.subr.mxu0 0.0
        %1108 = vmatpush1.msra.mxu0 0.0
        %1109 = vmatprep.subr.mxu0 0.0
        %1110 = vmatpush1.msra.mxu0 0.0
        %1111 = vmatprep.subr.mxu0 0.0
        %1112 = vmatpush1.msra.mxu0 0.0
        %1113 = vmatprep.subr.mxu0 0.0
        %1114 = vmatpush1.msra.mxu0 0.0
        %1115 = vmatprep.subr.mxu0 0.0
        %1116 = vmatpush1.msra.mxu0 0.0
        %1117 = vmatprep.subr.mxu0 0.0
        %1118 = vmatpush1.msra.mxu0 0.0
        %1119 = vmatprep.subr.mxu0 0.0
        %1120 = vmatpush1.msra.mxu0 0.0
        %1121 = vmatprep.subr.mxu0 0.0
        %1122 = vmatpush1.msra.mxu0 0.0
        %1123 = vmatprep.subr.mxu0 0.0
        %1124 = vmatpush1.msra.mxu0 0.0
        %1125 = vmatprep.subr.mxu0 0.0
        %1126 = vmatpush1.msra.mxu0 0.0
        %1127 = vmatprep.subr.mxu0 0.0
        %1128 = vmatpush1.msra.mxu0 0.0
        %1129 = vmatprep.subr.mxu0 0.0
        %1130 = vmatpush1.msra.mxu0 0.0
        %1131 = vmatprep.subr.mxu0 0.0
        %1132 = vmatpush1.msra.mxu0 0.0
        %1133 = vmatprep.subr.mxu0 0.0
        %1134 = vmatpush1.msra.mxu0 0.0
        %1135 = vmatprep.subr.mxu0 0.0
        %1136 = vmatpush1.msra.mxu0 0.0
        %1137 = vmatprep.subr.mxu0 0.0
        %1138 = vmatpush1.msra.mxu0 0.0
        %1139 = vmatprep.subr.mxu0 0.0
        %1140 = vmatpush1.msra.mxu0 0.0
        %1141 = vmatprep.subr.mxu0 0.0
        %1142 = vmatpush1.msra.mxu0 0.0
        %1143 = vmatprep.subr.mxu0 0.0
        %1144 = vmatpush1.msra.mxu0 0.0
        %1145 = vmatprep.subr.mxu0 0.0
        %1146 = vmatpush1.msra.mxu0 0.0
        %1147 = vmatprep.subr.mxu0 0.0
        %1148 = vmatpush1.msra.mxu0 0.0
        %1149 = vmatprep.subr.mxu0 0.0
        %1150 = vmatpush1.msra.mxu0 0.0
        %1151 = vmatprep.subr.mxu0 0.0
        %1152 = vmatpush1.msra.mxu0 0.0
        %1153 = vmatprep.subr.mxu0 0.0
        %1154 = vmatpush1.msra.mxu0 0.0
        %1155 = vmatprep.subr.mxu0 0.0
        %1156 = vmatpush1.msra.mxu0 0.0
        %1157 = vmatprep.subr.mxu0 0.0
        %1158 = vmatpush1.msra.mxu0 0.0
        %1159 = vmatprep.subr.mxu0 0.0
        %1160 = vmatpush1.msra.mxu0 0.0
        %1161 = vmatprep.subr.mxu0 0.0
        %1162 = vmatpush1.msra.mxu0 0.0
        %1163 = vmatprep.subr.mxu0 0.0
        %1164 = vmatpush1.msra.mxu0 0.0
        %1165 = vmatprep.subr.mxu0 0.0
        %1166 = vmatpush1.msra.mxu0 0.0
        %1167 = vmatprep.mubr.f32.mxu0 0.0
        %1168 = vmatmul.mubr.f32.gmra.mrb[0].mxu0 %v1101
        %v1169 = vpop.f32.mrb[0].mxu0
        %v1170 = vadd.f32 0.0, %v1169
        %v1171 = vpop.f32.mrb[0].mxu0
        %1172 = vdwg.mxu0
        %v1174 = vrot.slane %v1170, 3
        %v1176 = vadd.f32 %v520, %v1174
        %v1177 = vxor.u32 %v1176, 2147483648
        %v1178 = vmul.f32 %v1177, 1.442695
        %v1179 = vpow.pop %v1178
        %v1180 = vadd.f32 %v1179, 1.0
        %v1181 = vrcp.pop %v1180
        %v1182 = vmul.f32 1.0, %v1181
        %v1183 = vadd.f32 %v1170, %v617
        %v1185 = vrot.slane %v1183, 3
        %1186 = vrot.lane.b32.xlu0 %v1185, 112
        %v1187 = vpop.permute.xlu0 %1186
        %v1189 = vmul.f32 %v1182, %v1187
        %1191 = vrot.lane.b32.xlu0 %v1189, 16
        %v1192 = vpop.permute.xlu0 %1191
        %v1194 = vadd.f32 %v520, %v1192
        %v1195 = vtanh.pop %v1194
        %v1196 = vsub.f32 1.0, %v1182
        %1198 = vrot.lane.b32.xlu0 %v1195, 120
        %v1199 = vpop.permute.xlu0 %1198
        %v1201 = vmul.f32 %v1196, %v1199
        %v1202 = vrot.slane %v1091, 7
        %v1204 = vmul.f32 %v1182, %v1202
        %v1205 = vadd.f32 %v1201, %v1204
        %1207 = vrot.lane.b32.xlu0 %v1205, 120
        %v1208 = vpop.permute.xlu0 %1207
        %vm1210 = vcmask 62469
        %1211 = vst.msk [vmem:[#allocation2] sm:$0x20] %vm1210, %v1208
        %v1212 = vrot.slane %v1205, 5
        %1213 = vrot.lane.b32.xlu0 %v1212, 120
        %v1214 = vpop.permute.xlu0 %1213
        %v1215 = vsel %vm530, %v1214, 0
        %1217 = vmatprep.subr.mxu0 0.0
        %1218 = vmatpush1.msra.mxu0 %v528
        %1219 = vmatprep.subr.mxu0 0.0
        %1220 = vmatpush1.msra.mxu0 0.0
        %1221 = vmatprep.subr.mxu0 0.0
        %1222 = vmatpush1.msra.mxu0 0.0
        %1223 = vmatprep.subr.mxu0 0.0
        %1224 = vmatpush1.msra.mxu0 0.0
        %1225 = vmatprep.subr.mxu0 0.0
        %1226 = vmatpush1.msra.mxu0 0.0
        %1227 = vmatprep.subr.mxu0 0.0
        %1228 = vmatpush1.msra.mxu0 0.0
        %1229 = vmatprep.subr.mxu0 0.0
        %1230 = vmatpush1.msra.mxu0 0.0
        %1231 = vmatprep.subr.mxu0 0.0
        %1232 = vmatpush1.msra.mxu0 0.0
        %1233 = vmatprep.subr.mxu0 0.0
        %1234 = vmatpush1.msra.mxu0 0.0
        %1235 = vmatprep.subr.mxu0 0.0
        %1236 = vmatpush1.msra.mxu0 0.0
        %1237 = vmatprep.subr.mxu0 0.0
        %1238 = vmatpush1.msra.mxu0 0.0
        %1239 = vmatprep.subr.mxu0 0.0
        %1240 = vmatpush1.msra.mxu0 0.0
        %1241 = vmatprep.subr.mxu0 0.0
        %1242 = vmatpush1.msra.mxu0 0.0
        %1243 = vmatprep.subr.mxu0 0.0
        %1244 = vmatpush1.msra.mxu0 0.0
        %1245 = vmatprep.subr.mxu0 0.0
        %1246 = vmatpush1.msra.mxu0 0.0
        %1247 = vmatprep.subr.mxu0 0.0
        %1248 = vmatpush1.msra.mxu0 0.0
        %1249 = vmatprep.subr.mxu0 0.0
        %1250 = vmatpush1.msra.mxu0 0.0
        %1251 = vmatprep.subr.mxu0 0.0
        %1252 = vmatpush1.msra.mxu0 0.0
        %1253 = vmatprep.subr.mxu0 0.0
        %1254 = vmatpush1.msra.mxu0 0.0
        %1255 = vmatprep.subr.mxu0 0.0
        %1256 = vmatpush1.msra.mxu0 0.0
        %1257 = vmatprep.subr.mxu0 0.0
        %1258 = vmatpush1.msra.mxu0 0.0
        %1259 = vmatprep.subr.mxu0 0.0
        %1260 = vmatpush1.msra.mxu0 0.0
        %1261 = vmatprep.subr.mxu0 0.0
        %1262 = vmatpush1.msra.mxu0 0.0
        %1263 = vmatprep.subr.mxu0 0.0
        %1264 = vmatpush1.msra.mxu0 0.0
        %1265 = vmatprep.subr.mxu0 0.0
        %1266 = vmatpush1.msra.mxu0 0.0
        %1267 = vmatprep.subr.mxu0 0.0
        %1268 = vmatpush1.msra.mxu0 0.0
        %1269 = vmatprep.subr.mxu0 0.0
        %1270 = vmatpush1.msra.mxu0 0.0
        %1271 = vmatprep.subr.mxu0 0.0
        %1272 = vmatpush1.msra.mxu0 0.0
        %1273 = vmatprep.subr.mxu0 0.0
        %1274 = vmatpush1.msra.mxu0 0.0
        %1275 = vmatprep.subr.mxu0 0.0
        %1276 = vmatpush1.msra.mxu0 0.0
        %1277 = vmatprep.subr.mxu0 0.0
        %1278 = vmatpush1.msra.mxu0 0.0
        %1279 = vmatprep.subr.mxu0 0.0
        %1280 = vmatpush1.msra.mxu0 0.0
        %1281 = vmatprep.mubr.f32.mxu0 0.0
        %1282 = vmatmul.mubr.f32.gmra.mrb[0].mxu0 %v1215
        %v1283 = vpop.f32.mrb[0].mxu0
        %v1284 = vadd.f32 0.0, %v1283
        %v1285 = vpop.f32.mrb[0].mxu0
        %1286 = vdwg.mxu0
        %v1288 = vrot.slane %v1284, 2
        %v1290 = vadd.f32 %v520, %v1288
        %v1291 = vxor.u32 %v1290, 2147483648
        %v1292 = vmul.f32 %v1291, 1.442695
        %v1293 = vpow.pop %v1292
        %v1294 = vadd.f32 %v1293, 1.0
        %v1295 = vrcp.pop %v1294
        %v1296 = vmul.f32 1.0, %v1295
        %v1297 = vadd.f32 %v1284, %v617
        %v1299 = vrot.slane %v1297, 2
        %1300 = vrot.lane.b32.xlu0 %v1299, 112
        %v1301 = vpop.permute.xlu0 %1300
        %v1303 = vmul.f32 %v1296, %v1301
        %1305 = vrot.lane.b32.xlu0 %v1303, 16
        %v1306 = vpop.permute.xlu0 %1305
        %v1308 = vadd.f32 %v520, %v1306
        %v1309 = vtanh.pop %v1308
        %v1310 = vsub.f32 1.0, %v1296
        %1312 = vrot.lane.b32.xlu0 %v1309, 120
        %v1313 = vpop.permute.xlu0 %1312
        %v1315 = vmul.f32 %v1310, %v1313
        %v1316 = vrot.slane %v1205, 7
        %v1318 = vmul.f32 %v1296, %v1316
        %v1319 = vadd.f32 %v1315, %v1318
        %1321 = vrot.lane.b32.xlu0 %v1319, 120
        %v1322 = vpop.permute.xlu0 %1321
        %vm1324 = vcmask 63494
        %1325 = vst.msk [vmem:[#allocation2] sm:$0x40] %vm1324, %v1322
        %v1326 = vrot.slane %v1319, 6
        %1327 = vrot.lane.b32.xlu0 %v1326, 120
        %v1328 = vpop.permute.xlu0 %1327
        %v1329 = vsel %vm530, %v1328, 0
        %1331 = vmatprep.subr.mxu0 0.0
        %1332 = vmatpush1.msra.mxu0 %v528
        %1333 = vmatprep.subr.mxu0 0.0
        %1334 = vmatpush1.msra.mxu0 0.0
        %1335 = vmatprep.subr.mxu0 0.0
        %1336 = vmatpush1.msra.mxu0 0.0
        %1337 = vmatprep.subr.mxu0 0.0
        %1338 = vmatpush1.msra.mxu0 0.0
        %1339 = vmatprep.subr.mxu0 0.0
        %1340 = vmatpush1.msra.mxu0 0.0
        %1341 = vmatprep.subr.mxu0 0.0
        %1342 = vmatpush1.msra.mxu0 0.0
        %1343 = vmatprep.subr.mxu0 0.0
        %1344 = vmatpush1.msra.mxu0 0.0
        %1345 = vmatprep.subr.mxu0 0.0
        %1346 = vmatpush1.msra.mxu0 0.0
        %1347 = vmatprep.subr.mxu0 0.0
        %1348 = vmatpush1.msra.mxu0 0.0
        %1349 = vmatprep.subr.mxu0 0.0
        %1350 = vmatpush1.msra.mxu0 0.0
        %1351 = vmatprep.subr.mxu0 0.0
        %1352 = vmatpush1.msra.mxu0 0.0
        %1353 = vmatprep.subr.mxu0 0.0
        %1354 = vmatpush1.msra.mxu0 0.0
        %1355 = vmatprep.subr.mxu0 0.0
        %1356 = vmatpush1.msra.mxu0 0.0
        %1357 = vmatprep.subr.mxu0 0.0
        %1358 = vmatpush1.msra.mxu0 0.0
        %1359 = vmatprep.subr.mxu0 0.0
        %1360 = vmatpush1.msra.mxu0 0.0
        %1361 = vmatprep.subr.mxu0 0.0
        %1362 = vmatpush1.msra.mxu0 0.0
        %1363 = vmatprep.subr.mxu0 0.0
        %1364 = vmatpush1.msra.mxu0 0.0
        %1365 = vmatprep.subr.mxu0 0.0
        %1366 = vmatpush1.msra.mxu0 0.0
        %1367 = vmatprep.subr.mxu0 0.0
        %1368 = vmatpush1.msra.mxu0 0.0
        %1369 = vmatprep.subr.mxu0 0.0
        %1370 = vmatpush1.msra.mxu0 0.0
        %1371 = vmatprep.subr.mxu0 0.0
        %1372 = vmatpush1.msra.mxu0 0.0
        %1373 = vmatprep.subr.mxu0 0.0
        %1374 = vmatpush1.msra.mxu0 0.0
        %1375 = vmatprep.subr.mxu0 0.0
        %1376 = vmatpush1.msra.mxu0 0.0
        %1377 = vmatprep.subr.mxu0 0.0
        %1378 = vmatpush1.msra.mxu0 0.0
        %1379 = vmatprep.subr.mxu0 0.0
        %1380 = vmatpush1.msra.mxu0 0.0
        %1381 = vmatprep.subr.mxu0 0.0
        %1382 = vmatpush1.msra.mxu0 0.0
        %1383 = vmatprep.subr.mxu0 0.0
        %1384 = vmatpush1.msra.mxu0 0.0
        %1385 = vmatprep.subr.mxu0 0.0
        %1386 = vmatpush1.msra.mxu0 0.0
        %1387 = vmatprep.subr.mxu0 0.0
        %1388 = vmatpush1.msra.mxu0 0.0
        %1389 = vmatprep.subr.mxu0 0.0
        %1390 = vmatpush1.msra.mxu0 0.0
        %1391 = vmatprep.subr.mxu0 0.0
        %1392 = vmatpush1.msra.mxu0 0.0
        %1393 = vmatprep.subr.mxu0 0.0
        %1394 = vmatpush1.msra.mxu0 0.0
        %1395 = vmatprep.mubr.f32.mxu0 0.0
        %1396 = vmatmul.mubr.f32.gmra.mrb[0].mxu0 %v1329
        %v1397 = vpop.f32.mrb[0].mxu0
        %v1398 = vadd.f32 0.0, %v1397
        %v1399 = vpop.f32.mrb[0].mxu0
        %1400 = vdwg.mxu0
        %v1402 = vrot.slane %v1398, 1
        %v1404 = vadd.f32 %v520, %v1402
        %v1405 = vxor.u32 %v1404, 2147483648
        %v1406 = vmul.f32 %v1405, 1.442695
        %v1407 = vpow.pop %v1406
        %v1408 = vadd.f32 %v1407, 1.0
        %v1409 = vrcp.pop %v1408
        %v1410 = vmul.f32 1.0, %v1409
        %v1411 = vadd.f32 %v1398, %v617
        %v1413 = vrot.slane %v1411, 1
        %1414 = vrot.lane.b32.xlu0 %v1413, 112
        %v1415 = vpop.permute.xlu0 %1414
        %v1417 = vmul.f32 %v1410, %v1415
        %1419 = vrot.lane.b32.xlu0 %v1417, 16
        %v1420 = vpop.permute.xlu0 %1419
        %v1422 = vadd.f32 %v520, %v1420
        %v1423 = vtanh.pop %v1422
        %v1424 = vsub.f32 1.0, %v1410
        %1426 = vrot.lane.b32.xlu0 %v1423, 120
        %v1427 = vpop.permute.xlu0 %1426
        %v1429 = vmul.f32 %v1424, %v1427
        %v1430 = vrot.slane %v1319, 7
        %v1432 = vmul.f32 %v1410, %v1430
        %v1433 = vadd.f32 %v1429, %v1432
        %1435 = vrot.lane.b32.xlu0 %v1433, 120
        %v1436 = vpop.permute.xlu0 %1435
        %vm1438 = vcmask 64519
        %1439 = vst.msk [vmem:[#allocation2] sm:$0x80] %vm1438, %v1436
        %v1440 = vrot.slane %v1433, 7
        %1441 = vrot.lane.b32.xlu0 %v1440, 120
        %v1442 = vpop.permute.xlu0 %1441
        %v1443 = vsel %vm530, %v1442, 0
        %1445 = vmatprep.subr.mxu0 0.0
        %1446 = vmatpush1.msra.mxu0 %v528
        %1447 = vmatprep.subr.mxu0 0.0
        %1448 = vmatpush1.msra.mxu0 0.0
        %1449 = vmatprep.subr.mxu0 0.0
        %1450 = vmatpush1.msra.mxu0 0.0
        %1451 = vmatprep.subr.mxu0 0.0
        %1452 = vmatpush1.msra.mxu0 0.0
        %1453 = vmatprep.subr.mxu0 0.0
        %1454 = vmatpush1.msra.mxu0 0.0
        %1455 = vmatprep.subr.mxu0 0.0
        %1456 = vmatpush1.msra.mxu0 0.0
        %1457 = vmatprep.subr.mxu0 0.0
        %1458 = vmatpush1.msra.mxu0 0.0
        %1459 = vmatprep.subr.mxu0 0.0
        %1460 = vmatpush1.msra.mxu0 0.0
        %1461 = vmatprep.subr.mxu0 0.0
        %1462 = vmatpush1.msra.mxu0 0.0
        %1463 = vmatprep.subr.mxu0 0.0
        %1464 = vmatpush1.msra.mxu0 0.0
        %1465 = vmatprep.subr.mxu0 0.0
        %1466 = vmatpush1.msra.mxu0 0.0
        %1467 = vmatprep.subr.mxu0 0.0
        %1468 = vmatpush1.msra.mxu0 0.0
        %1469 = vmatprep.subr.mxu0 0.0
        %1470 = vmatpush1.msra.mxu0 0.0
        %1471 = vmatprep.subr.mxu0 0.0
        %1472 = vmatpush1.msra.mxu0 0.0
        %1473 = vmatprep.subr.mxu0 0.0
        %1474 = vmatpush1.msra.mxu0 0.0
        %1475 = vmatprep.subr.mxu0 0.0
        %1476 = vmatpush1.msra.mxu0 0.0
        %1477 = vmatprep.subr.mxu0 0.0
        %1478 = vmatpush1.msra.mxu0 0.0
        %1479 = vmatprep.subr.mxu0 0.0
        %1480 = vmatpush1.msra.mxu0 0.0
        %1481 = vmatprep.subr.mxu0 0.0
        %1482 = vmatpush1.msra.mxu0 0.0
        %1483 = vmatprep.subr.mxu0 0.0
        %1484 = vmatpush1.msra.mxu0 0.0
        %1485 = vmatprep.subr.mxu0 0.0
        %1486 = vmatpush1.msra.mxu0 0.0
        %1487 = vmatprep.subr.mxu0 0.0
        %1488 = vmatpush1.msra.mxu0 0.0
        %1489 = vmatprep.subr.mxu0 0.0
        %1490 = vmatpush1.msra.mxu0 0.0
        %1491 = vmatprep.subr.mxu0 0.0
        %1492 = vmatpush1.msra.mxu0 0.0
        %1493 = vmatprep.subr.mxu0 0.0
        %1494 = vmatpush1.msra.mxu0 0.0
        %1495 = vmatprep.subr.mxu0 0.0
        %1496 = vmatpush1.msra.mxu0 0.0
        %1497 = vmatprep.subr.mxu0 0.0
        %1498 = vmatpush1.msra.mxu0 0.0
        %1499 = vmatprep.subr.mxu0 0.0
        %1500 = vmatpush1.msra.mxu0 0.0
        %1501 = vmatprep.subr.mxu0 0.0
        %1502 = vmatpush1.msra.mxu0 0.0
        %1503 = vmatprep.subr.mxu0 0.0
        %1504 = vmatpush1.msra.mxu0 0.0
        %1505 = vmatprep.subr.mxu0 0.0
        %1506 = vmatpush1.msra.mxu0 0.0
        %1507 = vmatprep.subr.mxu0 0.0
        %1508 = vmatpush1.msra.mxu0 0.0
        %1509 = vmatprep.mubr.f32.mxu0 0.0
        %1510 = vmatmul.mubr.f32.gmra.mrb[0].mxu0 %v1443
        %v1511 = vpop.f32.mrb[0].mxu0
        %v1512 = vadd.f32 0.0, %v1511
        %v1513 = vpop.f32.mrb[0].mxu0
        %1514 = vdwg.mxu0
        %v1515 = vadd.f32 %v525, %v1512
        %v1516 = vxor.u32 %v1515, 2147483648
        %v1517 = vmul.f32 %v1516, 1.442695
        %v1518 = vpow.pop %v1517
        %v1519 = vadd.f32 %v1518, 1.0
        %v1520 = vrcp.pop %v1519
        %v1521 = vmul.f32 1.0, %v1520
        %v1522 = vadd.f32 %v1512, %v617
        %1524 = vrot.lane.b32.xlu0 %v1522, 112
        %v1525 = vpop.permute.xlu0 %1524
        %v1527 = vmul.f32 %v1521, %v1525
        %1529 = vrot.lane.b32.xlu0 %v1527, 16
        %v1530 = vpop.permute.xlu0 %1529
        %v1532 = vadd.f32 %v525, %v1530
        %v1533 = vtanh.pop %v1532
        %v1534 = vsub.f32 1.0, %v1521
        %1536 = vrot.lane.b32.xlu0 %v1533, 120
        %v1537 = vpop.permute.xlu0 %1536
        %v1539 = vmul.f32 %v1534, %v1537
        %v1541 = vmul.f32 %v1521, %v1440
        %v1542 = vadd.f32 %v1539, %v1541
        %1544 = vrot.lane.b32.xlu0 %v1542, 120
        %v1545 = vpop.permute.xlu0 %1544
        %1547 = vst.msk [vmem:[#allocation2 + $0x8] sm:$0x1] %vm643, %v1545
        %v1548 = vsel %vm530, %v1545, 0
        %1550 = vmatprep.subr.mxu0 0.0
        %1551 = vmatpush1.msra.mxu0 %v528
        %1552 = vmatprep.subr.mxu0 0.0
        %1553 = vmatpush1.msra.mxu0 0.0
        %1554 = vmatprep.subr.mxu0 0.0
        %1555 = vmatpush1.msra.mxu0 0.0
        %1556 = vmatprep.subr.mxu0 0.0
        %1557 = vmatpush1.msra.mxu0 0.0
        %1558 = vmatprep.subr.mxu0 0.0
        %1559 = vmatpush1.msra.mxu0 0.0
        %1560 = vmatprep.subr.mxu0 0.0
        %1561 = vmatpush1.msra.mxu0 0.0
        %1562 = vmatprep.subr.mxu0 0.0
        %1563 = vmatpush1.msra.mxu0 0.0
        %1564 = vmatprep.subr.mxu0 0.0
        %1565 = vmatpush1.msra.mxu0 0.0
        %1566 = vmatprep.subr.mxu0 0.0
        %1567 = vmatpush1.msra.mxu0 0.0
        %1568 = vmatprep.subr.mxu0 0.0
        %1569 = vmatpush1.msra.mxu0 0.0
        %1570 = vmatprep.subr.mxu0 0.0
        %1571 = vmatpush1.msra.mxu0 0.0
        %1572 = vmatprep.subr.mxu0 0.0
        %1573 = vmatpush1.msra.mxu0 0.0
        %1574 = vmatprep.subr.mxu0 0.0
        %1575 = vmatpush1.msra.mxu0 0.0
        %1576 = vmatprep.subr.mxu0 0.0
        %1577 = vmatpush1.msra.mxu0 0.0
        %1578 = vmatprep.subr.mxu0 0.0
        %1579 = vmatpush1.msra.mxu0 0.0
        %1580 = vmatprep.subr.mxu0 0.0
        %1581 = vmatpush1.msra.mxu0 0.0
        %1582 = vmatprep.subr.mxu0 0.0
        %1583 = vmatpush1.msra.mxu0 0.0
        %1584 = vmatprep.subr.mxu0 0.0
        %1585 = vmatpush1.msra.mxu0 0.0
        %1586 = vmatprep.subr.mxu0 0.0
        %1587 = vmatpush1.msra.mxu0 0.0
        %1588 = vmatprep.subr.mxu0 0.0
        %1589 = vmatpush1.msra.mxu0 0.0
        %1590 = vmatprep.subr.mxu0 0.0
        %1591 = vmatpush1.msra.mxu0 0.0
        %1592 = vmatprep.subr.mxu0 0.0
        %1593 = vmatpush1.msra.mxu0 0.0
        %1594 = vmatprep.subr.mxu0 0.0
        %1595 = vmatpush1.msra.mxu0 0.0
        %1596 = vmatprep.subr.mxu0 0.0
        %1597 = vmatpush1.msra.mxu0 0.0
        %1598 = vmatprep.subr.mxu0 0.0
        %1599 = vmatpush1.msra.mxu0 0.0
        %1600 = vmatprep.subr.mxu0 0.0
        %1601 = vmatpush1.msra.mxu0 0.0
        %1602 = vmatprep.subr.mxu0 0.0
        %1603 = vmatpush1.msra.mxu0 0.0
        %1604 = vmatprep.subr.mxu0 0.0
        %1605 = vmatpush1.msra.mxu0 0.0
        %1606 = vmatprep.subr.mxu0 0.0
        %1607 = vmatpush1.msra.mxu0 0.0
        %1608 = vmatprep.subr.mxu0 0.0
        %1609 = vmatpush1.msra.mxu0 0.0
        %1610 = vmatprep.subr.mxu0 0.0
        %1611 = vmatpush1.msra.mxu0 0.0
        %1612 = vmatprep.subr.mxu0 0.0
        %1613 = vmatpush1.msra.mxu0 0.0
        %1614 = vmatprep.mubr.f32.mxu0 0.0
        %1615 = vmatmul.mubr.f32.gmra.mrb[0].mxu0 %v1548
        %v1616 = vpop.f32.mrb[0].mxu0
        %v1617 = vadd.f32 0.0, %v1616
        %v1618 = vpop.f32.mrb[0].mxu0
        %1619 = vdwg.mxu0
        %v1621 = vrot.slane %v1617, 7
        %v1623 = vadd.f32 %v525, %v1621
        %v1624 = vxor.u32 %v1623, 2147483648
        %v1625 = vmul.f32 %v1624, 1.442695
        %v1626 = vpow.pop %v1625
        %v1627 = vadd.f32 %v1626, 1.0
        %v1628 = vrcp.pop %v1627
        %v1629 = vmul.f32 1.0, %v1628
        %v1630 = vadd.f32 %v1617, %v617
        %v1632 = vrot.slane %v1630, 7
        %1633 = vrot.lane.b32.xlu0 %v1632, 112
        %v1634 = vpop.permute.xlu0 %1633
        %v1636 = vmul.f32 %v1629, %v1634
        %1638 = vrot.lane.b32.xlu0 %v1636, 16
        %v1639 = vpop.permute.xlu0 %1638
        %v1641 = vadd.f32 %v525, %v1639
        %v1642 = vtanh.pop %v1641
        %v1643 = vsub.f32 1.0, %v1629
        %1645 = vrot.lane.b32.xlu0 %v1642, 120
        %v1646 = vpop.permute.xlu0 %1645
        %v1648 = vmul.f32 %v1643, %v1646
        %v1649 = vrot.slane %v1542, 7
        %v1651 = vmul.f32 %v1629, %v1649
        %v1652 = vadd.f32 %v1648, %v1651
        %1654 = vrot.lane.b32.xlu0 %v1652, 120
        %v1655 = vpop.permute.xlu0 %1654
        %1657 = vst.msk [vmem:[#allocation2 + $0x8] sm:$0x2] %vm754, %v1655
        %v1658 = vrot.slane %v1652, 1
        %1659 = vrot.lane.b32.xlu0 %v1658, 120
        %v1660 = vpop.permute.xlu0 %1659
        %v1661 = vsel %vm530, %v1660, 0
        %1663 = vmatprep.subr.mxu0 0.0
        %1664 = vmatpush1.msra.mxu0 %v528
        %1665 = vmatprep.subr.mxu0 0.0
        %1666 = vmatpush1.msra.mxu0 0.0
        %1667 = vmatprep.subr.mxu0 0.0
        %1668 = vmatpush1.msra.mxu0 0.0
        %1669 = vmatprep.subr.mxu0 0.0
        %1670 = vmatpush1.msra.mxu0 0.0
        %1671 = vmatprep.subr.mxu0 0.0
        %1672 = vmatpush1.msra.mxu0 0.0
        %1673 = vmatprep.subr.mxu0 0.0
        %1674 = vmatpush1.msra.mxu0 0.0
        %1675 = vmatprep.subr.mxu0 0.0
        %1676 = vmatpush1.msra.mxu0 0.0
        %1677 = vmatprep.subr.mxu0 0.0
        %1678 = vmatpush1.msra.mxu0 0.0
        %1679 = vmatprep.subr.mxu0 0.0
        %1680 = vmatpush1.msra.mxu0 0.0
        %1681 = vmatprep.subr.mxu0 0.0
        %1682 = vmatpush1.msra.mxu0 0.0
        %1683 = vmatprep.subr.mxu0 0.0
        %1684 = vmatpush1.msra.mxu0 0.0
        %1685 = vmatprep.subr.mxu0 0.0
        %1686 = vmatpush1.msra.mxu0 0.0
        %1687 = vmatprep.subr.mxu0 0.0
        %1688 = vmatpush1.msra.mxu0 0.0
        %1689 = vmatprep.subr.mxu0 0.0
        %1690 = vmatpush1.msra.mxu0 0.0
        %1691 = vmatprep.subr.mxu0 0.0
        %1692 = vmatpush1.msra.mxu0 0.0
        %1693 = vmatprep.subr.mxu0 0.0
        %1694 = vmatpush1.msra.mxu0 0.0
        %1695 = vmatprep.subr.mxu0 0.0
        %1696 = vmatpush1.msra.mxu0 0.0
        %1697 = vmatprep.subr.mxu0 0.0
        %1698 = vmatpush1.msra.mxu0 0.0
        %1699 = vmatprep.subr.mxu0 0.0
        %1700 = vmatpush1.msra.mxu0 0.0
        %1701 = vmatprep.subr.mxu0 0.0
        %1702 = vmatpush1.msra.mxu0 0.0
        %1703 = vmatprep.subr.mxu0 0.0
        %1704 = vmatpush1.msra.mxu0 0.0
        %1705 = vmatprep.subr.mxu0 0.0
        %1706 = vmatpush1.msra.mxu0 0.0
        %1707 = vmatprep.subr.mxu0 0.0
        %1708 = vmatpush1.msra.mxu0 0.0
        %1709 = vmatprep.subr.mxu0 0.0
        %1710 = vmatpush1.msra.mxu0 0.0
        %1711 = vmatprep.subr.mxu0 0.0
        %1712 = vmatpush1.msra.mxu0 0.0
        %1713 = vmatprep.subr.mxu0 0.0
        %1714 = vmatpush1.msra.mxu0 0.0
        %1715 = vmatprep.subr.mxu0 0.0
        %1716 = vmatpush1.msra.mxu0 0.0
        %1717 = vmatprep.subr.mxu0 0.0
        %1718 = vmatpush1.msra.mxu0 0.0
        %1719 = vmatprep.subr.mxu0 0.0
        %1720 = vmatpush1.msra.mxu0 0.0
        %1721 = vmatprep.subr.mxu0 0.0
        %1722 = vmatpush1.msra.mxu0 0.0
        %1723 = vmatprep.subr.mxu0 0.0
        %1724 = vmatpush1.msra.mxu0 0.0
        %1725 = vmatprep.subr.mxu0 0.0
        %1726 = vmatpush1.msra.mxu0 0.0
        %1727 = vmatprep.mubr.f32.mxu0 0.0
        %1728 = vmatmul.mubr.f32.gmra.mrb[0].mxu0 %v1661
        %v1729 = vpop.f32.mrb[0].mxu0
        %v1730 = vadd.f32 0.0, %v1729
        %v1731 = vpop.f32.mrb[0].mxu0
        %1732 = vdwg.mxu0
        %v1734 = vrot.slane %v1730, 6
        %v1736 = vadd.f32 %v525, %v1734
        %v1737 = vxor.u32 %v1736, 2147483648
        %v1738 = vmul.f32 %v1737, 1.442695
        %v1739 = vpow.pop %v1738
        %v1740 = vadd.f32 %v1739, 1.0
        %v1741 = vrcp.pop %v1740
        %v1742 = vmul.f32 1.0, %v1741
        %v1743 = vadd.f32 %v1730, %v617
        %v1745 = vrot.slane %v1743, 6
        %1746 = vrot.lane.b32.xlu0 %v1745, 112
        %v1747 = vpop.permute.xlu0 %1746
        %v1749 = vmul.f32 %v1742, %v1747
        %1751 = vrot.lane.b32.xlu0 %v1749, 16
        %v1752 = vpop.permute.xlu0 %1751
        %v1754 = vadd.f32 %v525, %v1752
        %v1755 = vtanh.pop %v1754
        %v1756 = vsub.f32 1.0, %v1742
        %1758 = vrot.lane.b32.xlu0 %v1755, 120
        %v1759 = vpop.permute.xlu0 %1758
        %v1761 = vmul.f32 %v1756, %v1759
        %v1762 = vrot.slane %v1652, 7
        %v1764 = vmul.f32 %v1742, %v1762
        %v1765 = vadd.f32 %v1761, %v1764
        %1767 = vrot.lane.b32.xlu0 %v1765, 120
        %v1768 = vpop.permute.xlu0 %1767
        %1770 = vst.msk [vmem:[#allocation2 + $0x8] sm:$0x4] %vm868, %v1768
        %v1771 = vrot.slane %v1765, 2
        %1772 = vrot.lane.b32.xlu0 %v1771, 120
        %v1773 = vpop.permute.xlu0 %1772
        %v1774 = vsel %vm530, %v1773, 0
        %1776 = vmatprep.subr.mxu0 0.0
        %1777 = vmatpush1.msra.mxu0 %v528
        %1778 = vmatprep.subr.mxu0 0.0
        %1779 = vmatpush1.msra.mxu0 0.0
        %1780 = vmatprep.subr.mxu0 0.0
        %1781 = vmatpush1.msra.mxu0 0.0
        %1782 = vmatprep.subr.mxu0 0.0
        %1783 = vmatpush1.msra.mxu0 0.0
        %1784 = vmatprep.subr.mxu0 0.0
        %1785 = vmatpush1.msra.mxu0 0.0
        %1786 = vmatprep.subr.mxu0 0.0
        %1787 = vmatpush1.msra.mxu0 0.0
        %1788 = vmatprep.subr.mxu0 0.0
        %1789 = vmatpush1.msra.mxu0 0.0
        %1790 = vmatprep.subr.mxu0 0.0
        %1791 = vmatpush1.msra.mxu0 0.0
        %1792 = vmatprep.subr.mxu0 0.0
        %1793 = vmatpush1.msra.mxu0 0.0
        %1794 = vmatprep.subr.mxu0 0.0
        %1795 = vmatpush1.msra.mxu0 0.0
        %1796 = vmatprep.subr.mxu0 0.0
        %1797 = vmatpush1.msra.mxu0 0.0
        %1798 = vmatprep.subr.mxu0 0.0
        %1799 = vmatpush1.msra.mxu0 0.0
        %1800 = vmatprep.subr.mxu0 0.0
        %1801 = vmatpush1.msra.mxu0 0.0
        %1802 = vmatprep.subr.mxu0 0.0
        %1803 = vmatpush1.msra.mxu0 0.0
        %1804 = vmatprep.subr.mxu0 0.0
        %1805 = vmatpush1.msra.mxu0 0.0
        %1806 = vmatprep.subr.mxu0 0.0
        %1807 = vmatpush1.msra.mxu0 0.0
        %1808 = vmatprep.subr.mxu0 0.0
        %1809 = vmatpush1.msra.mxu0 0.0
        %1810 = vmatprep.subr.mxu0 0.0
        %1811 = vmatpush1.msra.mxu0 0.0
        %1812 = vmatprep.subr.mxu0 0.0
        %1813 = vmatpush1.msra.mxu0 0.0
        %1814 = vmatprep.subr.mxu0 0.0
        %1815 = vmatpush1.msra.mxu0 0.0
        %1816 = vmatprep.subr.mxu0 0.0
        %1817 = vmatpush1.msra.mxu0 0.0
        %1818 = vmatprep.subr.mxu0 0.0
        %1819 = vmatpush1.msra.mxu0 0.0
        %1820 = vmatprep.subr.mxu0 0.0
        %1821 = vmatpush1.msra.mxu0 0.0
        %1822 = vmatprep.subr.mxu0 0.0
        %1823 = vmatpush1.msra.mxu0 0.0
        %1824 = vmatprep.subr.mxu0 0.0
        %1825 = vmatpush1.msra.mxu0 0.0
        %1826 = vmatprep.subr.mxu0 0.0
        %1827 = vmatpush1.msra.mxu0 0.0
        %1828 = vmatprep.subr.mxu0 0.0
        %1829 = vmatpush1.msra.mxu0 0.0
        %1830 = vmatprep.subr.mxu0 0.0
        %1831 = vmatpush1.msra.mxu0 0.0
        %1832 = vmatprep.subr.mxu0 0.0
        %1833 = vmatpush1.msra.mxu0 0.0
        %1834 = vmatprep.subr.mxu0 0.0
        %1835 = vmatpush1.msra.mxu0 0.0
        %1836 = vmatprep.subr.mxu0 0.0
        %1837 = vmatpush1.msra.mxu0 0.0
        %1838 = vmatprep.subr.mxu0 0.0
        %1839 = vmatpush1.msra.mxu0 0.0
        %1840 = vmatprep.mubr.f32.mxu0 0.0
        %1841 = vmatmul.mubr.f32.gmra.mrb[0].mxu0 %v1774
        %v1842 = vpop.f32.mrb[0].mxu0
        %v1843 = vadd.f32 0.0, %v1842
        %v1844 = vpop.f32.mrb[0].mxu0
        %1845 = vdwg.mxu0
        %v1847 = vrot.slane %v1843, 5
        %v1849 = vadd.f32 %v525, %v1847
        %v1850 = vxor.u32 %v1849, 2147483648
        %v1851 = vmul.f32 %v1850, 1.442695
        %v1852 = vpow.pop %v1851
        %v1853 = vadd.f32 %v1852, 1.0
        %v1854 = vrcp.pop %v1853
        %v1855 = vmul.f32 1.0, %v1854
        %v1856 = vadd.f32 %v1843, %v617
        %v1858 = vrot.slane %v1856, 5
        %1859 = vrot.lane.b32.xlu0 %v1858, 112
        %v1860 = vpop.permute.xlu0 %1859
        %v1862 = vmul.f32 %v1855, %v1860
        %1864 = vrot.lane.b32.xlu0 %v1862, 16
        %v1865 = vpop.permute.xlu0 %1864
        %v1867 = vadd.f32 %v525, %v1865
        %v1868 = vtanh.pop %v1867
        %v1869 = vsub.f32 1.0, %v1855
        %1871 = vrot.lane.b32.xlu0 %v1868, 120
        %v1872 = vpop.permute.xlu0 %1871
        %v1874 = vmul.f32 %v1869, %v1872
        %v1875 = vrot.slane %v1765, 7
        %v1877 = vmul.f32 %v1855, %v1875
        %v1878 = vadd.f32 %v1874, %v1877
        %1880 = vrot.lane.b32.xlu0 %v1878, 120
        %v1881 = vpop.permute.xlu0 %1880
        %1883 = vst.msk [vmem:[#allocation2 + $0x8] sm:$0x8] %vm982, %v1881
        %v1884 = vrot.slane %v1878, 3
        %1885 = vrot.lane.b32.xlu0 %v1884, 120
        %v1886 = vpop.permute.xlu0 %1885
        %v1887 = vsel %vm530, %v1886, 0
        %1889 = vmatprep.subr.mxu0 0.0
        %1890 = vmatpush1.msra.mxu0 %v528
        %1891 = vmatprep.subr.mxu0 0.0
        %1892 = vmatpush1.msra.mxu0 0.0
        %1893 = vmatprep.subr.mxu0 0.0
        %1894 = vmatpush1.msra.mxu0 0.0
        %1895 = vmatprep.subr.mxu0 0.0
        %1896 = vmatpush1.msra.mxu0 0.0
        %1897 = vmatprep.subr.mxu0 0.0
        %1898 = vmatpush1.msra.mxu0 0.0
        %1899 = vmatprep.subr.mxu0 0.0
        %1900 = vmatpush1.msra.mxu0 0.0
        %1901 = vmatprep.subr.mxu0 0.0
        %1902 = vmatpush1.msra.mxu0 0.0
        %1903 = vmatprep.subr.mxu0 0.0
        %1904 = vmatpush1.msra.mxu0 0.0
        %1905 = vmatprep.subr.mxu0 0.0
        %1906 = vmatpush1.msra.mxu0 0.0
        %1907 = vmatprep.subr.mxu0 0.0
        %1908 = vmatpush1.msra.mxu0 0.0
        %1909 = vmatprep.subr.mxu0 0.0
        %1910 = vmatpush1.msra.mxu0 0.0
        %1911 = vmatprep.subr.mxu0 0.0
        %1912 = vmatpush1.msra.mxu0 0.0
        %1913 = vmatprep.subr.mxu0 0.0
        %1914 = vmatpush1.msra.mxu0 0.0
        %1915 = vmatprep.subr.mxu0 0.0
        %1916 = vmatpush1.msra.mxu0 0.0
        %1917 = vmatprep.subr.mxu0 0.0
        %1918 = vmatpush1.msra.mxu0 0.0
        %1919 = vmatprep.subr.mxu0 0.0
        %1920 = vmatpush1.msra.mxu0 0.0
        %1921 = vmatprep.subr.mxu0 0.0
        %1922 = vmatpush1.msra.mxu0 0.0
        %1923 = vmatprep.subr.mxu0 0.0
        %1924 = vmatpush1.msra.mxu0 0.0
        %1925 = vmatprep.subr.mxu0 0.0
        %1926 = vmatpush1.msra.mxu0 0.0
        %1927 = vmatprep.subr.mxu0 0.0
        %1928 = vmatpush1.msra.mxu0 0.0
        %1929 = vmatprep.subr.mxu0 0.0
        %1930 = vmatpush1.msra.mxu0 0.0
        %1931 = vmatprep.subr.mxu0 0.0
        %1932 = vmatpush1.msra.mxu0 0.0
        %1933 = vmatprep.subr.mxu0 0.0
        %1934 = vmatpush1.msra.mxu0 0.0
        %1935 = vmatprep.subr.mxu0 0.0
        %1936 = vmatpush1.msra.mxu0 0.0
        %1937 = vmatprep.subr.mxu0 0.0
        %1938 = vmatpush1.msra.mxu0 0.0
        %1939 = vmatprep.subr.mxu0 0.0
        %1940 = vmatpush1.msra.mxu0 0.0
        %1941 = vmatprep.subr.mxu0 0.0
        %1942 = vmatpush1.msra.mxu0 0.0
        %1943 = vmatprep.subr.mxu0 0.0
        %1944 = vmatpush1.msra.mxu0 0.0
        %1945 = vmatprep.subr.mxu0 0.0
        %1946 = vmatpush1.msra.mxu0 0.0
        %1947 = vmatprep.subr.mxu0 0.0
        %1948 = vmatpush1.msra.mxu0 0.0
        %1949 = vmatprep.subr.mxu0 0.0
        %1950 = vmatpush1.msra.mxu0 0.0
        %1951 = vmatprep.subr.mxu0 0.0
        %1952 = vmatpush1.msra.mxu0 0.0
        %1953 = vmatprep.mubr.f32.mxu0 0.0
        %1954 = vmatmul.mubr.f32.gmra.mrb[0].mxu0 %v1887
        %v1955 = vpop.f32.mrb[0].mxu0
        %v1956 = vadd.f32 0.0, %v1955
        %v1957 = vpop.f32.mrb[0].mxu0
        %1958 = vdwg.mxu0
        %v1960 = vrot.slane %v1956, 4
        %v1962 = vadd.f32 %v525, %v1960
        %v1963 = vxor.u32 %v1962, 2147483648
        %v1964 = vmul.f32 %v1963, 1.442695
        %v1965 = vpow.pop %v1964
        %v1966 = vadd.f32 %v1965, 1.0
        %v1967 = vrcp.pop %v1966
        %v1968 = vmul.f32 1.0, %v1967
        %v1969 = vadd.f32 %v1956, %v617
        %v1971 = vrot.slane %v1969, 4
        %1972 = vrot.lane.b32.xlu0 %v1971, 112
        %v1973 = vpop.permute.xlu0 %1972
        %v1975 = vmul.f32 %v1968, %v1973
        %1977 = vrot.lane.b32.xlu0 %v1975, 16
        %v1978 = vpop.permute.xlu0 %1977
        %v1980 = vadd.f32 %v525, %v1978
        %v1981 = vtanh.pop %v1980
        %v1982 = vsub.f32 1.0, %v1968
        %1984 = vrot.lane.b32.xlu0 %v1981, 120
        %v1985 = vpop.permute.xlu0 %1984
        %v1987 = vmul.f32 %v1982, %v1985
        %v1988 = vrot.slane %v1878, 7
        %v1990 = vmul.f32 %v1968, %v1988
        %v1991 = vadd.f32 %v1987, %v1990
        %1993 = vrot.lane.b32.xlu0 %v1991, 120
        %v1994 = vpop.permute.xlu0 %1993
        %1996 = vst.msk [vmem:[#allocation2 + $0x8] sm:$0x10] %vm1096, %v1994
        %v1997 = vrot.slane %v1991, 4
        %1998 = vrot.lane.b32.xlu0 %v1997, 120
        %v1999 = vpop.permute.xlu0 %1998
        %v2000 = vsel %vm530, %v1999, 0
        %2002 = vmatprep.subr.mxu0 0.0
        %2003 = vmatpush1.msra.mxu0 %v528
        %2004 = vmatprep.subr.mxu0 0.0
        %2005 = vmatpush1.msra.mxu0 0.0
        %2006 = vmatprep.subr.mxu0 0.0
        %2007 = vmatpush1.msra.mxu0 0.0
        %2008 = vmatprep.subr.mxu0 0.0
        %2009 = vmatpush1.msra.mxu0 0.0
        %2010 = vmatprep.subr.mxu0 0.0
        %2011 = vmatpush1.msra.mxu0 0.0
        %2012 = vmatprep.subr.mxu0 0.0
        %2013 = vmatpush1.msra.mxu0 0.0
        %2014 = vmatprep.subr.mxu0 0.0
        %2015 = vmatpush1.msra.mxu0 0.0
        %2016 = vmatprep.subr.mxu0 0.0
        %2017 = vmatpush1.msra.mxu0 0.0
        %2018 = vmatprep.subr.mxu0 0.0
        %2019 = vmatpush1.msra.mxu0 0.0
        %2020 = vmatprep.subr.mxu0 0.0
        %2021 = vmatpush1.msra.mxu0 0.0
        %2022 = vmatprep.subr.mxu0 0.0
        %2023 = vmatpush1.msra.mxu0 0.0
        %2024 = vmatprep.subr.mxu0 0.0
        %2025 = vmatpush1.msra.mxu0 0.0
        %2026 = vmatprep.subr.mxu0 0.0
        %2027 = vmatpush1.msra.mxu0 0.0
        %2028 = vmatprep.subr.mxu0 0.0
        %2029 = vmatpush1.msra.mxu0 0.0
        %2030 = vmatprep.subr.mxu0 0.0
        %2031 = vmatpush1.msra.mxu0 0.0
        %2032 = vmatprep.subr.mxu0 0.0
        %2033 = vmatpush1.msra.mxu0 0.0
        %2034 = vmatprep.subr.mxu0 0.0
        %2035 = vmatpush1.msra.mxu0 0.0
        %2036 = vmatprep.subr.mxu0 0.0
        %2037 = vmatpush1.msra.mxu0 0.0
        %2038 = vmatprep.subr.mxu0 0.0
        %2039 = vmatpush1.msra.mxu0 0.0
        %2040 = vmatprep.subr.mxu0 0.0
        %2041 = vmatpush1.msra.mxu0 0.0
        %2042 = vmatprep.subr.mxu0 0.0
        %2043 = vmatpush1.msra.mxu0 0.0
        %2044 = vmatprep.subr.mxu0 0.0
        %2045 = vmatpush1.msra.mxu0 0.0
        %2046 = vmatprep.subr.mxu0 0.0
        %2047 = vmatpush1.msra.mxu0 0.0
        %2048 = vmatprep.subr.mxu0 0.0
        %2049 = vmatpush1.msra.mxu0 0.0
        %2050 = vmatprep.subr.mxu0 0.0
        %2051 = vmatpush1.msra.mxu0 0.0
        %2052 = vmatprep.subr.mxu0 0.0
        %2053 = vmatpush1.msra.mxu0 0.0
        %2054 = vmatprep.subr.mxu0 0.0
        %2055 = vmatpush1.msra.mxu0 0.0
        %2056 = vmatprep.subr.mxu0 0.0
        %2057 = vmatpush1.msra.mxu0 0.0
        %2058 = vmatprep.subr.mxu0 0.0
        %2059 = vmatpush1.msra.mxu0 0.0
        %2060 = vmatprep.subr.mxu0 0.0
        %2061 = vmatpush1.msra.mxu0 0.0
        %2062 = vmatprep.subr.mxu0 0.0
        %2063 = vmatpush1.msra.mxu0 0.0
        %2064 = vmatprep.subr.mxu0 0.0
        %2065 = vmatpush1.msra.mxu0 0.0
        %2066 = vmatprep.mubr.f32.mxu0 0.0
        %2067 = vmatmul.mubr.f32.gmra.mrb[0].mxu0 %v2000
        %v2068 = vpop.f32.mrb[0].mxu0
        %v2069 = vadd.f32 0.0, %v2068
        %v2070 = vpop.f32.mrb[0].mxu0
        %2071 = vdwg.mxu0
        %v2073 = vrot.slane %v2069, 3
        %v2075 = vadd.f32 %v525, %v2073
        %v2076 = vxor.u32 %v2075, 2147483648
        %v2077 = vmul.f32 %v2076, 1.442695
        %v2078 = vpow.pop %v2077
        %v2079 = vadd.f32 %v2078, 1.0
        %v2080 = vrcp.pop %v2079
        %v2081 = vmul.f32 1.0, %v2080
        %v2082 = vadd.f32 %v2069, %v617
        %v2084 = vrot.slane %v2082, 3
        %2085 = vrot.lane.b32.xlu0 %v2084, 112
        %v2086 = vpop.permute.xlu0 %2085
        %v2088 = vmul.f32 %v2081, %v2086
        %2090 = vrot.lane.b32.xlu0 %v2088, 16
        %v2091 = vpop.permute.xlu0 %2090
        %v2093 = vadd.f32 %v525, %v2091
        %v2094 = vtanh.pop %v2093
        %v2095 = vsub.f32 1.0, %v2081
        %2097 = vrot.lane.b32.xlu0 %v2094, 120
        %v2098 = vpop.permute.xlu0 %2097
        %v2100 = vmul.f32 %v2095, %v2098
        %v2101 = vrot.slane %v1991, 7
        %v2103 = vmul.f32 %v2081, %v2101
        %v2104 = vadd.f32 %v2100, %v2103
        %2106 = vrot.lane.b32.xlu0 %v2104, 120
        %v2107 = vpop.permute.xlu0 %2106
        %2109 = vst.msk [vmem:[#allocation2 + $0x8] sm:$0x20] %vm1210, %v2107
        %v2110 = vrot.slane %v2104, 5
        %2111 = vrot.lane.b32.xlu0 %v2110, 120
        %v2112 = vpop.permute.xlu0 %2111
        %v2113 = vsel %vm530, %v2112, 0
        %2115 = vmatprep.subr.mxu0 0.0
        %2116 = vmatpush1.msra.mxu0 %v528
        %2117 = vmatprep.subr.mxu0 0.0
        %2118 = vmatpush1.msra.mxu0 0.0
        %2119 = vmatprep.subr.mxu0 0.0
        %2120 = vmatpush1.msra.mxu0 0.0
        %2121 = vmatprep.subr.mxu0 0.0
        %2122 = vmatpush1.msra.mxu0 0.0
        %2123 = vmatprep.subr.mxu0 0.0
        %2124 = vmatpush1.msra.mxu0 0.0
        %2125 = vmatprep.subr.mxu0 0.0
        %2126 = vmatpush1.msra.mxu0 0.0
        %2127 = vmatprep.subr.mxu0 0.0
        %2128 = vmatpush1.msra.mxu0 0.0
        %2129 = vmatprep.subr.mxu0 0.0
        %2130 = vmatpush1.msra.mxu0 0.0
        %2131 = vmatprep.subr.mxu0 0.0
        %2132 = vmatpush1.msra.mxu0 0.0
        %2133 = vmatprep.subr.mxu0 0.0
        %2134 = vmatpush1.msra.mxu0 0.0
        %2135 = vmatprep.subr.mxu0 0.0
        %2136 = vmatpush1.msra.mxu0 0.0
        %2137 = vmatprep.subr.mxu0 0.0
        %2138 = vmatpush1.msra.mxu0 0.0
        %2139 = vmatprep.subr.mxu0 0.0
        %2140 = vmatpush1.msra.mxu0 0.0
        %2141 = vmatprep.subr.mxu0 0.0
        %2142 = vmatpush1.msra.mxu0 0.0
        %2143 = vmatprep.subr.mxu0 0.0
        %2144 = vmatpush1.msra.mxu0 0.0
        %2145 = vmatprep.subr.mxu0 0.0
        %2146 = vmatpush1.msra.mxu0 0.0
        %2147 = vmatprep.subr.mxu0 0.0
        %2148 = vmatpush1.msra.mxu0 0.0
        %2149 = vmatprep.subr.mxu0 0.0
        %2150 = vmatpush1.msra.mxu0 0.0
        %2151 = vmatprep.subr.mxu0 0.0
        %2152 = vmatpush1.msra.mxu0 0.0
        %2153 = vmatprep.subr.mxu0 0.0
        %2154 = vmatpush1.msra.mxu0 0.0
        %2155 = vmatprep.subr.mxu0 0.0
        %2156 = vmatpush1.msra.mxu0 0.0
        %2157 = vmatprep.subr.mxu0 0.0
        %2158 = vmatpush1.msra.mxu0 0.0
        %2159 = vmatprep.subr.mxu0 0.0
        %2160 = vmatpush1.msra.mxu0 0.0
        %2161 = vmatprep.subr.mxu0 0.0
        %2162 = vmatpush1.msra.mxu0 0.0
        %2163 = vmatprep.subr.mxu0 0.0
        %2164 = vmatpush1.msra.mxu0 0.0
        %2165 = vmatprep.subr.mxu0 0.0
        %2166 = vmatpush1.msra.mxu0 0.0
        %2167 = vmatprep.subr.mxu0 0.0
        %2168 = vmatpush1.msra.mxu0 0.0
        %2169 = vmatprep.subr.mxu0 0.0
        %2170 = vmatpush1.msra.mxu0 0.0
        %2171 = vmatprep.subr.mxu0 0.0
        %2172 = vmatpush1.msra.mxu0 0.0
        %2173 = vmatprep.subr.mxu0 0.0
        %2174 = vmatpush1.msra.mxu0 0.0
        %2175 = vmatprep.subr.mxu0 0.0
        %2176 = vmatpush1.msra.mxu0 0.0
        %2177 = vmatprep.subr.mxu0 0.0
        %2178 = vmatpush1.msra.mxu0 0.0
        %2179 = vmatprep.mubr.f32.mxu0 0.0
        %2180 = vmatmul.mubr.f32.gmra.mrb[0].mxu0 %v2113
        %v2181 = vpop.f32.mrb[0].mxu0
        %v2182 = vadd.f32 0.0, %v2181
        %v2183 = vpop.f32.mrb[0].mxu0
        %2184 = vdwg.mxu0
        %v2186 = vrot.slane %v2182, 2
        %v2188 = vadd.f32 %v525, %v2186
        %v2189 = vxor.u32 %v2188, 2147483648
        %v2190 = vmul.f32 %v2189, 1.442695
        %v2191 = vpow.pop %v2190
        %v2192 = vadd.f32 %v2191, 1.0
        %v2193 = vrcp.pop %v2192
        %v2194 = vmul.f32 1.0, %v2193
        %v2195 = vadd.f32 %v2182, %v617
        %v2197 = vrot.slane %v2195, 2
        %2198 = vrot.lane.b32.xlu0 %v2197, 112
        %v2199 = vpop.permute.xlu0 %2198
        %v2201 = vmul.f32 %v2194, %v2199
        %2203 = vrot.lane.b32.xlu0 %v2201, 16
        %v2204 = vpop.permute.xlu0 %2203
        %v2206 = vadd.f32 %v525, %v2204
        %v2207 = vtanh.pop %v2206
        %v2208 = vsub.f32 1.0, %v2194
        %2210 = vrot.lane.b32.xlu0 %v2207, 120
        %v2211 = vpop.permute.xlu0 %2210
        %v2213 = vmul.f32 %v2208, %v2211
        %v2214 = vrot.slane %v2104, 7
        %v2216 = vmul.f32 %v2194, %v2214
        %v2217 = vadd.f32 %v2213, %v2216
        %2219 = vrot.lane.b32.xlu0 %v2217, 120
        %v2220 = vpop.permute.xlu0 %2219
        %2222 = vst.msk [vmem:[#allocation2 + $0x8] sm:$0x40] %vm1324, %v2220
        %v2223 = vrot.slane %v2217, 6
        %2224 = vrot.lane.b32.xlu0 %v2223, 120
        %v2225 = vpop.permute.xlu0 %2224
        %v2226 = vsel %vm530, %v2225, 0
        %2228 = vmatprep.subr.mxu0 0.0
        %2229 = vmatpush1.msra.mxu0 %v528
        %2230 = vmatprep.subr.mxu0 0.0
        %2231 = vmatpush1.msra.mxu0 0.0
        %2232 = vmatprep.subr.mxu0 0.0
        %2233 = vmatpush1.msra.mxu0 0.0
        %2234 = vmatprep.subr.mxu0 0.0
        %2235 = vmatpush1.msra.mxu0 0.0
        %2236 = vmatprep.subr.mxu0 0.0
        %2237 = vmatpush1.msra.mxu0 0.0
        %2238 = vmatprep.subr.mxu0 0.0
        %2239 = vmatpush1.msra.mxu0 0.0
        %2240 = vmatprep.subr.mxu0 0.0
        %2241 = vmatpush1.msra.mxu0 0.0
        %2242 = vmatprep.subr.mxu0 0.0
        %2243 = vmatpush1.msra.mxu0 0.0
        %2244 = vmatprep.subr.mxu0 0.0
        %2245 = vmatpush1.msra.mxu0 0.0
        %2246 = vmatprep.subr.mxu0 0.0
        %2247 = vmatpush1.msra.mxu0 0.0
        %2248 = vmatprep.subr.mxu0 0.0
        %2249 = vmatpush1.msra.mxu0 0.0
        %2250 = vmatprep.subr.mxu0 0.0
        %2251 = vmatpush1.msra.mxu0 0.0
        %2252 = vmatprep.subr.mxu0 0.0
        %2253 = vmatpush1.msra.mxu0 0.0
        %2254 = vmatprep.subr.mxu0 0.0
        %2255 = vmatpush1.msra.mxu0 0.0
        %2256 = vmatprep.subr.mxu0 0.0
        %2257 = vmatpush1.msra.mxu0 0.0
        %2258 = vmatprep.subr.mxu0 0.0
        %2259 = vmatpush1.msra.mxu0 0.0
        %2260 = vmatprep.subr.mxu0 0.0
        %2261 = vmatpush1.msra.mxu0 0.0
        %2262 = vmatprep.subr.mxu0 0.0
        %2263 = vmatpush1.msra.mxu0 0.0
        %2264 = vmatprep.subr.mxu0 0.0
        %2265 = vmatpush1.msra.mxu0 0.0
        %2266 = vmatprep.subr.mxu0 0.0
        %2267 = vmatpush1.msra.mxu0 0.0
        %2268 = vmatprep.subr.mxu0 0.0
        %2269 = vmatpush1.msra.mxu0 0.0
        %2270 = vmatprep.subr.mxu0 0.0
        %2271 = vmatpush1.msra.mxu0 0.0
        %2272 = vmatprep.subr.mxu0 0.0
        %2273 = vmatpush1.msra.mxu0 0.0
        %2274 = vmatprep.subr.mxu0 0.0
        %2275 = vmatpush1.msra.mxu0 0.0
        %2276 = vmatprep.subr.mxu0 0.0
        %2277 = vmatpush1.msra.mxu0 0.0
        %2278 = vmatprep.subr.mxu0 0.0
        %2279 = vmatpush1.msra.mxu0 0.0
        %2280 = vmatprep.subr.mxu0 0.0
        %2281 = vmatpush1.msra.mxu0 0.0
        %2282 = vmatprep.subr.mxu0 0.0
        %2283 = vmatpush1.msra.mxu0 0.0
        %2284 = vmatprep.subr.mxu0 0.0
        %2285 = vmatpush1.msra.mxu0 0.0
        %2286 = vmatprep.subr.mxu0 0.0
        %2287 = vmatpush1.msra.mxu0 0.0
        %2288 = vmatprep.subr.mxu0 0.0
        %2289 = vmatpush1.msra.mxu0 0.0
        %2290 = vmatprep.subr.mxu0 0.0
        %2291 = vmatpush1.msra.mxu0 0.0
        %2292 = vmatprep.mubr.f32.mxu0 0.0
        %2293 = vmatmul.mubr.f32.gmra.mrb[0].mxu0 %v2226
        %v2294 = vpop.f32.mrb[0].mxu0
        %v2295 = vadd.f32 0.0, %v2294
        %v2296 = vpop.f32.mrb[0].mxu0
        %2297 = vdwg.mxu0
        %v2299 = vrot.slane %v2295, 1
        %v2301 = vadd.f32 %v525, %v2299
        %v2302 = vxor.u32 %v2301, 2147483648
        %v2303 = vmul.f32 %v2302, 1.442695
        %v2304 = vpow.pop %v2303
        %v2305 = vadd.f32 %v2304, 1.0
        %v2306 = vrcp.pop %v2305
        %v2307 = vmul.f32 1.0, %v2306
        %v2308 = vadd.f32 %v2295, %v617
        %v2310 = vrot.slane %v2308, 1
        %2311 = vrot.lane.b32.xlu0 %v2310, 112
        %v2312 = vpop.permute.xlu0 %2311
        %v2314 = vmul.f32 %v2307, %v2312
        %2316 = vrot.lane.b32.xlu0 %v2314, 16
        %v2317 = vpop.permute.xlu0 %2316
        %v2319 = vadd.f32 %v525, %v2317
        %v2320 = vtanh.pop %v2319
        %v2321 = vsub.f32 1.0, %v2307
        %2323 = vrot.lane.b32.xlu0 %v2320, 120
        %v2324 = vpop.permute.xlu0 %2323
        %v2326 = vmul.f32 %v2321, %v2324
        %v2327 = vrot.slane %v2217, 7
        %v2329 = vmul.f32 %v2307, %v2327
        %v2330 = vadd.f32 %v2326, %v2329
        %2332 = vrot.lane.b32.xlu0 %v2330, 120
        %v2333 = vpop.permute.xlu0 %2332
        %2335 = vst.msk [vmem:[#allocation2 + $0x8] sm:$0x80] %vm1438, %v2333
        %v2336 = vld [vmem:[#allocation2] sm:$0xff]
        %v2337 = vld [vmem:[#allocation2 + $0x8] sm:$0xff]
        %v2338 = vld [vmem:[%s5] sm:$0xff]
        %v2339 = vld [vmem:[%s6] sm:$0x1]
        %v2341 = vlaneseq
        %v2342 = vshrl.u32 %v2341, 7
        %v2343 = vsub.s32 0, %v2342
        %v2344 = vrot.slane %v2339, %v2343
        %v2347 = vsel %vm530, %v2336, 0
        %v2350 = vsel %vm530, %v2337, 0
        %2352 = vmatprep.subr.mxu0 0.0
        %2353 = vmatpush1.msra.mxu0 %v2338
        %2354 = vmatprep.subr.mxu0 0.0
        %2355 = vmatpush1.msra.mxu0 0.0
        %2356 = vmatprep.subr.mxu0 0.0
        %2357 = vmatpush1.msra.mxu0 0.0
        %2358 = vmatprep.subr.mxu0 0.0
        %2359 = vmatpush1.msra.mxu0 0.0
        %2360 = vmatprep.subr.mxu0 0.0
        %2361 = vmatpush1.msra.mxu0 0.0
        %2362 = vmatprep.subr.mxu0 0.0
        %2363 = vmatpush1.msra.mxu0 0.0
        %2364 = vmatprep.subr.mxu0 0.0
        %2365 = vmatpush1.msra.mxu0 0.0
        %2366 = vmatprep.subr.mxu0 0.0
        %2367 = vmatpush1.msra.mxu0 0.0
        %2368 = vmatprep.subr.mxu0 0.0
        %2369 = vmatpush1.msra.mxu0 0.0
        %2370 = vmatprep.subr.mxu0 0.0
        %2371 = vmatpush1.msra.mxu0 0.0
        %2372 = vmatprep.subr.mxu0 0.0
        %2373 = vmatpush1.msra.mxu0 0.0
        %2374 = vmatprep.subr.mxu0 0.0
        %2375 = vmatpush1.msra.mxu0 0.0
        %2376 = vmatprep.subr.mxu0 0.0
        %2377 = vmatpush1.msra.mxu0 0.0
        %2378 = vmatprep.subr.mxu0 0.0
        %2379 = vmatpush1.msra.mxu0 0.0
        %2380 = vmatprep.subr.mxu0 0.0
        %2381 = vmatpush1.msra.mxu0 0.0
        %2382 = vmatprep.subr.mxu0 0.0
        %2383 = vmatpush1.msra.mxu0 0.0
        %2384 = vmatprep.subr.mxu0 0.0
        %2385 = vmatpush1.msra.mxu0 0.0
        %2386 = vmatprep.subr.mxu0 0.0
        %2387 = vmatpush1.msra.mxu0 0.0
        %2388 = vmatprep.subr.mxu0 0.0
        %2389 = vmatpush1.msra.mxu0 0.0
        %2390 = vmatprep.subr.mxu0 0.0
        %2391 = vmatpush1.msra.mxu0 0.0
        %2392 = vmatprep.subr.mxu0 0.0
        %2393 = vmatpush1.msra.mxu0 0.0
        %2394 = vmatprep.subr.mxu0 0.0
        %2395 = vmatpush1.msra.mxu0 0.0
        %2396 = vmatprep.subr.mxu0 0.0
        %2397 = vmatpush1.msra.mxu0 0.0
        %2398 = vmatprep.subr.mxu0 0.0
        %2399 = vmatpush1.msra.mxu0 0.0
        %2400 = vmatprep.subr.mxu0 0.0
        %2401 = vmatpush1.msra.mxu0 0.0
        %2402 = vmatprep.subr.mxu0 0.0
        %2403 = vmatpush1.msra.mxu0 0.0
        %2404 = vmatprep.subr.mxu0 0.0
        %2405 = vmatpush1.msra.mxu0 0.0
        %2406 = vmatprep.subr.mxu0 0.0
        %2407 = vmatpush1.msra.mxu0 0.0
        %2408 = vmatprep.subr.mxu0 0.0
        %2409 = vmatpush1.msra.mxu0 0.0
        %2410 = vmatprep.subr.mxu0 0.0
        %2411 = vmatpush1.msra.mxu0 0.0
        %2412 = vmatprep.subr.mxu0 0.0
        %2413 = vmatpush1.msra.mxu0 0.0
        %2414 = vmatprep.subr.mxu0 0.0
        %2415 = vmatpush1.msra.mxu0 0.0
        %2416 = vmatprep.mubr.f32.mxu0 0.0
        %2417 = vmatmul.mubr.f32.gmra.mrb[0].mxu0 %v2347
        %v2418 = vpop.f32.mrb[0].mxu0
        %v2419 = vadd.f32 %v2344, %v2418
        %v2420 = vpop.f32.mrb[0].mxu0
        %2421 = vmatprep.mubr.f32.mxu0 0.0
        %2422 = vmatmul.mubr.f32.gmra.mrb[0].mxu0 %v2350
        %v2423 = vpop.f32.mrb[0].mxu0
        %v2424 = vadd.f32 %v2344, %v2423
        %v2425 = vpop.f32.mrb[0].mxu0
        %2426 = vdwg.mxu0
        %v2427 = vxor.u32 %v2419, 2147483648
        %v2428 = vxor.u32 %v2424, 2147483648
        %v2429 = vmul.f32 %v2427, 1.442695
        %v2430 = vpow.pop %v2429
        %v2431 = vmul.f32 %v2428, 1.442695
        %v2432 = vpow.pop %v2431
        %v2433 = vadd.f32 %v2430, 1.0
        %v2434 = vadd.f32 %v2432, 1.0
        %v2435 = vrcp.pop %v2433
        %v2436 = vmul.f32 1.0, %v2435
        %v2437 = vrcp.pop %v2434
        %v2438 = vmul.f32 1.0, %v2437
        %2439 = vxpose.xlu0.b32.start [1/16] %v2436, 128
        %2440 = vxpose.xlu0.b32.cont [2/16] %v2438, 128
        %2441 = vxpose.xlu0.b32.cont [3/16] 0.0, 128
        %2442 = vxpose.xlu0.b32.cont [4/16] 0.0, 128
        %2443 = vxpose.xlu0.b32.cont [5/16] 0.0, 128
        %2444 = vxpose.xlu0.b32.cont [6/16] 0.0, 128
        %2445 = vxpose.xlu0.b32.cont [7/16] 0.0, 128
        %2446 = vxpose.xlu0.b32.cont [8/16] 0.0, 128
        %2447 = vxpose.xlu0.b32.cont [9/16] 0.0, 128
        %2448 = vxpose.xlu0.b32.cont [10/16] 0.0, 128
        %2449 = vxpose.xlu0.b32.cont [11/16] 0.0, 128
        %2450 = vxpose.xlu0.b32.cont [12/16] 0.0, 128
        %2451 = vxpose.xlu0.b32.cont [13/16] 0.0, 128
        %2452 = vxpose.xlu0.b32.cont [14/16] 0.0, 128
        %2453 = vxpose.xlu0.b32.cont [15/16] 0.0, 128
        %2454 = vxpose.xlu0.b32.end [16/16] 0.0, 128
        %v2455 = vpop.trf.xlu0
        %v2456 = vpop.trf.xlu0
        %v2457 = vpop.trf.xlu0
        %v2458 = vpop.trf.xlu0
        %v2459 = vpop.trf.xlu0
        %v2460 = vpop.trf.xlu0
        %v2461 = vpop.trf.xlu0
        %v2462 = vpop.trf.xlu0
        %v2463 = vpop.trf.xlu0
        %v2464 = vpop.trf.xlu0
        %v2465 = vpop.trf.xlu0
        %v2466 = vpop.trf.xlu0
        %v2467 = vpop.trf.xlu0
        %v2468 = vpop.trf.xlu0
        %v2469 = vpop.trf.xlu0
        %v2470 = vpop.trf.xlu0
        %vm2471 = vcmask 125952
        %2472 = vst.msk [vmem:[%s296] sm:$0xf] %vm2471, %v2455
        %s2473 = sand.u32 %s184, 1
        %s2474 = scalar_lea.sflag [#allocation5], %s2473
        %s2475 = sand.u32 %s184, 1
        %s2476 = smul.addr %s2475, 4
        %s2477 = scalar_lea.vmem [#allocation6], %s2476
        // Predicated region
        $region53: #{tpu_custom_call.1} parent=47 // pred_check
          %p2478 = pneg %p194
        $region54: #{tpu_custom_call.1} parent=47 // pred_check_branch
          %2480 = sbr.rel (%p2478) target = $region56
        $region55: #{tpu_custom_call.1} parent=47 // pred_region
          %s2482 = ssub.s32 64, 64
          %2483 = vsyncadd %s2474, %s2482
          %s2484 = smul.addr %s24, 64
          %s2485 = scalar_lea.hbm %s7, %s2484
          %s2487 = sshll.u32 %s2477, 4
          %s2488 = int_to_ptr.vmem [resolvable:$true] %s2487
          %2490 = dma.vmem_to_hbm [thread:$0]  %s2488, 64, %s2485, %s2474
        $region56: #{tpu_custom_call.1} parent=47 // pred_fallthru
          _
      $region48: #{tpu_custom_call.1} parent=5 // pred_fallthru
        _
      %p2491 = scmp.le.s32.totalorder 2, %s19
      // Predicated region
      $region57: #{tpu_custom_call.1} parent=5 // pred_check
        %p2492 = pneg %p2491
      $region58: #{tpu_custom_call.1} parent=5 // pred_check_branch
        %2494 = sbr.rel (%p2492) target = $region60
      $region59: #{tpu_custom_call.1} parent=5 // pred_region
        %s2495 = ssub.s32 %s19, 2
        // Predicated region
        $region61: #{tpu_custom_call.1} parent=59 // pred_check
          %p2496 = pneg %p200
        $region62: #{tpu_custom_call.1} parent=59 // pred_check_branch
          %2498 = sbr.rel (%p2496) target = $region64
        $region63: #{tpu_custom_call.1} parent=59 // pred_region
          %s2499 = sand.u32 %s185, 1
          %s2500 = scalar_lea.sflag [#allocation5], %s2499
          %s2501 = sand.u32 %s185, 1
          %s2502 = smul.addr %s2501, 4
          %s2503 = scalar_lea.vmem [#allocation6], %s2502
          %2504 = dma.done %s2500, 64
        $region64: #{tpu_custom_call.1} parent=59 // pred_fallthru
          _
      $region60: #{tpu_custom_call.1} parent=5 // pred_fallthru
        _
    $region6: #{tpu_custom_call.1} parent=1 // loop_footer
      %s23 = sadd.s32 1, %s19
    $region7: #{tpu_custom_call.1} parent=1 // loop_footer_branch
      %18 = sbr.rel target = $region3
    $region8: #{tpu_custom_call.1} parent=1 // loop_exit
      _
    %2505 = vsyncpa [#allocation4], 1
    %s2506 = scalar_lea.sflag [#allocation4], 1
    %2507 = vsyncpa %s2506, 1
    %2508 = vsyncpa [#allocation5], 1
    %s2509 = scalar_lea.sflag [#allocation5], 1
    %2510 = vsyncpa %s2509, 1

</llo_original>
